<compile_context>
chip_gen: v6e
topology: v6e:2x2x1
jax: 0.10.0
libtpu: 0.0.40
codegen_flags: <defaults>
</compile_context>

<pallas_src>
import math

import jax
import jax.numpy as jnp
from jax import lax
from jax.experimental import pallas as pl
from jax.experimental.pallas import tpu as pltpu

LANE_TILE = 128     # folded-stream lanes handled per grid tile
CHUNK_MAX = 64      # scan rows per grid chunk (keeps VMEM O(1) in L)


# ----------------------------------------------------------------------------
# Pallas kernel: gated selective scan, one (lane-tile, L-chunk) grid step
# ----------------------------------------------------------------------------
def _scan_kernel(u_ref, dp_ref, a_ref, d_ref, b_ref, c_ref,
                 w1_ref, b1_ref, w2_ref, b2_ref, alpha_ref,
                 o_ref, h_ref):
    """State h: (N, MT) -- d_state on sublanes, folded streams on lanes."""
    LC, MT = u_ref.shape
    N = a_ref.shape[0]
    N2 = w1_ref.shape[0]
    EPS = 1e-6

    # reset the carried state at the start of every lane-tile's scan
    @pl.when(pl.program_id(1) == 0)
    def _():
        h_ref[...] = jnp.zeros_like(h_ref)

    # small constants hoisted out of the serial loop (~8 vregs; w2 stays in VMEM)
    A = a_ref[...]            # (N, MT)  = -exp(A_log), lane-replicated
    Dv = d_ref[...]           # (1, MT)
    w1 = w1_ref[...]          # (2N, MT) fc_pos1 weight, hidden units on sublanes
    b1 = b1_ref[...]          # (2N, MT)
    b2 = b2_ref[...]          # (N, MT)
    alpha = alpha_ref[...]    # (N, MT)

    def one_step(i, h):
        # ---- step inputs: independent of h, hidden under the chain latency --
        dp_row = dp_ref[pl.ds(i, 1), :]                        # (1, MT)
        u_row = u_ref[pl.ds(i, 1), :]                          # (1, MT)
        dA = jnp.exp(dp_row * A)                               # (N, MT)
        Bxt = (dp_row * u_row) * b_ref[i]                      # (N, MT)
        bn = jnp.sqrt(jnp.sum(Bxt * Bxt, axis=0, keepdims=True)) + EPS
        inv_bn = pl.reciprocal(bn, approx=True)                # (1, MT)

        # ---- cosine-similarity gate (the serial h -> h chain) ---------------
        dot = jnp.sum(Bxt * h, axis=0, keepdims=True)          # (1, MT)
        hn = jnp.sqrt(jnp.sum(h * h, axis=0, keepdims=True)) + EPS
        sim = dot * inv_bn * pl.reciprocal(hn, approx=True)    # (1, MT)

        # fc_pos1 + relu once: 2N hidden units packed on sublanes (2 vregs)
        hp = jax.nn.relu(sim * w1 + b1)                        # (2N, MT)

        # fc_pos2: 2N broadcast-MACs against per-step w2 row loads,
        # accumulated with a shallow 4-way tree.
        accs = [b2, None, None, None]
        for j in range(N2):                                    # static unroll
            hj = jnp.broadcast_to(hp[j:j + 1, :], (N, MT))
            t = hj * w2_ref[j]
            k = j & 3
            accs[k] = t if accs[k] is None else accs[k] + t
        live = [a for a in accs if a is not None]
        while len(live) > 1:                                   # balanced merge
            nxt = [live[q] + live[q + 1] for q in range(0, len(live) - 1, 2)]
            if len(live) % 2:
                nxt.append(live[-1])
            live = nxt
        mod = jax.nn.sigmoid(live[0])                          # (N, MT)

        h_new = dA * h + (alpha * mod + 1.0) * Bxt

        # fused epilogue (off the h->h chain): y_i = <h_i, C_i>_N + u_i * D
        y_row = jnp.sum(h_new * c_ref[i], axis=0, keepdims=True) + u_row * Dv
        o_ref[pl.ds(i, 1), :] = y_row
        return h_new

    unroll = 4 if LC % 4 == 0 else (2 if LC % 2 == 0 else 1)

    def unrolled(j, h):
        base = pl.multiple_of(j * unroll, unroll)
        for r in range(unroll):                                # static unroll
            h = one_step(base + r, h)
        return h

    h_ref[...] = lax.fori_loop(0, LC // unroll, unrolled, h_ref[...])


def selective_scan_pallas(u_f, dp_f, a_f, d_f, b_f, c_f,
                          w1_2, b1_2, w2_3, b2_full, alpha_full):
    """u_f/dp_f: (L, Mp), a_f: (N, Mp), d_f: (1, Mp), b_f/c_f: (L, N, Mp)."""
    L, Mp = u_f.shape
    N = a_f.shape[0]
    N2 = w1_2.shape[0]
    MT = LANE_TILE
    n_tiles = Mp // MT

    # chunk the scan length so per-call VMEM is O(LC), independent of L
    LC = next((d for d in (CHUNK_MAX, 32, 16, 8) if L % d == 0), L)
    n_chunks = L // LC

    grid_spec = pltpu.PrefetchScalarGridSpec(
        num_scalar_prefetch=0,
        grid=(n_tiles, n_chunks),
        in_specs=[
            pl.BlockSpec((LC, MT), lambda t, c: (c, t)),          # u
            pl.BlockSpec((LC, MT), lambda t, c: (c, t)),          # softplus(delta)
            pl.BlockSpec((N, MT), lambda t, c: (0, t)),           # A
            pl.BlockSpec((1, MT), lambda t, c: (0, t)),           # D
            pl.BlockSpec((LC, N, MT), lambda t, c: (c, 0, t)),    # B
            pl.BlockSpec((LC, N, MT), lambda t, c: (c, 0, t)),    # C
            pl.BlockSpec((N2, MT), lambda t, c: (0, 0)),          # fc_pos1 weight
            pl.BlockSpec((N2, MT), lambda t, c: (0, 0)),          # fc_pos1 bias
            pl.BlockSpec((N2, N, MT), lambda t, c: (0, 0, 0)),    # fc_pos2 weight
            pl.BlockSpec((N, MT), lambda t, c: (0, 0)),           # fc_pos2 bias
            pl.BlockSpec((N, MT), lambda t, c: (0, 0)),           # alpha
        ],
        out_specs=pl.BlockSpec((LC, MT), lambda t, c: (c, t)),    # lane-dense out
        scratch_shapes=[pltpu.VMEM((N, MT), jnp.float32)],        # carried h state
    )

    return pl.pallas_call(
        _scan_kernel,
        out_shape=jax.ShapeDtypeStruct((L, Mp), jnp.float32),
        grid_spec=grid_spec,
        compiler_params=pltpu.CompilerParams(
            dimension_semantics=("parallel", "arbitrary")),
    )(u_f, dp_f, a_f, d_f, b_f, c_f, w1_2, b1_2, w2_3, b2_full, alpha_full)


# ----------------------------------------------------------------------------
# JAX glue (layer norms, projections, depthwise conv, scan-direction plumbing)
# ----------------------------------------------------------------------------
def _layer_norm(x, w, b, eps):
    mu = jnp.mean(x, axis=-1, keepdims=True)
    var = jnp.mean((x - mu) ** 2, axis=-1, keepdims=True)
    return (x - mu) * lax.rsqrt(var + eps) * w + b


def _ss2d_fused(xb_nchw, p):
    """Both H/W branches of C_SS2D in ONE kernel call. xb_nchw: (B2, Cd, H, W)."""
    B2, Cd, H, W = xb_nchw.shape
    L = H * W
    K = 4
    N = p['A'].shape[-1]
    R = p['dt_w'].shape[-1]
    hi = lax.Precision.HIGHEST

    # 4 scan directions (row-major, col-major, and their reverses)
    x_flat = xb_nchw.reshape(B2, Cd, L)
    x_wh = jnp.transpose(xb_nchw, (0, 1, 3, 2)).reshape(B2, Cd, L)
    x_hwwh = jnp.stack([x_flat, x_wh], axis=1)                         # (B2,2,Cd,L)
    xs = jnp.concatenate([x_hwwh, jnp.flip(x_hwwh, axis=-1)], axis=1)  # (B2,K,Cd,L)
    xs_t = jnp.transpose(xs, (0, 1, 3, 2)).astype(jnp.float32)         # (B2,K,L,Cd)

    # x_proj (B/C streams) + algebraically fused rank-R dt projection
    x_dbl = jnp.einsum('bkld,kcd->bklc', xs_t, p['x_proj_w'], precision=hi)
    Bs = x_dbl[..., R:R + N]                                           # (B2,K,L,N)
    Cs = x_dbl[..., R + N:R + 2 * N]
    w_delta = jnp.einsum('kdr,krc->kdc', p['dt_w'], p['x_proj_w'][:, :R, :],
                         precision=hi)                                 # (K,Cd,Cd)
    delta = jnp.einsum('bkld,kcd->bklc', xs_t, w_delta, precision=hi)
    delta = delta + p['dt_b'][None, :, None, :]
    dp = jax.nn.softplus(delta)                                        # (B2,K,L,Cd)

    # fold (batch, branch, direction, channel) into one lane axis M
    M = B2 * K * Cd
    u_f = jnp.transpose(xs_t, (2, 0, 1, 3)).reshape(L, M)
    dp_f = jnp.transpose(dp, (2, 0, 1, 3)).reshape(L, M)
    # TODO(synk): B/C are replicated over Cd here (x Cd HBM bytes); at production
    # sizes with Cd >= 128 reorder the lane fold so each tile covers one (b,k)
    # stream and pass un-replicated (L,N,B2*K) arrays with a block-reusing
    # index_map instead of materialising the broadcast.
    b_f = jnp.broadcast_to(jnp.transpose(Bs, (2, 3, 0, 1))[..., None],
                           (L, N, B2, K, Cd)).reshape(L, N, M)
    c_f = jnp.broadcast_to(jnp.transpose(Cs, (2, 3, 0, 1))[..., None],
                           (L, N, B2, K, Cd)).reshape(L, N, M)
    a_f = jnp.broadcast_to(jnp.transpose(p['A'], (2, 0, 1))[:, None, :, :],
                           (N, B2, K, Cd)).reshape(N, M)
    d_f = jnp.broadcast_to(p['D'][None, :, :], (B2, K, Cd)).reshape(1, M)

    # pad the folded stream axis up to a multiple of the lane tile (zeros benign)
    MT = LANE_TILE
    Mp = ((M + MT - 1) // MT) * MT
    if Mp != M:
        padw = Mp - M
        u_f = jnp.pad(u_f, ((0, 0), (0, padw)))
        dp_f = jnp.pad(dp_f, ((0, 0), (0, padw)))
        b_f = jnp.pad(b_f, ((0, 0), (0, 0), (0, padw)))
        c_f = jnp.pad(c_f, ((0, 0), (0, 0), (0, padw)))
        a_f = jnp.pad(a_f, ((0, 0), (0, padw)))
        d_f = jnp.pad(d_f, ((0, 0), (0, padw)))

    # gating constants: fc_pos1 packed on sublanes (2 vregs), fc_pos2 as rows
    N2 = 2 * N
    w1_2 = jnp.broadcast_to(p['fc1_w'].reshape(N2, 1), (N2, MT))
    b1_2 = jnp.broadcast_to(p['fc1_b'].reshape(N2, 1), (N2, MT))
    w2_3 = jnp.broadcast_to(p['fc2_w'].T.reshape(N2, N, 1), (N2, N, MT))
    b2_full = jnp.broadcast_to(p['fc2_b'].reshape(N, 1), (N, MT))
    alpha_full = jnp.broadcast_to(p['alpha'].reshape(1, 1), (N, MT))

    y_f = selective_scan_pallas(u_f, dp_f, a_f, d_f, b_f, c_f,
                                w1_2, b1_2, w2_3, b2_full, alpha_full)
    out_y = jnp.transpose(y_f[:, :M].reshape(L, B2, K, Cd), (1, 2, 3, 0))  # (B2,K,Cd,L)

    # merge the 4 scan directions
    inv_y = jnp.flip(out_y[:, 2:4], axis=-1)
    y1 = out_y[:, 0]
    y2 = inv_y[:, 0]
    wh_y = jnp.transpose(out_y[:, 1].reshape(B2, Cd, W, H),
                         (0, 1, 3, 2)).reshape(B2, Cd, L)
    invwh_y = jnp.transpose(inv_y[:, 1].reshape(B2, Cd, W, H),
                            (0, 1, 3, 2)).reshape(B2, Cd, L)
    y = y1 + y2 + wh_y + invwh_y                                        # (B2,Cd,L)
    y = jnp.transpose(y, (0, 2, 1)).reshape(B2, H, W, Cd)
    return _layer_norm(y, p['out_norm_w'], p['out_norm_b'], 1e-5)


def c_vss_block_forward(x_in, p):
    """C_VSSBlock.forward.  x_in: (B, H, W, C) float32."""
    B, H, W, C = x_in.shape
    d_inner = C                       # expand=2 -> int(2*C // 2) = C
    x = _layer_norm(x_in, p['ln1_w'], p['ln1_b'], 1e-6)
    xh_in, xw_in = jnp.split(x, 2, axis=-1)
    xz_h = xh_in @ p['in_proj_h_w'].T
    xz_w = xw_in @ p['in_proj_w_w'].T
    x_h, z_h = jnp.split(xz_h, 2, axis=-1)
    x_w, z_w = jnp.split(xz_w, 2, axis=-1)

    xc = jnp.concatenate([x_h, x_w], axis=-1)                           # (B,H,W,d_inner)
    xc = lax.conv_general_dilated(
        xc, p['conv_w'], window_strides=(1, 1), padding='SAME',
        dimension_numbers=('NHWC', 'HWIO', 'NHWC'),
        feature_group_count=d_inner) + p['conv_b']                      # depthwise 3x3
    xc = jax.nn.silu(xc)

    xh2, xw2 = jnp.split(xc, 2, axis=-1)                                # (B,H,W,Cd)
    # both SS2D branches fused into one kernel call (stacked on the batch axis)
    xb = jnp.concatenate([jnp.transpose(xh2, (0, 3, 1, 2)),
                          jnp.transpose(xw2, (0, 3, 1, 2))], axis=0)    # (2B,Cd,H,W)
    yb = _ss2d_fused(xb, p)                                             # (2B,H,W,Cd)
    yH, yW = yb[:B], yb[B:]

    yH = yH * jax.nn.silu(z_h)
    yW = yW * jax.nn.silu(z_w)
    outH = yH @ p['out_proj_H_w'].T
    outW = yW @ p['out_proj_W_w'].T
    out = jnp.concatenate([outH, outW], axis=-1)
    # TODO(synk): nn.Dropout(attn_drop_rate) is constructed but never applied in
    # the reference forward; DropPath(0) is identity -> plain residual add.
    return x_in + out


# ----------------------------------------------------------------------------
# Deterministic synthetic parameters (shapes from C_VSSBlock / C_SS2D __init__)
# ----------------------------------------------------------------------------
def init_params(key, C, N=8, d_conv=3):
    d_inner = C
    Cd = C // 2
    R = max(1, math.ceil(C / 16))
    K = 4
    ks = jax.random.split(key, 13)

    def u(k, shape, scale):
        return jax.random.uniform(k, shape, jnp.float32, -1.0, 1.0) * scale

    p = {}
    p['ln1_w'] = jnp.ones((C,), jnp.float32)
    p['ln1_b'] = jnp.zeros((C,), jnp.float32)
    p['in_proj_h_w'] = u(ks[0], (d_inner, C // 2), (C // 2) ** -0.5)
    p['in_proj_w_w'] = u(ks[1], (d_inner, C // 2), (C // 2) ** -0.5)
    p['conv_w'] = u(ks[2], (d_conv, d_conv, 1, d_inner), (d_conv * d_conv) ** -0.5)
    p['conv_b'] = u(ks[3], (d_inner,), 0.1)
    p['x_proj_w'] = u(ks[4], (K, R + 2 * N, Cd), Cd ** -0.5)
    p['dt_w'] = u(ks[5], (K, Cd, R), R ** -0.5)
    dt = jnp.exp(jax.random.uniform(ks[6], (K, Cd), jnp.float32)
                 * (math.log(0.1) - math.log(1e-3)) + math.log(1e-3))
    dt = jnp.clip(dt, 1e-4, None)
    p['dt_b'] = dt + jnp.log(-jnp.expm1(-dt))                 # inverse softplus
    A_row = jnp.arange(1, N + 1, dtype=jnp.float32)
    p['A'] = -jnp.tile(A_row[None, None, :], (K, Cd, 1))      # = -exp(A_logs)
    p['D'] = jnp.ones((K, Cd), jnp.float32)
    p['out_norm_w'] = jnp.ones((Cd,), jnp.float32)
    p['out_norm_b'] = jnp.zeros((Cd,), jnp.float32)
    p['alpha'] = jnp.full((1, 1), 0.1, jnp.float32)
    p['fc1_w'] = u(ks[7], (2 * N, 1), 1.0)                    # Linear(1, 2N)
    p['fc1_b'] = u(ks[8], (2 * N,), 1.0)
    p['fc2_w'] = u(ks[9], (N, 2 * N), (2 * N) ** -0.5)        # Linear(2N, N)
    p['fc2_b'] = u(ks[10], (N,), (2 * N) ** -0.5)
    p['out_proj_H_w'] = u(ks[11], (C // 2, Cd), Cd ** -0.5)
    p['out_proj_W_w'] = u(ks[12], (C // 2, Cd), Cd ** -0.5)
    return p


if __name__ == "__main__":
    key = jax.random.PRNGKey(0)
    kx, kp = jax.random.split(key)

    # hidden_dim=16 -> d_inner=16, Cd=8, dt_rank=1, d_state=8.
    # B=4, 16x16 -> L=256 (4 scan chunks) and 2B*K*Cd = 256 folded streams
    # (2 "parallel" lane tiles, so both v7x TensorCores get work).
    B, H, W, C = 4, 16, 16, 16
    x = jax.random.normal(kx, (B, H, W, C), jnp.float32)
    params = init_params(kp, C)

    fwd = jax.jit(c_vss_block_forward)
    out = jax.block_until_ready(fwd(x, params))

    assert out.shape == (B, H, W, C)
    assert bool(jnp.isfinite(out).all())
    print("KERNEL_OK")
</pallas_src>

<mosaic_0001>
module attributes {stable_mosaic.version = 11 : i64} {
  func.func @_scan_kernel(%arg0: i32, %arg1: i32, %arg2: memref<64x128xf32, #tpu.memory_space<vmem>>, %arg3: memref<64x128xf32, #tpu.memory_space<vmem>>, %arg4: memref<8x128xf32, #tpu.memory_space<vmem>>, %arg5: memref<1x128xf32, #tpu.memory_space<vmem>>, %arg6: memref<64x8x128xf32, #tpu.memory_space<vmem>>, %arg7: memref<64x8x128xf32, #tpu.memory_space<vmem>>, %arg8: memref<16x128xf32, #tpu.memory_space<vmem>>, %arg9: memref<16x128xf32, #tpu.memory_space<vmem>>, %arg10: memref<16x8x128xf32, #tpu.memory_space<vmem>>, %arg11: memref<8x128xf32, #tpu.memory_space<vmem>>, %arg12: memref<8x128xf32, #tpu.memory_space<vmem>>, %arg13: memref<64x128xf32, #tpu.memory_space<vmem>>, %arg14: memref<8x128xf32, #tpu.memory_space<vmem>>) attributes {dimension_semantics = [#tpu.dimension_semantics<parallel>, #tpu.dimension_semantics<arbitrary>], iteration_bounds = array<i64: 2, 4>, scalar_prefetch = 0 : i64, scratch_operands = 1 : i64, tpu.core_type = #tpu.core_type<tc>, window_params = [{transform_indices = @transform_0, window_bounds = array<i64: 64, 128>}, {transform_indices = @transform_1, window_bounds = array<i64: 64, 128>}, {transform_indices = @transform_2, window_bounds = array<i64: 8, 128>}, {transform_indices = @transform_3, window_bounds = array<i64: 1, 128>}, {transform_indices = @transform_4, window_bounds = array<i64: 64, 8, 128>}, {transform_indices = @transform_5, window_bounds = array<i64: 64, 8, 128>}, {pipeline_mode = #tpu.pipeline_mode<synchronous>, transform_indices = @transform_6, window_bounds = array<i64: 16, 128>}, {pipeline_mode = #tpu.pipeline_mode<synchronous>, transform_indices = @transform_7, window_bounds = array<i64: 16, 128>}, {pipeline_mode = #tpu.pipeline_mode<synchronous>, transform_indices = @transform_8, window_bounds = array<i64: 16, 8, 128>}, {pipeline_mode = #tpu.pipeline_mode<synchronous>, transform_indices = @transform_9, window_bounds = array<i64: 8, 128>}, {pipeline_mode = #tpu.pipeline_mode<synchronous>, transform_indices = @transform_10, window_bounds = array<i64: 8, 128>}, {transform_indices = @transform_11, window_bounds = array<i64: 64, 128>}]} {
    %c0_i32 = arith.constant 0 : i32
    %0 = arith.cmpi eq, %arg1, %c0_i32 : i32
    %1 = arith.extui %0 : i1 to i32
    %c0_i32_0 = arith.constant 0 : i32
    %2 = arith.cmpi ne, %1, %c0_i32_0 : i32
    scf.if %2 {
      %cst = arith.constant 0.000000e+00 : f32
      %13 = vector.broadcast %cst : f32 to vector<8x128xf32>
      %c0_18 = arith.constant 0 : index
      %c0_19 = arith.constant 0 : index
      %14 = vector.load %arg14[%c0_18, %c0_19] : memref<8x128xf32, #tpu.memory_space<vmem>>, vector<8x128xf32>
      tpu.vector_store %arg14[%c0_18, %c0_19], %13 {strides = array<i32>} : memref<8x128xf32, #tpu.memory_space<vmem>>, vector<8x128xf32>,
    } else {
    }
    %c0 = arith.constant 0 : index
    %c0_1 = arith.constant 0 : index
    %3 = vector.load %arg4[%c0, %c0_1] : memref<8x128xf32, #tpu.memory_space<vmem>>, vector<8x128xf32>
    %c0_2 = arith.constant 0 : index
    %c0_3 = arith.constant 0 : index
    %4 = vector.load %arg5[%c0_2, %c0_3] : memref<1x128xf32, #tpu.memory_space<vmem>>, vector<1x128xf32>
    %c0_4 = arith.constant 0 : index
    %c0_5 = arith.constant 0 : index
    %5 = vector.load %arg8[%c0_4, %c0_5] : memref<16x128xf32, #tpu.memory_space<vmem>>, vector<16x128xf32>
    %c0_6 = arith.constant 0 : index
    %c0_7 = arith.constant 0 : index
    %6 = vector.load %arg9[%c0_6, %c0_7] : memref<16x128xf32, #tpu.memory_space<vmem>>, vector<16x128xf32>
    %c0_8 = arith.constant 0 : index
    %c0_9 = arith.constant 0 : index
    %7 = vector.load %arg11[%c0_8, %c0_9] : memref<8x128xf32, #tpu.memory_space<vmem>>, vector<8x128xf32>
    %c0_10 = arith.constant 0 : index
    %c0_11 = arith.constant 0 : index
    %8 = vector.load %arg12[%c0_10, %c0_11] : memref<8x128xf32, #tpu.memory_space<vmem>>, vector<8x128xf32>
    %c0_12 = arith.constant 0 : index
    %c0_13 = arith.constant 0 : index
    %9 = vector.load %arg14[%c0_12, %c0_13] : memref<8x128xf32, #tpu.memory_space<vmem>>, vector<8x128xf32>
    %c0_i32_14 = arith.constant 0 : i32
    %c16_i32 = arith.constant 16 : i32
    %10 = arith.addi %c0_i32_14, %c16_i32 : i32
    %c1_i32 = arith.constant 1 : i32
    %11 = scf.for %arg15 = %c0_i32_14 to %10 step %c1_i32 iter_args(%arg16 = %9) -> (vector<8x128xf32>)  : i32 {
      %c4_i32 = arith.constant 4 : i32
      %13 = arith.muli %arg15, %c4_i32 : i32
      %14 = tpu.assume_multiple %13, 4 : i32
      %c0_i32_18 = arith.constant 0 : i32
      %15 = arith.addi %14, %c0_i32_18 : i32
      %16 = arith.index_cast %15 : i32 to index
      %c0_19 = arith.constant 0 : index
      %17 = vector.load %arg3[%16, %c0_19] : memref<64x128xf32, #tpu.memory_space<vmem>>, vector<1x128xf32>
      %18 = arith.index_cast %15 : i32 to index
      %c0_20 = arith.constant 0 : index
      %19 = vector.load %arg2[%18, %c0_20] : memref<64x128xf32, #tpu.memory_space<vmem>>, vector<1x128xf32>
      %20 = vector.broadcast %17 : vector<1x128xf32> to vector<8x128xf32>
      %21 = arith.mulf %20, %3 : vector<8x128xf32>
      %22 = math.exp %21 : vector<8x128xf32>
      %23 = arith.mulf %17, %19 : vector<1x128xf32>
      %24 = arith.index_cast %15 : i32 to index
      %c0_21 = arith.constant 0 : index
      %c0_22 = arith.constant 0 : index
      %25 = vector.load %arg6[%24, %c0_21, %c0_22] : memref<64x8x128xf32, #tpu.memory_space<vmem>>, vector<1x8x128xf32>
      %26 = vector.shape_cast %25 : vector<1x8x128xf32> to vector<8x128xf32>
      %27 = vector.broadcast %23 : vector<1x128xf32> to vector<8x128xf32>
      %28 = arith.mulf %27, %26 : vector<8x128xf32>
      %29 = arith.mulf %28, %28 : vector<8x128xf32>
      %cst = arith.constant dense<0.000000e+00> : vector<128xf32>
      %30 = vector.multi_reduction <add>, %29, %cst [0] : vector<8x128xf32> to vector<128xf32>
      %31 = vector.shape_cast %30 : vector<128xf32> to vector<1x128xf32>
      %32 = math.sqrt %31 : vector<1x128xf32>
      %cst_23 = arith.constant 9.99999997E-7 : f32
      %33 = vector.broadcast %cst_23 : f32 to vector<1x128xf32>
      %34 = arith.addf %32, %33 : vector<1x128xf32>
      %35 = tpu.reciprocal %34 {approx = true} : vector<1x128xf32> -> vector<1x128xf32>
      %36 = arith.mulf %28, %arg16 : vector<8x128xf32>
      %cst_24 = arith.constant dense<0.000000e+00> : vector<128xf32>
      %37 = vector.multi_reduction <add>, %36, %cst_24 [0] : vector<8x128xf32> to vector<128xf32>
      %38 = vector.shape_cast %37 : vector<128xf32> to vector<1x128xf32>
      %39 = arith.mulf %arg16, %arg16 : vector<8x128xf32>
      %cst_25 = arith.constant dense<0.000000e+00> : vector<128xf32>
      %40 = vector.multi_reduction <add>, %39, %cst_25 [0] : vector<8x128xf32> to vector<128xf32>
      %41 = vector.shape_cast %40 : vector<128xf32> to vector<1x128xf32>
      %42 = math.sqrt %41 : vector<1x128xf32>
      %cst_26 = arith.constant 9.99999997E-7 : f32
      %43 = vector.broadcast %cst_26 : f32 to vector<1x128xf32>
      %44 = arith.addf %42, %43 : vector<1x128xf32>
      %45 = arith.mulf %38, %35 : vector<1x128xf32>
      %46 = tpu.reciprocal %44 {approx = true} : vector<1x128xf32> -> vector<1x128xf32>
      %47 = arith.mulf %45, %46 : vector<1x128xf32>
      %48 = vector.broadcast %47 : vector<1x128xf32> to vector<16x128xf32>
      %49 = arith.mulf %48, %5 : vector<16x128xf32>
      %50 = arith.addf %49, %6 : vector<16x128xf32>
      %cst_27 = arith.constant 0.000000e+00 : f32
      %51 = vector.broadcast %cst_27 : f32 to vector<16x128xf32>
      %52 = arith.maximumf %50, %51 : vector<16x128xf32>
      %53 = vector.extract_strided_slice %52 {offsets = [0, 0], sizes = [1, 128], strides = [1, 1]} : vector<16x128xf32> to vector<1x128xf32>
      %54 = vector.shape_cast %53 : vector<1x128xf32> to vector<1x128xf32>
      %55 = vector.broadcast %54 : vector<1x128xf32> to vector<8x128xf32>
      %c0_28 = arith.constant 0 : index
      %c0_29 = arith.constant 0 : index
      %c0_30 = arith.constant 0 : index
      %56 = vector.load %arg10[%c0_28, %c0_29, %c0_30] : memref<16x8x128xf32, #tpu.memory_space<vmem>>, vector<1x8x128xf32>
      %57 = vector.shape_cast %56 : vector<1x8x128xf32> to vector<8x128xf32>
      %58 = arith.mulf %55, %57 : vector<8x128xf32>
      %59 = arith.addf %7, %58 : vector<8x128xf32>
      %60 = vector.extract_strided_slice %52 {offsets = [1, 0], sizes = [1, 128], strides = [1, 1]} : vector<16x128xf32> to vector<1x128xf32>
      %61 = vector.shape_cast %60 : vector<1x128xf32> to vector<1x128xf32>
      %62 = vector.broadcast %61 : vector<1x128xf32> to vector<8x128xf32>
      %c1 = arith.constant 1 : index
      %c0_31 = arith.constant 0 : index
      %c0_32 = arith.constant 0 : index
      %63 = vector.load %arg10[%c1, %c0_31, %c0_32] : memref<16x8x128xf32, #tpu.memory_space<vmem>>, vector<1x8x128xf32>
      %64 = vector.shape_cast %63 : vector<1x8x128xf32> to vector<8x128xf32>
      %65 = arith.mulf %62, %64 : vector<8x128xf32>
      %66 = vector.extract_strided_slice %52 {offsets = [2, 0], sizes = [1, 128], strides = [1, 1]} : vector<16x128xf32> to vector<1x128xf32>
      %67 = vector.shape_cast %66 : vector<1x128xf32> to vector<1x128xf32>
      %68 = vector.broadcast %67 : vector<1x128xf32> to vector<8x128xf32>
      %c2 = arith.constant 2 : index
      %c0_33 = arith.constant 0 : index
      %c0_34 = arith.constant 0 : index
      %69 = vector.load %arg10[%c2, %c0_33, %c0_34] : memref<16x8x128xf32, #tpu.memory_space<vmem>>, vector<1x8x128xf32>
      %70 = vector.shape_cast %69 : vector<1x8x128xf32> to vector<8x128xf32>
      %71 = arith.mulf %68, %70 : vector<8x128xf32>
      %72 = vector.extract_strided_slice %52 {offsets = [3, 0], sizes = [1, 128], strides = [1, 1]} : vector<16x128xf32> to vector<1x128xf32>
      %73 = vector.shape_cast %72 : vector<1x128xf32> to vector<1x128xf32>
      %74 = vector.broadcast %73 : vector<1x128xf32> to vector<8x128xf32>
      %c3 = arith.constant 3 : index
      %c0_35 = arith.constant 0 : index
      %c0_36 = arith.constant 0 : index
      %75 = vector.load %arg10[%c3, %c0_35, %c0_36] : memref<16x8x128xf32, #tpu.memory_space<vmem>>, vector<1x8x128xf32>
      %76 = vector.shape_cast %75 : vector<1x8x128xf32> to vector<8x128xf32>
      %77 = arith.mulf %74, %76 : vector<8x128xf32>
      %78 = vector.extract_strided_slice %52 {offsets = [4, 0], sizes = [1, 128], strides = [1, 1]} : vector<16x128xf32> to vector<1x128xf32>
      %79 = vector.shape_cast %78 : vector<1x128xf32> to vector<1x128xf32>
      %80 = vector.broadcast %79 : vector<1x128xf32> to vector<8x128xf32>
      %c4 = arith.constant 4 : index
      %c0_37 = arith.constant 0 : index
      %c0_38 = arith.constant 0 : index
      %81 = vector.load %arg10[%c4, %c0_37, %c0_38] : memref<16x8x128xf32, #tpu.memory_space<vmem>>, vector<1x8x128xf32>
      %82 = vector.shape_cast %81 : vector<1x8x128xf32> to vector<8x128xf32>
      %83 = arith.mulf %80, %82 : vector<8x128xf32>
      %84 = arith.addf %59, %83 : vector<8x128xf32>
      %85 = vector.extract_strided_slice %52 {offsets = [5, 0], sizes = [1, 128], strides = [1, 1]} : vector<16x128xf32> to vector<1x128xf32>
      %86 = vector.shape_cast %85 : vector<1x128xf32> to vector<1x128xf32>
      %87 = vector.broadcast %86 : vector<1x128xf32> to vector<8x128xf32>
      %c5 = arith.constant 5 : index
      %c0_39 = arith.constant 0 : index
      %c0_40 = arith.constant 0 : index
      %88 = vector.load %arg10[%c5, %c0_39, %c0_40] : memref<16x8x128xf32, #tpu.memory_space<vmem>>, vector<1x8x128xf32>
      %89 = vector.shape_cast %88 : vector<1x8x128xf32> to vector<8x128xf32>
      %90 = arith.mulf %87, %89 : vector<8x128xf32>
      %91 = arith.addf %65, %90 : vector<8x128xf32>
      %92 = vector.extract_strided_slice %52 {offsets = [6, 0], sizes = [1, 128], strides = [1, 1]} : vector<16x128xf32> to vector<1x128xf32>
      %93 = vector.shape_cast %92 : vector<1x128xf32> to vector<1x128xf32>
      %94 = vector.broadcast %93 : vector<1x128xf32> to vector<8x128xf32>
      %c6 = arith.constant 6 : index
      %c0_41 = arith.constant 0 : index
      %c0_42 = arith.constant 0 : index
      %95 = vector.load %arg10[%c6, %c0_41, %c0_42] : memref<16x8x128xf32, #tpu.memory_space<vmem>>, vector<1x8x128xf32>
      %96 = vector.shape_cast %95 : vector<1x8x128xf32> to vector<8x128xf32>
      %97 = arith.mulf %94, %96 : vector<8x128xf32>
      %98 = arith.addf %71, %97 : vector<8x128xf32>
      %99 = vector.extract_strided_slice %52 {offsets = [7, 0], sizes = [1, 128], strides = [1, 1]} : vector<16x128xf32> to vector<1x128xf32>
      %100 = vector.shape_cast %99 : vector<1x128xf32> to vector<1x128xf32>
      %101 = vector.broadcast %100 : vector<1x128xf32> to vector<8x128xf32>
      %c7 = arith.constant 7 : index
      %c0_43 = arith.constant 0 : index
      %c0_44 = arith.constant 0 : index
      %102 = vector.load %arg10[%c7, %c0_43, %c0_44] : memref<16x8x128xf32, #tpu.memory_space<vmem>>, vector<1x8x128xf32>
      %103 = vector.shape_cast %102 : vector<1x8x128xf32> to vector<8x128xf32>
      %104 = arith.mulf %101, %103 : vector<8x128xf32>
      %105 = arith.addf %77, %104 : vector<8x128xf32>
      %106 = vector.extract_strided_slice %52 {offsets = [8, 0], sizes = [1, 128], strides = [1, 1]} : vector<16x128xf32> to vector<1x128xf32>
      %107 = vector.shape_cast %106 : vector<1x128xf32> to vector<1x128xf32>
      %108 = vector.broadcast %107 : vector<1x128xf32> to vector<8x128xf32>
      %c8 = arith.constant 8 : index
      %c0_45 = arith.constant 0 : index
      %c0_46 = arith.constant 0 : index
      %109 = vector.load %arg10[%c8, %c0_45, %c0_46] : memref<16x8x128xf32, #tpu.memory_space<vmem>>, vector<1x8x128xf32>
      %110 = vector.shape_cast %109 : vector<1x8x128xf32> to vector<8x128xf32>
      %111 = arith.mulf %108, %110 : vector<8x128xf32>
      %112 = arith.addf %84, %111 : vector<8x128xf32>
      %113 = vector.extract_strided_slice %52 {offsets = [9, 0], sizes = [1, 128], strides = [1, 1]} : vector<16x128xf32> to vector<1x128xf32>
      %114 = vector.shape_cast %113 : vector<1x128xf32> to vector<1x128xf32>
      %115 = vector.broadcast %114 : vector<1x128xf32> to vector<8x128xf32>
      %c9 = arith.constant 9 : index
      %c0_47 = arith.constant 0 : index
      %c0_48 = arith.constant 0 : index
      %116 = vector.load %arg10[%c9, %c0_47, %c0_48] : memref<16x8x128xf32, #tpu.memory_space<vmem>>, vector<1x8x128xf32>
      %117 = vector.shape_cast %116 : vector<1x8x128xf32> to vector<8x128xf32>
      %118 = arith.mulf %115, %117 : vector<8x128xf32>
      %119 = arith.addf %91, %118 : vector<8x128xf32>
      %120 = vector.extract_strided_slice %52 {offsets = [10, 0], sizes = [1, 128], strides = [1, 1]} : vector<16x128xf32> to vector<1x128xf32>
      %121 = vector.shape_cast %120 : vector<1x128xf32> to vector<1x128xf32>
      %122 = vector.broadcast %121 : vector<1x128xf32> to vector<8x128xf32>
      %c10 = arith.constant 10 : index
      %c0_49 = arith.constant 0 : index
      %c0_50 = arith.constant 0 : index
      %123 = vector.load %arg10[%c10, %c0_49, %c0_50] : memref<16x8x128xf32, #tpu.memory_space<vmem>>, vector<1x8x128xf32>
      %124 = vector.shape_cast %123 : vector<1x8x128xf32> to vector<8x128xf32>
      %125 = arith.mulf %122, %124 : vector<8x128xf32>
      %126 = arith.addf %98, %125 : vector<8x128xf32>
      %127 = vector.extract_strided_slice %52 {offsets = [11, 0], sizes = [1, 128], strides = [1, 1]} : vector<16x128xf32> to vector<1x128xf32>
      %128 = vector.shape_cast %127 : vector<1x128xf32> to vector<1x128xf32>
      %129 = vector.broadcast %128 : vector<1x128xf32> to vector<8x128xf32>
      %c11 = arith.constant 11 : index
      %c0_51 = arith.constant 0 : index
      %c0_52 = arith.constant 0 : index
      %130 = vector.load %arg10[%c11, %c0_51, %c0_52] : memref<16x8x128xf32, #tpu.memory_space<vmem>>, vector<1x8x128xf32>
      %131 = vector.shape_cast %130 : vector<1x8x128xf32> to vector<8x128xf32>
      %132 = arith.mulf %129, %131 : vector<8x128xf32>
      %133 = arith.addf %105, %132 : vector<8x128xf32>
      %134 = vector.extract_strided_slice %52 {offsets = [12, 0], sizes = [1, 128], strides = [1, 1]} : vector<16x128xf32> to vector<1x128xf32>
      %135 = vector.shape_cast %134 : vector<1x128xf32> to vector<1x128xf32>
      %136 = vector.broadcast %135 : vector<1x128xf32> to vector<8x128xf32>
      %c12 = arith.constant 12 : index
      %c0_53 = arith.constant 0 : index
      %c0_54 = arith.constant 0 : index
      %137 = vector.load %arg10[%c12, %c0_53, %c0_54] : memref<16x8x128xf32, #tpu.memory_space<vmem>>, vector<1x8x128xf32>
      %138 = vector.shape_cast %137 : vector<1x8x128xf32> to vector<8x128xf32>
      %139 = arith.mulf %136, %138 : vector<8x128xf32>
      %140 = arith.addf %112, %139 : vector<8x128xf32>
      %141 = vector.extract_strided_slice %52 {offsets = [13, 0], sizes = [1, 128], strides = [1, 1]} : vector<16x128xf32> to vector<1x128xf32>
      %142 = vector.shape_cast %141 : vector<1x128xf32> to vector<1x128xf32>
      %143 = vector.broadcast %142 : vector<1x128xf32> to vector<8x128xf32>
      %c13 = arith.constant 13 : index
      %c0_55 = arith.constant 0 : index
      %c0_56 = arith.constant 0 : index
      %144 = vector.load %arg10[%c13, %c0_55, %c0_56] : memref<16x8x128xf32, #tpu.memory_space<vmem>>, vector<1x8x128xf32>
      %145 = vector.shape_cast %144 : vector<1x8x128xf32> to vector<8x128xf32>
      %146 = arith.mulf %143, %145 : vector<8x128xf32>
      %147 = arith.addf %119, %146 : vector<8x128xf32>
      %148 = vector.extract_strided_slice %52 {offsets = [14, 0], sizes = [1, 128], strides = [1, 1]} : vector<16x128xf32> to vector<1x128xf32>
      %149 = vector.shape_cast %148 : vector<1x128xf32> to vector<1x128xf32>
      %150 = vector.broadcast %149 : vector<1x128xf32> to vector<8x128xf32>
      %c14 = arith.constant 14 : index
      %c0_57 = arith.constant 0 : index
      %c0_58 = arith.constant 0 : index
      %151 = vector.load %arg10[%c14, %c0_57, %c0_58] : memref<16x8x128xf32, #tpu.memory_space<vmem>>, vector<1x8x128xf32>
      %152 = vector.shape_cast %151 : vector<1x8x128xf32> to vector<8x128xf32>
      %153 = arith.mulf %150, %152 : vector<8x128xf32>
      %154 = arith.addf %126, %153 : vector<8x128xf32>
      %155 = vector.extract_strided_slice %52 {offsets = [15, 0], sizes = [1, 128], strides = [1, 1]} : vector<16x128xf32> to vector<1x128xf32>
      %156 = vector.shape_cast %155 : vector<1x128xf32> to vector<1x128xf32>
      %157 = vector.broadcast %156 : vector<1x128xf32> to vector<8x128xf32>
      %c15 = arith.constant 15 : index
      %c0_59 = arith.constant 0 : index
      %c0_60 = arith.constant 0 : index
      %158 = vector.load %arg10[%c15, %c0_59, %c0_60] : memref<16x8x128xf32, #tpu.memory_space<vmem>>, vector<1x8x128xf32>
      %159 = vector.shape_cast %158 : vector<1x8x128xf32> to vector<8x128xf32>
      %160 = arith.mulf %157, %159 : vector<8x128xf32>
      %161 = arith.addf %133, %160 : vector<8x128xf32>
      %162 = arith.addf %140, %147 : vector<8x128xf32>
      %163 = arith.addf %154, %161 : vector<8x128xf32>
      %164 = arith.addf %162, %163 : vector<8x128xf32>
      %165 = arith.negf %164 : vector<8x128xf32>
      %166 = math.exp %165 : vector<8x128xf32>
      %cst_61 = arith.constant 1.000000e+00 : f32
      %167 = vector.broadcast %cst_61 : f32 to vector<8x128xf32>
      %168 = arith.addf %167, %166 : vector<8x128xf32>
      %169 = arith.divf %167, %168 : vector<8x128xf32>
      %170 = arith.mulf %22, %arg16 : vector<8x128xf32>
      %171 = arith.mulf %8, %169 : vector<8x128xf32>
      %cst_62 = arith.constant 1.000000e+00 : f32
      %172 = vector.broadcast %cst_62 : f32 to vector<8x128xf32>
      %173 = arith.addf %171, %172 : vector<8x128xf32>
      %174 = arith.mulf %173, %28 : vector<8x128xf32>
      %175 = arith.addf %170, %174 : vector<8x128xf32>
      %176 = arith.index_cast %15 : i32 to index
      %c0_63 = arith.constant 0 : index
      %c0_64 = arith.constant 0 : index
      %177 = vector.load %arg7[%176, %c0_63, %c0_64] : memref<64x8x128xf32, #tpu.memory_space<vmem>>, vector<1x8x128xf32>
      %178 = vector.shape_cast %177 : vector<1x8x128xf32> to vector<8x128xf32>
      %179 = arith.mulf %175, %178 : vector<8x128xf32>
      %cst_65 = arith.constant dense<0.000000e+00> : vector<128xf32>
      %180 = vector.multi_reduction <add>, %179, %cst_65 [0] : vector<8x128xf32> to vector<128xf32>
      %181 = vector.shape_cast %180 : vector<128xf32> to vector<1x128xf32>
      %182 = arith.mulf %19, %4 : vector<1x128xf32>
      %183 = arith.addf %181, %182 : vector<1x128xf32>
      %184 = arith.index_cast %15 : i32 to index
      %c0_66 = arith.constant 0 : index
      %185 = vector.load %arg13[%184, %c0_66] : memref<64x128xf32, #tpu.memory_space<vmem>>, vector<1x128xf32>
      tpu.vector_store %arg13[%184, %c0_66], %183 {strides = array<i32>} : memref<64x128xf32, #tpu.memory_space<vmem>>, vector<1x128xf32>,
      %c1_i32_67 = arith.constant 1 : i32
      %186 = arith.addi %14, %c1_i32_67 : i32
      %187 = arith.index_cast %186 : i32 to index
      %c0_68 = arith.constant 0 : index
      %188 = vector.load %arg3[%187, %c0_68] : memref<64x128xf32, #tpu.memory_space<vmem>>, vector<1x128xf32>
      %189 = arith.index_cast %186 : i32 to index
      %c0_69 = arith.constant 0 : index
      %190 = vector.load %arg2[%189, %c0_69] : memref<64x128xf32, #tpu.memory_space<vmem>>, vector<1x128xf32>
      %191 = vector.broadcast %188 : vector<1x128xf32> to vector<8x128xf32>
      %192 = arith.mulf %191, %3 : vector<8x128xf32>
      %193 = math.exp %192 : vector<8x128xf32>
      %194 = arith.mulf %188, %190 : vector<1x128xf32>
      %195 = arith.index_cast %186 : i32 to index
      %c0_70 = arith.constant 0 : index
      %c0_71 = arith.constant 0 : index
      %196 = vector.load %arg6[%195, %c0_70, %c0_71] : memref<64x8x128xf32, #tpu.memory_space<vmem>>, vector<1x8x128xf32>
      %197 = vector.shape_cast %196 : vector<1x8x128xf32> to vector<8x128xf32>
      %198 = vector.broadcast %194 : vector<1x128xf32> to vector<8x128xf32>
      %199 = arith.mulf %198, %197 : vector<8x128xf32>
      %200 = arith.mulf %199, %199 : vector<8x128xf32>
      %cst_72 = arith.constant dense<0.000000e+00> : vector<128xf32>
      %201 = vector.multi_reduction <add>, %200, %cst_72 [0] : vector<8x128xf32> to vector<128xf32>
      %202 = vector.shape_cast %201 : vector<128xf32> to vector<1x128xf32>
      %203 = math.sqrt %202 : vector<1x128xf32>
      %cst_73 = arith.constant 9.99999997E-7 : f32
      %204 = vector.broadcast %cst_73 : f32 to vector<1x128xf32>
      %205 = arith.addf %203, %204 : vector<1x128xf32>
      %206 = tpu.reciprocal %205 {approx = true} : vector<1x128xf32> -> vector<1x128xf32>
      %207 = arith.mulf %199, %175 : vector<8x128xf32>
      %cst_74 = arith.constant dense<0.000000e+00> : vector<128xf32>
      %208 = vector.multi_reduction <add>, %207, %cst_74 [0] : vector<8x128xf32> to vector<128xf32>
      %209 = vector.shape_cast %208 : vector<128xf32> to vector<1x128xf32>
      %210 = arith.mulf %175, %175 : vector<8x128xf32>
      %cst_75 = arith.constant dense<0.000000e+00> : vector<128xf32>
      %211 = vector.multi_reduction <add>, %210, %cst_75 [0] : vector<8x128xf32> to vector<128xf32>
      %212 = vector.shape_cast %211 : vector<128xf32> to vector<1x128xf32>
      %213 = math.sqrt %212 : vector<1x128xf32>
      %cst_76 = arith.constant 9.99999997E-7 : f32
      %214 = vector.broadcast %cst_76 : f32 to vector<1x128xf32>
      %215 = arith.addf %213, %214 : vector<1x128xf32>
      %216 = arith.mulf %209, %206 : vector<1x128xf32>
      %217 = tpu.reciprocal %215 {approx = true} : vector<1x128xf32> -> vector<1x128xf32>
      %218 = arith.mulf %216, %217 : vector<1x128xf32>
      %219 = vector.broadcast %218 : vector<1x128xf32> to vector<16x128xf32>
      %220 = arith.mulf %219, %5 : vector<16x128xf32>
      %221 = arith.addf %220, %6 : vector<16x128xf32>
      %cst_77 = arith.constant 0.000000e+00 : f32
      %222 = vector.broadcast %cst_77 : f32 to vector<16x128xf32>
      %223 = arith.maximumf %221, %222 : vector<16x128xf32>
      %224 = vector.extract_strided_slice %223 {offsets = [0, 0], sizes = [1, 128], strides = [1, 1]} : vector<16x128xf32> to vector<1x128xf32>
      %225 = vector.shape_cast %224 : vector<1x128xf32> to vector<1x128xf32>
      %226 = vector.broadcast %225 : vector<1x128xf32> to vector<8x128xf32>
      %c0_78 = arith.constant 0 : index
      %c0_79 = arith.constant 0 : index
      %c0_80 = arith.constant 0 : index
      %227 = vector.load %arg10[%c0_78, %c0_79, %c0_80] : memref<16x8x128xf32, #tpu.memory_space<vmem>>, vector<1x8x128xf32>
      %228 = vector.shape_cast %227 : vector<1x8x128xf32> to vector<8x128xf32>
      %229 = arith.mulf %226, %228 : vector<8x128xf32>
      %230 = arith.addf %7, %229 : vector<8x128xf32>
      %231 = vector.extract_strided_slice %223 {offsets = [1, 0], sizes = [1, 128], strides = [1, 1]} : vector<16x128xf32> to vector<1x128xf32>
      %232 = vector.shape_cast %231 : vector<1x128xf32> to vector<1x128xf32>
      %233 = vector.broadcast %232 : vector<1x128xf32> to vector<8x128xf32>
      %c1_81 = arith.constant 1 : index
      %c0_82 = arith.constant 0 : index
      %c0_83 = arith.constant 0 : index
      %234 = vector.load %arg10[%c1_81, %c0_82, %c0_83] : memref<16x8x128xf32, #tpu.memory_space<vmem>>, vector<1x8x128xf32>
      %235 = vector.shape_cast %234 : vector<1x8x128xf32> to vector<8x128xf32>
      %236 = arith.mulf %233, %235 : vector<8x128xf32>
      %237 = vector.extract_strided_slice %223 {offsets = [2, 0], sizes = [1, 128], strides = [1, 1]} : vector<16x128xf32> to vector<1x128xf32>
      %238 = vector.shape_cast %237 : vector<1x128xf32> to vector<1x128xf32>
      %239 = vector.broadcast %238 : vector<1x128xf32> to vector<8x128xf32>
      %c2_84 = arith.constant 2 : index
      %c0_85 = arith.constant 0 : index
      %c0_86 = arith.constant 0 : index
      %240 = vector.load %arg10[%c2_84, %c0_85, %c0_86] : memref<16x8x128xf32, #tpu.memory_space<vmem>>, vector<1x8x128xf32>
      %241 = vector.shape_cast %240 : vector<1x8x128xf32> to vector<8x128xf32>
      %242 = arith.mulf %239, %241 : vector<8x128xf32>
      %243 = vector.extract_strided_slice %223 {offsets = [3, 0], sizes = [1, 128], strides = [1, 1]} : vector<16x128xf32> to vector<1x128xf32>
      %244 = vector.shape_cast %243 : vector<1x128xf32> to vector<1x128xf32>
      %245 = vector.broadcast %244 : vector<1x128xf32> to vector<8x128xf32>
      %c3_87 = arith.constant 3 : index
      %c0_88 = arith.constant 0 : index
      %c0_89 = arith.constant 0 : index
      %246 = vector.load %arg10[%c3_87, %c0_88, %c0_89] : memref<16x8x128xf32, #tpu.memory_space<vmem>>, vector<1x8x128xf32>
      %247 = vector.shape_cast %246 : vector<1x8x128xf32> to vector<8x128xf32>
      %248 = arith.mulf %245, %247 : vector<8x128xf32>
      %249 = vector.extract_strided_slice %223 {offsets = [4, 0], sizes = [1, 128], strides = [1, 1]} : vector<16x128xf32> to vector<1x128xf32>
      %250 = vector.shape_cast %249 : vector<1x128xf32> to vector<1x128xf32>
      %251 = vector.broadcast %250 : vector<1x128xf32> to vector<8x128xf32>
      %c4_90 = arith.constant 4 : index
      %c0_91 = arith.constant 0 : index
      %c0_92 = arith.constant 0 : index
      %252 = vector.load %arg10[%c4_90, %c0_91, %c0_92] : memref<16x8x128xf32, #tpu.memory_space<vmem>>, vector<1x8x128xf32>
      %253 = vector.shape_cast %252 : vector<1x8x128xf32> to vector<8x128xf32>
      %254 = arith.mulf %251, %253 : vector<8x128xf32>
      %255 = arith.addf %230, %254 : vector<8x128xf32>
      %256 = vector.extract_strided_slice %223 {offsets = [5, 0], sizes = [1, 128], strides = [1, 1]} : vector<16x128xf32> to vector<1x128xf32>
      %257 = vector.shape_cast %256 : vector<1x128xf32> to vector<1x128xf32>
      %258 = vector.broadcast %257 : vector<1x128xf32> to vector<8x128xf32>
      %c5_93 = arith.constant 5 : index
      %c0_94 = arith.constant 0 : index
      %c0_95 = arith.constant 0 : index
      %259 = vector.load %arg10[%c5_93, %c0_94, %c0_95] : memref<16x8x128xf32, #tpu.memory_space<vmem>>, vector<1x8x128xf32>
      %260 = vector.shape_cast %259 : vector<1x8x128xf32> to vector<8x128xf32>
      %261 = arith.mulf %258, %260 : vector<8x128xf32>
      %262 = arith.addf %236, %261 : vector<8x128xf32>
      %263 = vector.extract_strided_slice %223 {offsets = [6, 0], sizes = [1, 128], strides = [1, 1]} : vector<16x128xf32> to vector<1x128xf32>
      %264 = vector.shape_cast %263 : vector<1x128xf32> to vector<1x128xf32>
      %265 = vector.broadcast %264 : vector<1x128xf32> to vector<8x128xf32>
      %c6_96 = arith.constant 6 : index
      %c0_97 = arith.constant 0 : index
      %c0_98 = arith.constant 0 : index
      %266 = vector.load %arg10[%c6_96, %c0_97, %c0_98] : memref<16x8x128xf32, #tpu.memory_space<vmem>>, vector<1x8x128xf32>
      %267 = vector.shape_cast %266 : vector<1x8x128xf32> to vector<8x128xf32>
      %268 = arith.mulf %265, %267 : vector<8x128xf32>
      %269 = arith.addf %242, %268 : vector<8x128xf32>
      %270 = vector.extract_strided_slice %223 {offsets = [7, 0], sizes = [1, 128], strides = [1, 1]} : vector<16x128xf32> to vector<1x128xf32>
      %271 = vector.shape_cast %270 : vector<1x128xf32> to vector<1x128xf32>
      %272 = vector.broadcast %271 : vector<1x128xf32> to vector<8x128xf32>
      %c7_99 = arith.constant 7 : index
      %c0_100 = arith.constant 0 : index
      %c0_101 = arith.constant 0 : index
      %273 = vector.load %arg10[%c7_99, %c0_100, %c0_101] : memref<16x8x128xf32, #tpu.memory_space<vmem>>, vector<1x8x128xf32>
      %274 = vector.shape_cast %273 : vector<1x8x128xf32> to vector<8x128xf32>
      %275 = arith.mulf %272, %274 : vector<8x128xf32>
      %276 = arith.addf %248, %275 : vector<8x128xf32>
      %277 = vector.extract_strided_slice %223 {offsets = [8, 0], sizes = [1, 128], strides = [1, 1]} : vector<16x128xf32> to vector<1x128xf32>
      %278 = vector.shape_cast %277 : vector<1x128xf32> to vector<1x128xf32>
      %279 = vector.broadcast %278 : vector<1x128xf32> to vector<8x128xf32>
      %c8_102 = arith.constant 8 : index
      %c0_103 = arith.constant 0 : index
      %c0_104 = arith.constant 0 : index
      %280 = vector.load %arg10[%c8_102, %c0_103, %c0_104] : memref<16x8x128xf32, #tpu.memory_space<vmem>>, vector<1x8x128xf32>
      %281 = vector.shape_cast %280 : vector<1x8x128xf32> to vector<8x128xf32>
      %282 = arith.mulf %279, %281 : vector<8x128xf32>
      %283 = arith.addf %255, %282 : vector<8x128xf32>
      %284 = vector.extract_strided_slice %223 {offsets = [9, 0], sizes = [1, 128], strides = [1, 1]} : vector<16x128xf32> to vector<1x128xf32>
      %285 = vector.shape_cast %284 : vector<1x128xf32> to vector<1x128xf32>
      %286 = vector.broadcast %285 : vector<1x128xf32> to vector<8x128xf32>
      %c9_105 = arith.constant 9 : index
      %c0_106 = arith.constant 0 : index
      %c0_107 = arith.constant 0 : index
      %287 = vector.load %arg10[%c9_105, %c0_106, %c0_107] : memref<16x8x128xf32, #tpu.memory_space<vmem>>, vector<1x8x128xf32>
      %288 = vector.shape_cast %287 : vector<1x8x128xf32> to vector<8x128xf32>
      %289 = arith.mulf %286, %288 : vector<8x128xf32>
      %290 = arith.addf %262, %289 : vector<8x128xf32>
      %291 = vector.extract_strided_slice %223 {offsets = [10, 0], sizes = [1, 128], strides = [1, 1]} : vector<16x128xf32> to vector<1x128xf32>
      %292 = vector.shape_cast %291 : vector<1x128xf32> to vector<1x128xf32>
      %293 = vector.broadcast %292 : vector<1x128xf32> to vector<8x128xf32>
      %c10_108 = arith.constant 10 : index
      %c0_109 = arith.constant 0 : index
      %c0_110 = arith.constant 0 : index
      %294 = vector.load %arg10[%c10_108, %c0_109, %c0_110] : memref<16x8x128xf32, #tpu.memory_space<vmem>>, vector<1x8x128xf32>
      %295 = vector.shape_cast %294 : vector<1x8x128xf32> to vector<8x128xf32>
      %296 = arith.mulf %293, %295 : vector<8x128xf32>
      %297 = arith.addf %269, %296 : vector<8x128xf32>
      %298 = vector.extract_strided_slice %223 {offsets = [11, 0], sizes = [1, 128], strides = [1, 1]} : vector<16x128xf32> to vector<1x128xf32>
      %299 = vector.shape_cast %298 : vector<1x128xf32> to vector<1x128xf32>
      %300 = vector.broadcast %299 : vector<1x128xf32> to vector<8x128xf32>
      %c11_111 = arith.constant 11 : index
      %c0_112 = arith.constant 0 : index
      %c0_113 = arith.constant 0 : index
      %301 = vector.load %arg10[%c11_111, %c0_112, %c0_113] : memref<16x8x128xf32, #tpu.memory_space<vmem>>, vector<1x8x128xf32>
      %302 = vector.shape_cast %301 : vector<1x8x128xf32> to vector<8x128xf32>
      %303 = arith.mulf %300, %302 : vector<8x128xf32>
      %304 = arith.addf %276, %303 : vector<8x128xf32>
      %305 = vector.extract_strided_slice %223 {offsets = [12, 0], sizes = [1, 128], strides = [1, 1]} : vector<16x128xf32> to vector<1x128xf32>
      %306 = vector.shape_cast %305 : vector<1x128xf32> to vector<1x128xf32>
      %307 = vector.broadcast %306 : vector<1x128xf32> to vector<8x128xf32>
      %c12_114 = arith.constant 12 : index
      %c0_115 = arith.constant 0 : index
      %c0_116 = arith.constant 0 : index
      %308 = vector.load %arg10[%c12_114, %c0_115, %c0_116] : memref<16x8x128xf32, #tpu.memory_space<vmem>>, vector<1x8x128xf32>
      %309 = vector.shape_cast %308 : vector<1x8x128xf32> to vector<8x128xf32>
      %310 = arith.mulf %307, %309 : vector<8x128xf32>
      %311 = arith.addf %283, %310 : vector<8x128xf32>
      %312 = vector.extract_strided_slice %223 {offsets = [13, 0], sizes = [1, 128], strides = [1, 1]} : vector<16x128xf32> to vector<1x128xf32>
      %313 = vector.shape_cast %312 : vector<1x128xf32> to vector<1x128xf32>
      %314 = vector.broadcast %313 : vector<1x128xf32> to vector<8x128xf32>
      %c13_117 = arith.constant 13 : index
      %c0_118 = arith.constant 0 : index
      %c0_119 = arith.constant 0 : index
      %315 = vector.load %arg10[%c13_117, %c0_118, %c0_119] : memref<16x8x128xf32, #tpu.memory_space<vmem>>, vector<1x8x128xf32>
      %316 = vector.shape_cast %315 : vector<1x8x128xf32> to vector<8x128xf32>
      %317 = arith.mulf %314, %316 : vector<8x128xf32>
      %318 = arith.addf %290, %317 : vector<8x128xf32>
      %319 = vector.extract_strided_slice %223 {offsets = [14, 0], sizes = [1, 128], strides = [1, 1]} : vector<16x128xf32> to vector<1x128xf32>
      %320 = vector.shape_cast %319 : vector<1x128xf32> to vector<1x128xf32>
      %321 = vector.broadcast %320 : vector<1x128xf32> to vector<8x128xf32>
      %c14_120 = arith.constant 14 : index
      %c0_121 = arith.constant 0 : index
      %c0_122 = arith.constant 0 : index
      %322 = vector.load %arg10[%c14_120, %c0_121, %c0_122] : memref<16x8x128xf32, #tpu.memory_space<vmem>>, vector<1x8x128xf32>
      %323 = vector.shape_cast %322 : vector<1x8x128xf32> to vector<8x128xf32>
      %324 = arith.mulf %321, %323 : vector<8x128xf32>
      %325 = arith.addf %297, %324 : vector<8x128xf32>
      %326 = vector.extract_strided_slice %223 {offsets = [15, 0], sizes = [1, 128], strides = [1, 1]} : vector<16x128xf32> to vector<1x128xf32>
      %327 = vector.shape_cast %326 : vector<1x128xf32> to vector<1x128xf32>
      %328 = vector.broadcast %327 : vector<1x128xf32> to vector<8x128xf32>
      %c15_123 = arith.constant 15 : index
      %c0_124 = arith.constant 0 : index
      %c0_125 = arith.constant 0 : index
      %329 = vector.load %arg10[%c15_123, %c0_124, %c0_125] : memref<16x8x128xf32, #tpu.memory_space<vmem>>, vector<1x8x128xf32>
      %330 = vector.shape_cast %329 : vector<1x8x128xf32> to vector<8x128xf32>
      %331 = arith.mulf %328, %330 : vector<8x128xf32>
      %332 = arith.addf %304, %331 : vector<8x128xf32>
      %333 = arith.addf %311, %318 : vector<8x128xf32>
      %334 = arith.addf %325, %332 : vector<8x128xf32>
      %335 = arith.addf %333, %334 : vector<8x128xf32>
      %336 = arith.negf %335 : vector<8x128xf32>
      %337 = math.exp %336 : vector<8x128xf32>
      %cst_126 = arith.constant 1.000000e+00 : f32
      %338 = vector.broadcast %cst_126 : f32 to vector<8x128xf32>
      %339 = arith.addf %338, %337 : vector<8x128xf32>
      %340 = arith.divf %338, %339 : vector<8x128xf32>
      %341 = arith.mulf %193, %175 : vector<8x128xf32>
      %342 = arith.mulf %8, %340 : vector<8x128xf32>
      %cst_127 = arith.constant 1.000000e+00 : f32
      %343 = vector.broadcast %cst_127 : f32 to vector<8x128xf32>
      %344 = arith.addf %342, %343 : vector<8x128xf32>
      %345 = arith.mulf %344, %199 : vector<8x128xf32>
      %346 = arith.addf %341, %345 : vector<8x128xf32>
      %347 = arith.index_cast %186 : i32 to index
      %c0_128 = arith.constant 0 : index
      %c0_129 = arith.constant 0 : index
      %348 = vector.load %arg7[%347, %c0_128, %c0_129] : memref<64x8x128xf32, #tpu.memory_space<vmem>>, vector<1x8x128xf32>
      %349 = vector.shape_cast %348 : vector<1x8x128xf32> to vector<8x128xf32>
      %350 = arith.mulf %346, %349 : vector<8x128xf32>
      %cst_130 = arith.constant dense<0.000000e+00> : vector<128xf32>
      %351 = vector.multi_reduction <add>, %350, %cst_130 [0] : vector<8x128xf32> to vector<128xf32>
      %352 = vector.shape_cast %351 : vector<128xf32> to vector<1x128xf32>
      %353 = arith.mulf %190, %4 : vector<1x128xf32>
      %354 = arith.addf %352, %353 : vector<1x128xf32>
      %355 = arith.index_cast %186 : i32 to index
      %c0_131 = arith.constant 0 : index
      %356 = vector.load %arg13[%355, %c0_131] : memref<64x128xf32, #tpu.memory_space<vmem>>, vector<1x128xf32>
      tpu.vector_store %arg13[%355, %c0_131], %354 {strides = array<i32>} : memref<64x128xf32, #tpu.memory_space<vmem>>, vector<1x128xf32>,
      %c2_i32 = arith.constant 2 : i32
      %357 = arith.addi %14, %c2_i32 : i32
      %358 = arith.index_cast %357 : i32 to index
      %c0_132 = arith.constant 0 : index
      %359 = vector.load %arg3[%358, %c0_132] : memref<64x128xf32, #tpu.memory_space<vmem>>, vector<1x128xf32>
      %360 = arith.index_cast %357 : i32 to index
      %c0_133 = arith.constant 0 : index
      %361 = vector.load %arg2[%360, %c0_133] : memref<64x128xf32, #tpu.memory_space<vmem>>, vector<1x128xf32>
      %362 = vector.broadcast %359 : vector<1x128xf32> to vector<8x128xf32>
      %363 = arith.mulf %362, %3 : vector<8x128xf32>
      %364 = math.exp %363 : vector<8x128xf32>
      %365 = arith.mulf %359, %361 : vector<1x128xf32>
      %366 = arith.index_cast %357 : i32 to index
      %c0_134 = arith.constant 0 : index
      %c0_135 = arith.constant 0 : index
      %367 = vector.load %arg6[%366, %c0_134, %c0_135] : memref<64x8x128xf32, #tpu.memory_space<vmem>>, vector<1x8x128xf32>
      %368 = vector.shape_cast %367 : vector<1x8x128xf32> to vector<8x128xf32>
      %369 = vector.broadcast %365 : vector<1x128xf32> to vector<8x128xf32>
      %370 = arith.mulf %369, %368 : vector<8x128xf32>
      %371 = arith.mulf %370, %370 : vector<8x128xf32>
      %cst_136 = arith.constant dense<0.000000e+00> : vector<128xf32>
      %372 = vector.multi_reduction <add>, %371, %cst_136 [0] : vector<8x128xf32> to vector<128xf32>
      %373 = vector.shape_cast %372 : vector<128xf32> to vector<1x128xf32>
      %374 = math.sqrt %373 : vector<1x128xf32>
      %cst_137 = arith.constant 9.99999997E-7 : f32
      %375 = vector.broadcast %cst_137 : f32 to vector<1x128xf32>
      %376 = arith.addf %374, %375 : vector<1x128xf32>
      %377 = tpu.reciprocal %376 {approx = true} : vector<1x128xf32> -> vector<1x128xf32>
      %378 = arith.mulf %370, %346 : vector<8x128xf32>
      %cst_138 = arith.constant dense<0.000000e+00> : vector<128xf32>
      %379 = vector.multi_reduction <add>, %378, %cst_138 [0] : vector<8x128xf32> to vector<128xf32>
      %380 = vector.shape_cast %379 : vector<128xf32> to vector<1x128xf32>
      %381 = arith.mulf %346, %346 : vector<8x128xf32>
      %cst_139 = arith.constant dense<0.000000e+00> : vector<128xf32>
      %382 = vector.multi_reduction <add>, %381, %cst_139 [0] : vector<8x128xf32> to vector<128xf32>
      %383 = vector.shape_cast %382 : vector<128xf32> to vector<1x128xf32>
      %384 = math.sqrt %383 : vector<1x128xf32>
      %cst_140 = arith.constant 9.99999997E-7 : f32
      %385 = vector.broadcast %cst_140 : f32 to vector<1x128xf32>
      %386 = arith.addf %384, %385 : vector<1x128xf32>
      %387 = arith.mulf %380, %377 : vector<1x128xf32>
      %388 = tpu.reciprocal %386 {approx = true} : vector<1x128xf32> -> vector<1x128xf32>
      %389 = arith.mulf %387, %388 : vector<1x128xf32>
      %390 = vector.broadcast %389 : vector<1x128xf32> to vector<16x128xf32>
      %391 = arith.mulf %390, %5 : vector<16x128xf32>
      %392 = arith.addf %391, %6 : vector<16x128xf32>
      %cst_141 = arith.constant 0.000000e+00 : f32
      %393 = vector.broadcast %cst_141 : f32 to vector<16x128xf32>
      %394 = arith.maximumf %392, %393 : vector<16x128xf32>
      %395 = vector.extract_strided_slice %394 {offsets = [0, 0], sizes = [1, 128], strides = [1, 1]} : vector<16x128xf32> to vector<1x128xf32>
      %396 = vector.shape_cast %395 : vector<1x128xf32> to vector<1x128xf32>
      %397 = vector.broadcast %396 : vector<1x128xf32> to vector<8x128xf32>
      %c0_142 = arith.constant 0 : index
      %c0_143 = arith.constant 0 : index
      %c0_144 = arith.constant 0 : index
      %398 = vector.load %arg10[%c0_142, %c0_143, %c0_144] : memref<16x8x128xf32, #tpu.memory_space<vmem>>, vector<1x8x128xf32>
      %399 = vector.shape_cast %398 : vector<1x8x128xf32> to vector<8x128xf32>
      %400 = arith.mulf %397, %399 : vector<8x128xf32>
      %401 = arith.addf %7, %400 : vector<8x128xf32>
      %402 = vector.extract_strided_slice %394 {offsets = [1, 0], sizes = [1, 128], strides = [1, 1]} : vector<16x128xf32> to vector<1x128xf32>
      %403 = vector.shape_cast %402 : vector<1x128xf32> to vector<1x128xf32>
      %404 = vector.broadcast %403 : vector<1x128xf32> to vector<8x128xf32>
      %c1_145 = arith.constant 1 : index
      %c0_146 = arith.constant 0 : index
      %c0_147 = arith.constant 0 : index
      %405 = vector.load %arg10[%c1_145, %c0_146, %c0_147] : memref<16x8x128xf32, #tpu.memory_space<vmem>>, vector<1x8x128xf32>
      %406 = vector.shape_cast %405 : vector<1x8x128xf32> to vector<8x128xf32>
      %407 = arith.mulf %404, %406 : vector<8x128xf32>
      %408 = vector.extract_strided_slice %394 {offsets = [2, 0], sizes = [1, 128], strides = [1, 1]} : vector<16x128xf32> to vector<1x128xf32>
      %409 = vector.shape_cast %408 : vector<1x128xf32> to vector<1x128xf32>
      %410 = vector.broadcast %409 : vector<1x128xf32> to vector<8x128xf32>
      %c2_148 = arith.constant 2 : index
      %c0_149 = arith.constant 0 : index
      %c0_150 = arith.constant 0 : index
      %411 = vector.load %arg10[%c2_148, %c0_149, %c0_150] : memref<16x8x128xf32, #tpu.memory_space<vmem>>, vector<1x8x128xf32>
      %412 = vector.shape_cast %411 : vector<1x8x128xf32> to vector<8x128xf32>
      %413 = arith.mulf %410, %412 : vector<8x128xf32>
      %414 = vector.extract_strided_slice %394 {offsets = [3, 0], sizes = [1, 128], strides = [1, 1]} : vector<16x128xf32> to vector<1x128xf32>
      %415 = vector.shape_cast %414 : vector<1x128xf32> to vector<1x128xf32>
      %416 = vector.broadcast %415 : vector<1x128xf32> to vector<8x128xf32>
      %c3_151 = arith.constant 3 : index
      %c0_152 = arith.constant 0 : index
      %c0_153 = arith.constant 0 : index
      %417 = vector.load %arg10[%c3_151, %c0_152, %c0_153] : memref<16x8x128xf32, #tpu.memory_space<vmem>>, vector<1x8x128xf32>
      %418 = vector.shape_cast %417 : vector<1x8x128xf32> to vector<8x128xf32>
      %419 = arith.mulf %416, %418 : vector<8x128xf32>
      %420 = vector.extract_strided_slice %394 {offsets = [4, 0], sizes = [1, 128], strides = [1, 1]} : vector<16x128xf32> to vector<1x128xf32>
      %421 = vector.shape_cast %420 : vector<1x128xf32> to vector<1x128xf32>
      %422 = vector.broadcast %421 : vector<1x128xf32> to vector<8x128xf32>
      %c4_154 = arith.constant 4 : index
      %c0_155 = arith.constant 0 : index
      %c0_156 = arith.constant 0 : index
      %423 = vector.load %arg10[%c4_154, %c0_155, %c0_156] : memref<16x8x128xf32, #tpu.memory_space<vmem>>, vector<1x8x128xf32>
      %424 = vector.shape_cast %423 : vector<1x8x128xf32> to vector<8x128xf32>
      %425 = arith.mulf %422, %424 : vector<8x128xf32>
      %426 = arith.addf %401, %425 : vector<8x128xf32>
      %427 = vector.extract_strided_slice %394 {offsets = [5, 0], sizes = [1, 128], strides = [1, 1]} : vector<16x128xf32> to vector<1x128xf32>
      %428 = vector.shape_cast %427 : vector<1x128xf32> to vector<1x128xf32>
      %429 = vector.broadcast %428 : vector<1x128xf32> to vector<8x128xf32>
      %c5_157 = arith.constant 5 : index
      %c0_158 = arith.constant 0 : index
      %c0_159 = arith.constant 0 : index
      %430 = vector.load %arg10[%c5_157, %c0_158, %c0_159] : memref<16x8x128xf32, #tpu.memory_space<vmem>>, vector<1x8x128xf32>
      %431 = vector.shape_cast %430 : vector<1x8x128xf32> to vector<8x128xf32>
      %432 = arith.mulf %429, %431 : vector<8x128xf32>
      %433 = arith.addf %407, %432 : vector<8x128xf32>
      %434 = vector.extract_strided_slice %394 {offsets = [6, 0], sizes = [1, 128], strides = [1, 1]} : vector<16x128xf32> to vector<1x128xf32>
      %435 = vector.shape_cast %434 : vector<1x128xf32> to vector<1x128xf32>
      %436 = vector.broadcast %435 : vector<1x128xf32> to vector<8x128xf32>
      %c6_160 = arith.constant 6 : index
      %c0_161 = arith.constant 0 : index
      %c0_162 = arith.constant 0 : index
      %437 = vector.load %arg10[%c6_160, %c0_161, %c0_162] : memref<16x8x128xf32, #tpu.memory_space<vmem>>, vector<1x8x128xf32>
      %438 = vector.shape_cast %437 : vector<1x8x128xf32> to vector<8x128xf32>
      %439 = arith.mulf %436, %438 : vector<8x128xf32>
      %440 = arith.addf %413, %439 : vector<8x128xf32>
      %441 = vector.extract_strided_slice %394 {offsets = [7, 0], sizes = [1, 128], strides = [1, 1]} : vector<16x128xf32> to vector<1x128xf32>
      %442 = vector.shape_cast %441 : vector<1x128xf32> to vector<1x128xf32>
      %443 = vector.broadcast %442 : vector<1x128xf32> to vector<8x128xf32>
      %c7_163 = arith.constant 7 : index
      %c0_164 = arith.constant 0 : index
      %c0_165 = arith.constant 0 : index
      %444 = vector.load %arg10[%c7_163, %c0_164, %c0_165] : memref<16x8x128xf32, #tpu.memory_space<vmem>>, vector<1x8x128xf32>
      %445 = vector.shape_cast %444 : vector<1x8x128xf32> to vector<8x128xf32>
      %446 = arith.mulf %443, %445 : vector<8x128xf32>
      %447 = arith.addf %419, %446 : vector<8x128xf32>
      %448 = vector.extract_strided_slice %394 {offsets = [8, 0], sizes = [1, 128], strides = [1, 1]} : vector<16x128xf32> to vector<1x128xf32>
      %449 = vector.shape_cast %448 : vector<1x128xf32> to vector<1x128xf32>
      %450 = vector.broadcast %449 : vector<1x128xf32> to vector<8x128xf32>
      %c8_166 = arith.constant 8 : index
      %c0_167 = arith.constant 0 : index
      %c0_168 = arith.constant 0 : index
      %451 = vector.load %arg10[%c8_166, %c0_167, %c0_168] : memref<16x8x128xf32, #tpu.memory_space<vmem>>, vector<1x8x128xf32>
      %452 = vector.shape_cast %451 : vector<1x8x128xf32> to vector<8x128xf32>
      %453 = arith.mulf %450, %452 : vector<8x128xf32>
      %454 = arith.addf %426, %453 : vector<8x128xf32>
      %455 = vector.extract_strided_slice %394 {offsets = [9, 0], sizes = [1, 128], strides = [1, 1]} : vector<16x128xf32> to vector<1x128xf32>
      %456 = vector.shape_cast %455 : vector<1x128xf32> to vector<1x128xf32>
      %457 = vector.broadcast %456 : vector<1x128xf32> to vector<8x128xf32>
      %c9_169 = arith.constant 9 : index
      %c0_170 = arith.constant 0 : index
      %c0_171 = arith.constant 0 : index
      %458 = vector.load %arg10[%c9_169, %c0_170, %c0_171] : memref<16x8x128xf32, #tpu.memory_space<vmem>>, vector<1x8x128xf32>
      %459 = vector.shape_cast %458 : vector<1x8x128xf32> to vector<8x128xf32>
      %460 = arith.mulf %457, %459 : vector<8x128xf32>
      %461 = arith.addf %433, %460 : vector<8x128xf32>
      %462 = vector.extract_strided_slice %394 {offsets = [10, 0], sizes = [1, 128], strides = [1, 1]} : vector<16x128xf32> to vector<1x128xf32>
      %463 = vector.shape_cast %462 : vector<1x128xf32> to vector<1x128xf32>
      %464 = vector.broadcast %463 : vector<1x128xf32> to vector<8x128xf32>
      %c10_172 = arith.constant 10 : index
      %c0_173 = arith.constant 0 : index
      %c0_174 = arith.constant 0 : index
      %465 = vector.load %arg10[%c10_172, %c0_173, %c0_174] : memref<16x8x128xf32, #tpu.memory_space<vmem>>, vector<1x8x128xf32>
      %466 = vector.shape_cast %465 : vector<1x8x128xf32> to vector<8x128xf32>
      %467 = arith.mulf %464, %466 : vector<8x128xf32>
      %468 = arith.addf %440, %467 : vector<8x128xf32>
      %469 = vector.extract_strided_slice %394 {offsets = [11, 0], sizes = [1, 128], strides = [1, 1]} : vector<16x128xf32> to vector<1x128xf32>
      %470 = vector.shape_cast %469 : vector<1x128xf32> to vector<1x128xf32>
      %471 = vector.broadcast %470 : vector<1x128xf32> to vector<8x128xf32>
      %c11_175 = arith.constant 11 : index
      %c0_176 = arith.constant 0 : index
      %c0_177 = arith.constant 0 : index
      %472 = vector.load %arg10[%c11_175, %c0_176, %c0_177] : memref<16x8x128xf32, #tpu.memory_space<vmem>>, vector<1x8x128xf32>
      %473 = vector.shape_cast %472 : vector<1x8x128xf32> to vector<8x128xf32>
      %474 = arith.mulf %471, %473 : vector<8x128xf32>
      %475 = arith.addf %447, %474 : vector<8x128xf32>
      %476 = vector.extract_strided_slice %394 {offsets = [12, 0], sizes = [1, 128], strides = [1, 1]} : vector<16x128xf32> to vector<1x128xf32>
      %477 = vector.shape_cast %476 : vector<1x128xf32> to vector<1x128xf32>
      %478 = vector.broadcast %477 : vector<1x128xf32> to vector<8x128xf32>
      %c12_178 = arith.constant 12 : index
      %c0_179 = arith.constant 0 : index
      %c0_180 = arith.constant 0 : index
      %479 = vector.load %arg10[%c12_178, %c0_179, %c0_180] : memref<16x8x128xf32, #tpu.memory_space<vmem>>, vector<1x8x128xf32>
      %480 = vector.shape_cast %479 : vector<1x8x128xf32> to vector<8x128xf32>
      %481 = arith.mulf %478, %480 : vector<8x128xf32>
      %482 = arith.addf %454, %481 : vector<8x128xf32>
      %483 = vector.extract_strided_slice %394 {offsets = [13, 0], sizes = [1, 128], strides = [1, 1]} : vector<16x128xf32> to vector<1x128xf32>
      %484 = vector.shape_cast %483 : vector<1x128xf32> to vector<1x128xf32>
      %485 = vector.broadcast %484 : vector<1x128xf32> to vector<8x128xf32>
      %c13_181 = arith.constant 13 : index
      %c0_182 = arith.constant 0 : index
      %c0_183 = arith.constant 0 : index
      %486 = vector.load %arg10[%c13_181, %c0_182, %c0_183] : memref<16x8x128xf32, #tpu.memory_space<vmem>>, vector<1x8x128xf32>
      %487 = vector.shape_cast %486 : vector<1x8x128xf32> to vector<8x128xf32>
      %488 = arith.mulf %485, %487 : vector<8x128xf32>
      %489 = arith.addf %461, %488 : vector<8x128xf32>
      %490 = vector.extract_strided_slice %394 {offsets = [14, 0], sizes = [1, 128], strides = [1, 1]} : vector<16x128xf32> to vector<1x128xf32>
      %491 = vector.shape_cast %490 : vector<1x128xf32> to vector<1x128xf32>
      %492 = vector.broadcast %491 : vector<1x128xf32> to vector<8x128xf32>
      %c14_184 = arith.constant 14 : index
      %c0_185 = arith.constant 0 : index
      %c0_186 = arith.constant 0 : index
      %493 = vector.load %arg10[%c14_184, %c0_185, %c0_186] : memref<16x8x128xf32, #tpu.memory_space<vmem>>, vector<1x8x128xf32>
      %494 = vector.shape_cast %493 : vector<1x8x128xf32> to vector<8x128xf32>
      %495 = arith.mulf %492, %494 : vector<8x128xf32>
      %496 = arith.addf %468, %495 : vector<8x128xf32>
      %497 = vector.extract_strided_slice %394 {offsets = [15, 0], sizes = [1, 128], strides = [1, 1]} : vector<16x128xf32> to vector<1x128xf32>
      %498 = vector.shape_cast %497 : vector<1x128xf32> to vector<1x128xf32>
      %499 = vector.broadcast %498 : vector<1x128xf32> to vector<8x128xf32>
      %c15_187 = arith.constant 15 : index
      %c0_188 = arith.constant 0 : index
      %c0_189 = arith.constant 0 : index
      %500 = vector.load %arg10[%c15_187, %c0_188, %c0_189] : memref<16x8x128xf32, #tpu.memory_space<vmem>>, vector<1x8x128xf32>
      %501 = vector.shape_cast %500 : vector<1x8x128xf32> to vector<8x128xf32>
      %502 = arith.mulf %499, %501 : vector<8x128xf32>
      %503 = arith.addf %475, %502 : vector<8x128xf32>
      %504 = arith.addf %482, %489 : vector<8x128xf32>
      %505 = arith.addf %496, %503 : vector<8x128xf32>
      %506 = arith.addf %504, %505 : vector<8x128xf32>
      %507 = arith.negf %506 : vector<8x128xf32>
      %508 = math.exp %507 : vector<8x128xf32>
      %cst_190 = arith.constant 1.000000e+00 : f32
      %509 = vector.broadcast %cst_190 : f32 to vector<8x128xf32>
      %510 = arith.addf %509, %508 : vector<8x128xf32>
      %511 = arith.divf %509, %510 : vector<8x128xf32>
      %512 = arith.mulf %364, %346 : vector<8x128xf32>
      %513 = arith.mulf %8, %511 : vector<8x128xf32>
      %cst_191 = arith.constant 1.000000e+00 : f32
      %514 = vector.broadcast %cst_191 : f32 to vector<8x128xf32>
      %515 = arith.addf %513, %514 : vector<8x128xf32>
      %516 = arith.mulf %515, %370 : vector<8x128xf32>
      %517 = arith.addf %512, %516 : vector<8x128xf32>
      %518 = arith.index_cast %357 : i32 to index
      %c0_192 = arith.constant 0 : index
      %c0_193 = arith.constant 0 : index
      %519 = vector.load %arg7[%518, %c0_192, %c0_193] : memref<64x8x128xf32, #tpu.memory_space<vmem>>, vector<1x8x128xf32>
      %520 = vector.shape_cast %519 : vector<1x8x128xf32> to vector<8x128xf32>
      %521 = arith.mulf %517, %520 : vector<8x128xf32>
      %cst_194 = arith.constant dense<0.000000e+00> : vector<128xf32>
      %522 = vector.multi_reduction <add>, %521, %cst_194 [0] : vector<8x128xf32> to vector<128xf32>
      %523 = vector.shape_cast %522 : vector<128xf32> to vector<1x128xf32>
      %524 = arith.mulf %361, %4 : vector<1x128xf32>
      %525 = arith.addf %523, %524 : vector<1x128xf32>
      %526 = arith.index_cast %357 : i32 to index
      %c0_195 = arith.constant 0 : index
      %527 = vector.load %arg13[%526, %c0_195] : memref<64x128xf32, #tpu.memory_space<vmem>>, vector<1x128xf32>
      tpu.vector_store %arg13[%526, %c0_195], %525 {strides = array<i32>} : memref<64x128xf32, #tpu.memory_space<vmem>>, vector<1x128xf32>,
      %c3_i32 = arith.constant 3 : i32
      %528 = arith.addi %14, %c3_i32 : i32
      %529 = arith.index_cast %528 : i32 to index
      %c0_196 = arith.constant 0 : index
      %530 = vector.load %arg3[%529, %c0_196] : memref<64x128xf32, #tpu.memory_space<vmem>>, vector<1x128xf32>
      %531 = arith.index_cast %528 : i32 to index
      %c0_197 = arith.constant 0 : index
      %532 = vector.load %arg2[%531, %c0_197] : memref<64x128xf32, #tpu.memory_space<vmem>>, vector<1x128xf32>
      %533 = vector.broadcast %530 : vector<1x128xf32> to vector<8x128xf32>
      %534 = arith.mulf %533, %3 : vector<8x128xf32>
      %535 = math.exp %534 : vector<8x128xf32>
      %536 = arith.mulf %530, %532 : vector<1x128xf32>
      %537 = arith.index_cast %528 : i32 to index
      %c0_198 = arith.constant 0 : index
      %c0_199 = arith.constant 0 : index
      %538 = vector.load %arg6[%537, %c0_198, %c0_199] : memref<64x8x128xf32, #tpu.memory_space<vmem>>, vector<1x8x128xf32>
      %539 = vector.shape_cast %538 : vector<1x8x128xf32> to vector<8x128xf32>
      %540 = vector.broadcast %536 : vector<1x128xf32> to vector<8x128xf32>
      %541 = arith.mulf %540, %539 : vector<8x128xf32>
      %542 = arith.mulf %541, %541 : vector<8x128xf32>
      %cst_200 = arith.constant dense<0.000000e+00> : vector<128xf32>
      %543 = vector.multi_reduction <add>, %542, %cst_200 [0] : vector<8x128xf32> to vector<128xf32>
      %544 = vector.shape_cast %543 : vector<128xf32> to vector<1x128xf32>
      %545 = math.sqrt %544 : vector<1x128xf32>
      %cst_201 = arith.constant 9.99999997E-7 : f32
      %546 = vector.broadcast %cst_201 : f32 to vector<1x128xf32>
      %547 = arith.addf %545, %546 : vector<1x128xf32>
      %548 = tpu.reciprocal %547 {approx = true} : vector<1x128xf32> -> vector<1x128xf32>
      %549 = arith.mulf %541, %517 : vector<8x128xf32>
      %cst_202 = arith.constant dense<0.000000e+00> : vector<128xf32>
      %550 = vector.multi_reduction <add>, %549, %cst_202 [0] : vector<8x128xf32> to vector<128xf32>
      %551 = vector.shape_cast %550 : vector<128xf32> to vector<1x128xf32>
      %552 = arith.mulf %517, %517 : vector<8x128xf32>
      %cst_203 = arith.constant dense<0.000000e+00> : vector<128xf32>
      %553 = vector.multi_reduction <add>, %552, %cst_203 [0] : vector<8x128xf32> to vector<128xf32>
      %554 = vector.shape_cast %553 : vector<128xf32> to vector<1x128xf32>
      %555 = math.sqrt %554 : vector<1x128xf32>
      %cst_204 = arith.constant 9.99999997E-7 : f32
      %556 = vector.broadcast %cst_204 : f32 to vector<1x128xf32>
      %557 = arith.addf %555, %556 : vector<1x128xf32>
      %558 = arith.mulf %551, %548 : vector<1x128xf32>
      %559 = tpu.reciprocal %557 {approx = true} : vector<1x128xf32> -> vector<1x128xf32>
      %560 = arith.mulf %558, %559 : vector<1x128xf32>
      %561 = vector.broadcast %560 : vector<1x128xf32> to vector<16x128xf32>
      %562 = arith.mulf %561, %5 : vector<16x128xf32>
      %563 = arith.addf %562, %6 : vector<16x128xf32>
      %cst_205 = arith.constant 0.000000e+00 : f32
      %564 = vector.broadcast %cst_205 : f32 to vector<16x128xf32>
      %565 = arith.maximumf %563, %564 : vector<16x128xf32>
      %566 = vector.extract_strided_slice %565 {offsets = [0, 0], sizes = [1, 128], strides = [1, 1]} : vector<16x128xf32> to vector<1x128xf32>
      %567 = vector.shape_cast %566 : vector<1x128xf32> to vector<1x128xf32>
      %568 = vector.broadcast %567 : vector<1x128xf32> to vector<8x128xf32>
      %c0_206 = arith.constant 0 : index
      %c0_207 = arith.constant 0 : index
      %c0_208 = arith.constant 0 : index
      %569 = vector.load %arg10[%c0_206, %c0_207, %c0_208] : memref<16x8x128xf32, #tpu.memory_space<vmem>>, vector<1x8x128xf32>
      %570 = vector.shape_cast %569 : vector<1x8x128xf32> to vector<8x128xf32>
      %571 = arith.mulf %568, %570 : vector<8x128xf32>
      %572 = arith.addf %7, %571 : vector<8x128xf32>
      %573 = vector.extract_strided_slice %565 {offsets = [1, 0], sizes = [1, 128], strides = [1, 1]} : vector<16x128xf32> to vector<1x128xf32>
      %574 = vector.shape_cast %573 : vector<1x128xf32> to vector<1x128xf32>
      %575 = vector.broadcast %574 : vector<1x128xf32> to vector<8x128xf32>
      %c1_209 = arith.constant 1 : index
      %c0_210 = arith.constant 0 : index
      %c0_211 = arith.constant 0 : index
      %576 = vector.load %arg10[%c1_209, %c0_210, %c0_211] : memref<16x8x128xf32, #tpu.memory_space<vmem>>, vector<1x8x128xf32>
      %577 = vector.shape_cast %576 : vector<1x8x128xf32> to vector<8x128xf32>
      %578 = arith.mulf %575, %577 : vector<8x128xf32>
      %579 = vector.extract_strided_slice %565 {offsets = [2, 0], sizes = [1, 128], strides = [1, 1]} : vector<16x128xf32> to vector<1x128xf32>
      %580 = vector.shape_cast %579 : vector<1x128xf32> to vector<1x128xf32>
      %581 = vector.broadcast %580 : vector<1x128xf32> to vector<8x128xf32>
      %c2_212 = arith.constant 2 : index
      %c0_213 = arith.constant 0 : index
      %c0_214 = arith.constant 0 : index
      %582 = vector.load %arg10[%c2_212, %c0_213, %c0_214] : memref<16x8x128xf32, #tpu.memory_space<vmem>>, vector<1x8x128xf32>
      %583 = vector.shape_cast %582 : vector<1x8x128xf32> to vector<8x128xf32>
      %584 = arith.mulf %581, %583 : vector<8x128xf32>
      %585 = vector.extract_strided_slice %565 {offsets = [3, 0], sizes = [1, 128], strides = [1, 1]} : vector<16x128xf32> to vector<1x128xf32>
      %586 = vector.shape_cast %585 : vector<1x128xf32> to vector<1x128xf32>
      %587 = vector.broadcast %586 : vector<1x128xf32> to vector<8x128xf32>
      %c3_215 = arith.constant 3 : index
      %c0_216 = arith.constant 0 : index
      %c0_217 = arith.constant 0 : index
      %588 = vector.load %arg10[%c3_215, %c0_216, %c0_217] : memref<16x8x128xf32, #tpu.memory_space<vmem>>, vector<1x8x128xf32>
      %589 = vector.shape_cast %588 : vector<1x8x128xf32> to vector<8x128xf32>
      %590 = arith.mulf %587, %589 : vector<8x128xf32>
      %591 = vector.extract_strided_slice %565 {offsets = [4, 0], sizes = [1, 128], strides = [1, 1]} : vector<16x128xf32> to vector<1x128xf32>
      %592 = vector.shape_cast %591 : vector<1x128xf32> to vector<1x128xf32>
      %593 = vector.broadcast %592 : vector<1x128xf32> to vector<8x128xf32>
      %c4_218 = arith.constant 4 : index
      %c0_219 = arith.constant 0 : index
      %c0_220 = arith.constant 0 : index
      %594 = vector.load %arg10[%c4_218, %c0_219, %c0_220] : memref<16x8x128xf32, #tpu.memory_space<vmem>>, vector<1x8x128xf32>
      %595 = vector.shape_cast %594 : vector<1x8x128xf32> to vector<8x128xf32>
      %596 = arith.mulf %593, %595 : vector<8x128xf32>
      %597 = arith.addf %572, %596 : vector<8x128xf32>
      %598 = vector.extract_strided_slice %565 {offsets = [5, 0], sizes = [1, 128], strides = [1, 1]} : vector<16x128xf32> to vector<1x128xf32>
      %599 = vector.shape_cast %598 : vector<1x128xf32> to vector<1x128xf32>
      %600 = vector.broadcast %599 : vector<1x128xf32> to vector<8x128xf32>
      %c5_221 = arith.constant 5 : index
      %c0_222 = arith.constant 0 : index
      %c0_223 = arith.constant 0 : index
      %601 = vector.load %arg10[%c5_221, %c0_222, %c0_223] : memref<16x8x128xf32, #tpu.memory_space<vmem>>, vector<1x8x128xf32>
      %602 = vector.shape_cast %601 : vector<1x8x128xf32> to vector<8x128xf32>
      %603 = arith.mulf %600, %602 : vector<8x128xf32>
      %604 = arith.addf %578, %603 : vector<8x128xf32>
      %605 = vector.extract_strided_slice %565 {offsets = [6, 0], sizes = [1, 128], strides = [1, 1]} : vector<16x128xf32> to vector<1x128xf32>
      %606 = vector.shape_cast %605 : vector<1x128xf32> to vector<1x128xf32>
      %607 = vector.broadcast %606 : vector<1x128xf32> to vector<8x128xf32>
      %c6_224 = arith.constant 6 : index
      %c0_225 = arith.constant 0 : index
      %c0_226 = arith.constant 0 : index
      %608 = vector.load %arg10[%c6_224, %c0_225, %c0_226] : memref<16x8x128xf32, #tpu.memory_space<vmem>>, vector<1x8x128xf32>
      %609 = vector.shape_cast %608 : vector<1x8x128xf32> to vector<8x128xf32>
      %610 = arith.mulf %607, %609 : vector<8x128xf32>
      %611 = arith.addf %584, %610 : vector<8x128xf32>
      %612 = vector.extract_strided_slice %565 {offsets = [7, 0], sizes = [1, 128], strides = [1, 1]} : vector<16x128xf32> to vector<1x128xf32>
      %613 = vector.shape_cast %612 : vector<1x128xf32> to vector<1x128xf32>
      %614 = vector.broadcast %613 : vector<1x128xf32> to vector<8x128xf32>
      %c7_227 = arith.constant 7 : index
      %c0_228 = arith.constant 0 : index
      %c0_229 = arith.constant 0 : index
      %615 = vector.load %arg10[%c7_227, %c0_228, %c0_229] : memref<16x8x128xf32, #tpu.memory_space<vmem>>, vector<1x8x128xf32>
      %616 = vector.shape_cast %615 : vector<1x8x128xf32> to vector<8x128xf32>
      %617 = arith.mulf %614, %616 : vector<8x128xf32>
      %618 = arith.addf %590, %617 : vector<8x128xf32>
      %619 = vector.extract_strided_slice %565 {offsets = [8, 0], sizes = [1, 128], strides = [1, 1]} : vector<16x128xf32> to vector<1x128xf32>
      %620 = vector.shape_cast %619 : vector<1x128xf32> to vector<1x128xf32>
      %621 = vector.broadcast %620 : vector<1x128xf32> to vector<8x128xf32>
      %c8_230 = arith.constant 8 : index
      %c0_231 = arith.constant 0 : index
      %c0_232 = arith.constant 0 : index
      %622 = vector.load %arg10[%c8_230, %c0_231, %c0_232] : memref<16x8x128xf32, #tpu.memory_space<vmem>>, vector<1x8x128xf32>
      %623 = vector.shape_cast %622 : vector<1x8x128xf32> to vector<8x128xf32>
      %624 = arith.mulf %621, %623 : vector<8x128xf32>
      %625 = arith.addf %597, %624 : vector<8x128xf32>
      %626 = vector.extract_strided_slice %565 {offsets = [9, 0], sizes = [1, 128], strides = [1, 1]} : vector<16x128xf32> to vector<1x128xf32>
      %627 = vector.shape_cast %626 : vector<1x128xf32> to vector<1x128xf32>
      %628 = vector.broadcast %627 : vector<1x128xf32> to vector<8x128xf32>
      %c9_233 = arith.constant 9 : index
      %c0_234 = arith.constant 0 : index
      %c0_235 = arith.constant 0 : index
      %629 = vector.load %arg10[%c9_233, %c0_234, %c0_235] : memref<16x8x128xf32, #tpu.memory_space<vmem>>, vector<1x8x128xf32>
      %630 = vector.shape_cast %629 : vector<1x8x128xf32> to vector<8x128xf32>
      %631 = arith.mulf %628, %630 : vector<8x128xf32>
      %632 = arith.addf %604, %631 : vector<8x128xf32>
      %633 = vector.extract_strided_slice %565 {offsets = [10, 0], sizes = [1, 128], strides = [1, 1]} : vector<16x128xf32> to vector<1x128xf32>
      %634 = vector.shape_cast %633 : vector<1x128xf32> to vector<1x128xf32>
      %635 = vector.broadcast %634 : vector<1x128xf32> to vector<8x128xf32>
      %c10_236 = arith.constant 10 : index
      %c0_237 = arith.constant 0 : index
      %c0_238 = arith.constant 0 : index
      %636 = vector.load %arg10[%c10_236, %c0_237, %c0_238] : memref<16x8x128xf32, #tpu.memory_space<vmem>>, vector<1x8x128xf32>
      %637 = vector.shape_cast %636 : vector<1x8x128xf32> to vector<8x128xf32>
      %638 = arith.mulf %635, %637 : vector<8x128xf32>
      %639 = arith.addf %611, %638 : vector<8x128xf32>
      %640 = vector.extract_strided_slice %565 {offsets = [11, 0], sizes = [1, 128], strides = [1, 1]} : vector<16x128xf32> to vector<1x128xf32>
      %641 = vector.shape_cast %640 : vector<1x128xf32> to vector<1x128xf32>
      %642 = vector.broadcast %641 : vector<1x128xf32> to vector<8x128xf32>
      %c11_239 = arith.constant 11 : index
      %c0_240 = arith.constant 0 : index
      %c0_241 = arith.constant 0 : index
      %643 = vector.load %arg10[%c11_239, %c0_240, %c0_241] : memref<16x8x128xf32, #tpu.memory_space<vmem>>, vector<1x8x128xf32>
      %644 = vector.shape_cast %643 : vector<1x8x128xf32> to vector<8x128xf32>
      %645 = arith.mulf %642, %644 : vector<8x128xf32>
      %646 = arith.addf %618, %645 : vector<8x128xf32>
      %647 = vector.extract_strided_slice %565 {offsets = [12, 0], sizes = [1, 128], strides = [1, 1]} : vector<16x128xf32> to vector<1x128xf32>
      %648 = vector.shape_cast %647 : vector<1x128xf32> to vector<1x128xf32>
      %649 = vector.broadcast %648 : vector<1x128xf32> to vector<8x128xf32>
      %c12_242 = arith.constant 12 : index
      %c0_243 = arith.constant 0 : index
      %c0_244 = arith.constant 0 : index
      %650 = vector.load %arg10[%c12_242, %c0_243, %c0_244] : memref<16x8x128xf32, #tpu.memory_space<vmem>>, vector<1x8x128xf32>
      %651 = vector.shape_cast %650 : vector<1x8x128xf32> to vector<8x128xf32>
      %652 = arith.mulf %649, %651 : vector<8x128xf32>
      %653 = arith.addf %625, %652 : vector<8x128xf32>
      %654 = vector.extract_strided_slice %565 {offsets = [13, 0], sizes = [1, 128], strides = [1, 1]} : vector<16x128xf32> to vector<1x128xf32>
      %655 = vector.shape_cast %654 : vector<1x128xf32> to vector<1x128xf32>
      %656 = vector.broadcast %655 : vector<1x128xf32> to vector<8x128xf32>
      %c13_245 = arith.constant 13 : index
      %c0_246 = arith.constant 0 : index
      %c0_247 = arith.constant 0 : index
      %657 = vector.load %arg10[%c13_245, %c0_246, %c0_247] : memref<16x8x128xf32, #tpu.memory_space<vmem>>, vector<1x8x128xf32>
      %658 = vector.shape_cast %657 : vector<1x8x128xf32> to vector<8x128xf32>
      %659 = arith.mulf %656, %658 : vector<8x128xf32>
      %660 = arith.addf %632, %659 : vector<8x128xf32>
      %661 = vector.extract_strided_slice %565 {offsets = [14, 0], sizes = [1, 128], strides = [1, 1]} : vector<16x128xf32> to vector<1x128xf32>
      %662 = vector.shape_cast %661 : vector<1x128xf32> to vector<1x128xf32>
      %663 = vector.broadcast %662 : vector<1x128xf32> to vector<8x128xf32>
      %c14_248 = arith.constant 14 : index
      %c0_249 = arith.constant 0 : index
      %c0_250 = arith.constant 0 : index
      %664 = vector.load %arg10[%c14_248, %c0_249, %c0_250] : memref<16x8x128xf32, #tpu.memory_space<vmem>>, vector<1x8x128xf32>
      %665 = vector.shape_cast %664 : vector<1x8x128xf32> to vector<8x128xf32>
      %666 = arith.mulf %663, %665 : vector<8x128xf32>
      %667 = arith.addf %639, %666 : vector<8x128xf32>
      %668 = vector.extract_strided_slice %565 {offsets = [15, 0], sizes = [1, 128], strides = [1, 1]} : vector<16x128xf32> to vector<1x128xf32>
      %669 = vector.shape_cast %668 : vector<1x128xf32> to vector<1x128xf32>
      %670 = vector.broadcast %669 : vector<1x128xf32> to vector<8x128xf32>
      %c15_251 = arith.constant 15 : index
      %c0_252 = arith.constant 0 : index
      %c0_253 = arith.constant 0 : index
      %671 = vector.load %arg10[%c15_251, %c0_252, %c0_253] : memref<16x8x128xf32, #tpu.memory_space<vmem>>, vector<1x8x128xf32>
      %672 = vector.shape_cast %671 : vector<1x8x128xf32> to vector<8x128xf32>
      %673 = arith.mulf %670, %672 : vector<8x128xf32>
      %674 = arith.addf %646, %673 : vector<8x128xf32>
      %675 = arith.addf %653, %660 : vector<8x128xf32>
      %676 = arith.addf %667, %674 : vector<8x128xf32>
      %677 = arith.addf %675, %676 : vector<8x128xf32>
      %678 = arith.negf %677 : vector<8x128xf32>
      %679 = math.exp %678 : vector<8x128xf32>
      %cst_254 = arith.constant 1.000000e+00 : f32
      %680 = vector.broadcast %cst_254 : f32 to vector<8x128xf32>
      %681 = arith.addf %680, %679 : vector<8x128xf32>
      %682 = arith.divf %680, %681 : vector<8x128xf32>
      %683 = arith.mulf %535, %517 : vector<8x128xf32>
      %684 = arith.mulf %8, %682 : vector<8x128xf32>
      %cst_255 = arith.constant 1.000000e+00 : f32
      %685 = vector.broadcast %cst_255 : f32 to vector<8x128xf32>
      %686 = arith.addf %684, %685 : vector<8x128xf32>
      %687 = arith.mulf %686, %541 : vector<8x128xf32>
      %688 = arith.addf %683, %687 : vector<8x128xf32>
      %689 = arith.index_cast %528 : i32 to index
      %c0_256 = arith.constant 0 : index
      %c0_257 = arith.constant 0 : index
      %690 = vector.load %arg7[%689, %c0_256, %c0_257] : memref<64x8x128xf32, #tpu.memory_space<vmem>>, vector<1x8x128xf32>
      %691 = vector.shape_cast %690 : vector<1x8x128xf32> to vector<8x128xf32>
      %692 = arith.mulf %688, %691 : vector<8x128xf32>
      %cst_258 = arith.constant dense<0.000000e+00> : vector<128xf32>
      %693 = vector.multi_reduction <add>, %692, %cst_258 [0] : vector<8x128xf32> to vector<128xf32>
      %694 = vector.shape_cast %693 : vector<128xf32> to vector<1x128xf32>
      %695 = arith.mulf %532, %4 : vector<1x128xf32>
      %696 = arith.addf %694, %695 : vector<1x128xf32>
      %697 = arith.index_cast %528 : i32 to index
      %c0_259 = arith.constant 0 : index
      %698 = vector.load %arg13[%697, %c0_259] : memref<64x128xf32, #tpu.memory_space<vmem>>, vector<1x128xf32>
      tpu.vector_store %arg13[%697, %c0_259], %696 {strides = array<i32>} : memref<64x128xf32, #tpu.memory_space<vmem>>, vector<1x128xf32>,
      scf.yield %688 : vector<8x128xf32>
    }
    %c16_i32_15 = arith.constant 16 : i32
    %c0_16 = arith.constant 0 : index
    %c0_17 = arith.constant 0 : index
    %12 = vector.load %arg14[%c0_16, %c0_17] : memref<8x128xf32, #tpu.memory_space<vmem>>, vector<8x128xf32>
    tpu.vector_store %arg14[%c0_16, %c0_17], %11 {strides = array<i32>} : memref<8x128xf32, #tpu.memory_space<vmem>>, vector<8x128xf32>,
    return
  }
  func.func @transform_0(%arg0: i32, %arg1: i32) -> (i32, i32) {
    %c0_i32 = arith.constant 0 : i32
    return %arg1, %arg0 : i32, i32
  }
  func.func @transform_1(%arg0: i32, %arg1: i32) -> (i32, i32) {
    %c0_i32 = arith.constant 0 : i32
    return %arg1, %arg0 : i32, i32
  }
  func.func @transform_2(%arg0: i32, %arg1: i32) -> (i32, i32) {
    %c0_i32 = arith.constant 0 : i32
    %c0_i32_0 = arith.constant 0 : i32
    return %c0_i32, %arg0 : i32, i32
  }
  func.func @transform_3(%arg0: i32, %arg1: i32) -> (i32, i32) {
    %c0_i32 = arith.constant 0 : i32
    %c0_i32_0 = arith.constant 0 : i32
    return %c0_i32, %arg0 : i32, i32
  }
  func.func @transform_4(%arg0: i32, %arg1: i32) -> (i32, i32, i32) {
    %c0_i32 = arith.constant 0 : i32
    %c0_i32_0 = arith.constant 0 : i32
    return %arg1, %c0_i32, %arg0 : i32, i32, i32
  }
  func.func @transform_5(%arg0: i32, %arg1: i32) -> (i32, i32, i32) {
    %c0_i32 = arith.constant 0 : i32
    %c0_i32_0 = arith.constant 0 : i32
    return %arg1, %c0_i32, %arg0 : i32, i32, i32
  }
  func.func @transform_6(%arg0: i32, %arg1: i32) -> (i32, i32) {
    %c0_i32 = arith.constant 0 : i32
    %c0_i32_0 = arith.constant 0 : i32
    %c0_i32_1 = arith.constant 0 : i32
    return %c0_i32, %c0_i32_0 : i32, i32
  }
  func.func @transform_7(%arg0: i32, %arg1: i32) -> (i32, i32) {
    %c0_i32 = arith.constant 0 : i32
    %c0_i32_0 = arith.constant 0 : i32
    %c0_i32_1 = arith.constant 0 : i32
    return %c0_i32, %c0_i32_0 : i32, i32
  }
  func.func @transform_8(%arg0: i32, %arg1: i32) -> (i32, i32, i32) {
    %c0_i32 = arith.constant 0 : i32
    %c0_i32_0 = arith.constant 0 : i32
    %c0_i32_1 = arith.constant 0 : i32
    %c0_i32_2 = arith.constant 0 : i32
    return %c0_i32, %c0_i32_0, %c0_i32_1 : i32, i32, i32
  }
  func.func @transform_9(%arg0: i32, %arg1: i32) -> (i32, i32) {
    %c0_i32 = arith.constant 0 : i32
    %c0_i32_0 = arith.constant 0 : i32
    %c0_i32_1 = arith.constant 0 : i32
    return %c0_i32, %c0_i32_0 : i32, i32
  }
  func.func @transform_10(%arg0: i32, %arg1: i32) -> (i32, i32) {
    %c0_i32 = arith.constant 0 : i32
    %c0_i32_0 = arith.constant 0 : i32
    %c0_i32_1 = arith.constant 0 : i32
    return %c0_i32, %c0_i32_0 : i32, i32
  }
  func.func @transform_11(%arg0: i32, %arg1: i32) -> (i32, i32) {
    %c0_i32 = arith.constant 0 : i32
    return %arg1, %arg0 : i32, i32
  }
}

</mosaic_0001>

<llo_original>
// kernel: split.1
$region0: #{split.1}
  #allocation0 [shape = 'u32[2048]{0}', space=vmem, size = 0x2000, scoped, tag = 'scoped memory for split.1']
  #allocation1 [shape = 'u32[2048]{0}', space=vmem, size = 0x2000, scoped, tag = 'scoped memory for split.1']
  #allocation2 [shape = 'u32[2048]{0}', space=vmem, size = 0x2000, scoped, tag = 'scoped memory for split.1']
  #allocation3 [shape = 'u32[2048]{0}', space=vmem, size = 0x2000, scoped, tag = 'scoped memory for split.1']
  #allocation4 [shape = 'u32[2048]{0}', space=vmem, size = 0x2000, scoped, tag = 'scoped memory for split.1']
  #allocation5 [shape = 's32[1]{0}', space=sflag, size = 0x4, scoped, tag = 'scoped memory for split.1']
  %s0 = inlined_call_operand.vmem [shape: f32[4,16,16,16], index: 0, kind: input, shape index: {}]
  %s1 = inlined_call_operand.vmem [shape: bf16[4,16,16,8], index: 1, kind: output, shape index: {}]
  %v2 = vld [vmem:[%s0] sm:$0xff]
  %v3 = vpack.c.bf16 0.0, %v2
  %4 = vst [vmem:[%s1] sm:$0xf] %v3
  %s5 = scalar_lea.vmem %s0, 256
  %v6 = vld [vmem:[%s5] sm:$0xff]
  %s7 = scalar_lea.vmem %s1, 64
  %v8 = vpack.c.bf16 0.0, %v6
  %9 = vst [vmem:[%s7] sm:$0xf] %v8
  %s10 = scalar_lea.vmem %s0, 512
  %v11 = vld [vmem:[%s10] sm:$0xff]
  %s12 = scalar_lea.vmem %s1, 128
  %v13 = vpack.c.bf16 0.0, %v11
  %14 = vst [vmem:[%s12] sm:$0xf] %v13
  %s15 = scalar_lea.vmem %s0, 768
  %v16 = vld [vmem:[%s15] sm:$0xff]
  %s17 = scalar_lea.vmem %s1, 192
  %v18 = vpack.c.bf16 0.0, %v16
  %19 = vst [vmem:[%s17] sm:$0xf] %v18
  %s20 = scalar_lea.vmem %s0, 16
  %v21 = vld [vmem:[%s20] sm:$0xff]
  %s22 = scalar_lea.vmem %s1, 4
  %v23 = vpack.c.bf16 0.0, %v21
  %24 = vst [vmem:[%s22] sm:$0xf] %v23
  %s25 = scalar_lea.vmem %s0, 272
  %v26 = vld [vmem:[%s25] sm:$0xff]
  %s27 = scalar_lea.vmem %s1, 68
  %v28 = vpack.c.bf16 0.0, %v26
  %29 = vst [vmem:[%s27] sm:$0xf] %v28
  %s30 = scalar_lea.vmem %s0, 528
  %v31 = vld [vmem:[%s30] sm:$0xff]
  %s32 = scalar_lea.vmem %s1, 132
  %v33 = vpack.c.bf16 0.0, %v31
  %34 = vst [vmem:[%s32] sm:$0xf] %v33
  %s35 = scalar_lea.vmem %s0, 784
  %v36 = vld [vmem:[%s35] sm:$0xff]
  %s37 = scalar_lea.vmem %s1, 196
  %v38 = vpack.c.bf16 0.0, %v36
  %39 = vst [vmem:[%s37] sm:$0xf] %v38
  %s40 = scalar_lea.vmem %s0, 32
  %v41 = vld [vmem:[%s40] sm:$0xff]
  %s42 = scalar_lea.vmem %s1, 8
  %v43 = vpack.c.bf16 0.0, %v41
  %44 = vst [vmem:[%s42] sm:$0xf] %v43
  %s45 = scalar_lea.vmem %s0, 288
  %v46 = vld [vmem:[%s45] sm:$0xff]
  %s47 = scalar_lea.vmem %s1, 72
  %v48 = vpack.c.bf16 0.0, %v46
  %49 = vst [vmem:[%s47] sm:$0xf] %v48
  %s50 = scalar_lea.vmem %s0, 544
  %v51 = vld [vmem:[%s50] sm:$0xff]
  %s52 = scalar_lea.vmem %s1, 136
  %v53 = vpack.c.bf16 0.0, %v51
  %54 = vst [vmem:[%s52] sm:$0xf] %v53
  %s55 = scalar_lea.vmem %s0, 800
  %v56 = vld [vmem:[%s55] sm:$0xff]
  %s57 = scalar_lea.vmem %s1, 200
  %v58 = vpack.c.bf16 0.0, %v56
  %59 = vst [vmem:[%s57] sm:$0xf] %v58
  %s60 = scalar_lea.vmem %s0, 48
  %v61 = vld [vmem:[%s60] sm:$0xff]
  %s62 = scalar_lea.vmem %s1, 12
  %v63 = vpack.c.bf16 0.0, %v61
  %64 = vst [vmem:[%s62] sm:$0xf] %v63
  %s65 = scalar_lea.vmem %s0, 304
  %v66 = vld [vmem:[%s65] sm:$0xff]
  %s67 = scalar_lea.vmem %s1, 76
  %v68 = vpack.c.bf16 0.0, %v66
  %69 = vst [vmem:[%s67] sm:$0xf] %v68
  %s70 = scalar_lea.vmem %s0, 560
  %v71 = vld [vmem:[%s70] sm:$0xff]
  %s72 = scalar_lea.vmem %s1, 140
  %v73 = vpack.c.bf16 0.0, %v71
  %74 = vst [vmem:[%s72] sm:$0xf] %v73
  %s75 = scalar_lea.vmem %s0, 816
  %v76 = vld [vmem:[%s75] sm:$0xff]
  %s77 = scalar_lea.vmem %s1, 204
  %v78 = vpack.c.bf16 0.0, %v76
  %79 = vst [vmem:[%s77] sm:$0xf] %v78
  %s80 = scalar_lea.vmem %s0, 64
  %v81 = vld [vmem:[%s80] sm:$0xff]
  %s82 = scalar_lea.vmem %s1, 16
  %v83 = vpack.c.bf16 0.0, %v81
  %84 = vst [vmem:[%s82] sm:$0xf] %v83
  %s85 = scalar_lea.vmem %s0, 320
  %v86 = vld [vmem:[%s85] sm:$0xff]
  %s87 = scalar_lea.vmem %s1, 80
  %v88 = vpack.c.bf16 0.0, %v86
  %89 = vst [vmem:[%s87] sm:$0xf] %v88
  %s90 = scalar_lea.vmem %s0, 576
  %v91 = vld [vmem:[%s90] sm:$0xff]
  %s92 = scalar_lea.vmem %s1, 144
  %v93 = vpack.c.bf16 0.0, %v91
  %94 = vst [vmem:[%s92] sm:$0xf] %v93
  %s95 = scalar_lea.vmem %s0, 832
  %v96 = vld [vmem:[%s95] sm:$0xff]
  %s97 = scalar_lea.vmem %s1, 208
  %v98 = vpack.c.bf16 0.0, %v96
  %99 = vst [vmem:[%s97] sm:$0xf] %v98
  %s100 = scalar_lea.vmem %s0, 80
  %v101 = vld [vmem:[%s100] sm:$0xff]
  %s102 = scalar_lea.vmem %s1, 20
  %v103 = vpack.c.bf16 0.0, %v101
  %104 = vst [vmem:[%s102] sm:$0xf] %v103
  %s105 = scalar_lea.vmem %s0, 336
  %v106 = vld [vmem:[%s105] sm:$0xff]
  %s107 = scalar_lea.vmem %s1, 84
  %v108 = vpack.c.bf16 0.0, %v106
  %109 = vst [vmem:[%s107] sm:$0xf] %v108
  %s110 = scalar_lea.vmem %s0, 592
  %v111 = vld [vmem:[%s110] sm:$0xff]
  %s112 = scalar_lea.vmem %s1, 148
  %v113 = vpack.c.bf16 0.0, %v111
  %114 = vst [vmem:[%s112] sm:$0xf] %v113
  %s115 = scalar_lea.vmem %s0, 848
  %v116 = vld [vmem:[%s115] sm:$0xff]
  %s117 = scalar_lea.vmem %s1, 212
  %v118 = vpack.c.bf16 0.0, %v116
  %119 = vst [vmem:[%s117] sm:$0xf] %v118
  %s120 = scalar_lea.vmem %s0, 96
  %v121 = vld [vmem:[%s120] sm:$0xff]
  %s122 = scalar_lea.vmem %s1, 24
  %v123 = vpack.c.bf16 0.0, %v121
  %124 = vst [vmem:[%s122] sm:$0xf] %v123
  %s125 = scalar_lea.vmem %s0, 352
  %v126 = vld [vmem:[%s125] sm:$0xff]
  %s127 = scalar_lea.vmem %s1, 88
  %v128 = vpack.c.bf16 0.0, %v126
  %129 = vst [vmem:[%s127] sm:$0xf] %v128
  %s130 = scalar_lea.vmem %s0, 608
  %v131 = vld [vmem:[%s130] sm:$0xff]
  %s132 = scalar_lea.vmem %s1, 152
  %v133 = vpack.c.bf16 0.0, %v131
  %134 = vst [vmem:[%s132] sm:$0xf] %v133
  %s135 = scalar_lea.vmem %s0, 864
  %v136 = vld [vmem:[%s135] sm:$0xff]
  %s137 = scalar_lea.vmem %s1, 216
  %v138 = vpack.c.bf16 0.0, %v136
  %139 = vst [vmem:[%s137] sm:$0xf] %v138
  %s140 = scalar_lea.vmem %s0, 112
  %v141 = vld [vmem:[%s140] sm:$0xff]
  %s142 = scalar_lea.vmem %s1, 28
  %v143 = vpack.c.bf16 0.0, %v141
  %144 = vst [vmem:[%s142] sm:$0xf] %v143
  %s145 = scalar_lea.vmem %s0, 368
  %v146 = vld [vmem:[%s145] sm:$0xff]
  %s147 = scalar_lea.vmem %s1, 92
  %v148 = vpack.c.bf16 0.0, %v146
  %149 = vst [vmem:[%s147] sm:$0xf] %v148
  %s150 = scalar_lea.vmem %s0, 624
  %v151 = vld [vmem:[%s150] sm:$0xff]
  %s152 = scalar_lea.vmem %s1, 156
  %v153 = vpack.c.bf16 0.0, %v151
  %154 = vst [vmem:[%s152] sm:$0xf] %v153
  %s155 = scalar_lea.vmem %s0, 880
  %v156 = vld [vmem:[%s155] sm:$0xff]
  %s157 = scalar_lea.vmem %s1, 220
  %v158 = vpack.c.bf16 0.0, %v156
  %159 = vst [vmem:[%s157] sm:$0xf] %v158
  %s160 = scalar_lea.vmem %s0, 128
  %v161 = vld [vmem:[%s160] sm:$0xff]
  %s162 = scalar_lea.vmem %s1, 32
  %v163 = vpack.c.bf16 0.0, %v161
  %164 = vst [vmem:[%s162] sm:$0xf] %v163
  %s165 = scalar_lea.vmem %s0, 384
  %v166 = vld [vmem:[%s165] sm:$0xff]
  %s167 = scalar_lea.vmem %s1, 96
  %v168 = vpack.c.bf16 0.0, %v166
  %169 = vst [vmem:[%s167] sm:$0xf] %v168
  %s170 = scalar_lea.vmem %s0, 640
  %v171 = vld [vmem:[%s170] sm:$0xff]
  %s172 = scalar_lea.vmem %s1, 160
  %v173 = vpack.c.bf16 0.0, %v171
  %174 = vst [vmem:[%s172] sm:$0xf] %v173
  %s175 = scalar_lea.vmem %s0, 896
  %v176 = vld [vmem:[%s175] sm:$0xff]
  %s177 = scalar_lea.vmem %s1, 224
  %v178 = vpack.c.bf16 0.0, %v176
  %179 = vst [vmem:[%s177] sm:$0xf] %v178
  %s180 = scalar_lea.vmem %s0, 144
  %v181 = vld [vmem:[%s180] sm:$0xff]
  %s182 = scalar_lea.vmem %s1, 36
  %v183 = vpack.c.bf16 0.0, %v181
  %184 = vst [vmem:[%s182] sm:$0xf] %v183
  %s185 = scalar_lea.vmem %s0, 400
  %v186 = vld [vmem:[%s185] sm:$0xff]
  %s187 = scalar_lea.vmem %s1, 100
  %v188 = vpack.c.bf16 0.0, %v186
  %189 = vst [vmem:[%s187] sm:$0xf] %v188
  %s190 = scalar_lea.vmem %s0, 656
  %v191 = vld [vmem:[%s190] sm:$0xff]
  %s192 = scalar_lea.vmem %s1, 164
  %v193 = vpack.c.bf16 0.0, %v191
  %194 = vst [vmem:[%s192] sm:$0xf] %v193
  %s195 = scalar_lea.vmem %s0, 912
  %v196 = vld [vmem:[%s195] sm:$0xff]
  %s197 = scalar_lea.vmem %s1, 228
  %v198 = vpack.c.bf16 0.0, %v196
  %199 = vst [vmem:[%s197] sm:$0xf] %v198
  %s200 = scalar_lea.vmem %s0, 160
  %v201 = vld [vmem:[%s200] sm:$0xff]
  %s202 = scalar_lea.vmem %s1, 40
  %v203 = vpack.c.bf16 0.0, %v201
  %204 = vst [vmem:[%s202] sm:$0xf] %v203
  %s205 = scalar_lea.vmem %s0, 416
  %v206 = vld [vmem:[%s205] sm:$0xff]
  %s207 = scalar_lea.vmem %s1, 104
  %v208 = vpack.c.bf16 0.0, %v206
  %209 = vst [vmem:[%s207] sm:$0xf] %v208
  %s210 = scalar_lea.vmem %s0, 672
  %v211 = vld [vmem:[%s210] sm:$0xff]
  %s212 = scalar_lea.vmem %s1, 168
  %v213 = vpack.c.bf16 0.0, %v211
  %214 = vst [vmem:[%s212] sm:$0xf] %v213
  %s215 = scalar_lea.vmem %s0, 928
  %v216 = vld [vmem:[%s215] sm:$0xff]
  %s217 = scalar_lea.vmem %s1, 232
  %v218 = vpack.c.bf16 0.0, %v216
  %219 = vst [vmem:[%s217] sm:$0xf] %v218
  %s220 = scalar_lea.vmem %s0, 176
  %v221 = vld [vmem:[%s220] sm:$0xff]
  %s222 = scalar_lea.vmem %s1, 44
  %v223 = vpack.c.bf16 0.0, %v221
  %224 = vst [vmem:[%s222] sm:$0xf] %v223
  %s225 = scalar_lea.vmem %s0, 432
  %v226 = vld [vmem:[%s225] sm:$0xff]
  %s227 = scalar_lea.vmem %s1, 108
  %v228 = vpack.c.bf16 0.0, %v226
  %229 = vst [vmem:[%s227] sm:$0xf] %v228
  %s230 = scalar_lea.vmem %s0, 688
  %v231 = vld [vmem:[%s230] sm:$0xff]
  %s232 = scalar_lea.vmem %s1, 172
  %v233 = vpack.c.bf16 0.0, %v231
  %234 = vst [vmem:[%s232] sm:$0xf] %v233
  %s235 = scalar_lea.vmem %s0, 944
  %v236 = vld [vmem:[%s235] sm:$0xff]
  %s237 = scalar_lea.vmem %s1, 236
  %v238 = vpack.c.bf16 0.0, %v236
  %239 = vst [vmem:[%s237] sm:$0xf] %v238
  %s240 = scalar_lea.vmem %s0, 192
  %v241 = vld [vmem:[%s240] sm:$0xff]
  %s242 = scalar_lea.vmem %s1, 48
  %v243 = vpack.c.bf16 0.0, %v241
  %244 = vst [vmem:[%s242] sm:$0xf] %v243
  %s245 = scalar_lea.vmem %s0, 448
  %v246 = vld [vmem:[%s245] sm:$0xff]
  %s247 = scalar_lea.vmem %s1, 112
  %v248 = vpack.c.bf16 0.0, %v246
  %249 = vst [vmem:[%s247] sm:$0xf] %v248
  %s250 = scalar_lea.vmem %s0, 704
  %v251 = vld [vmem:[%s250] sm:$0xff]
  %s252 = scalar_lea.vmem %s1, 176
  %v253 = vpack.c.bf16 0.0, %v251
  %254 = vst [vmem:[%s252] sm:$0xf] %v253
  %s255 = scalar_lea.vmem %s0, 960
  %v256 = vld [vmem:[%s255] sm:$0xff]
  %s257 = scalar_lea.vmem %s1, 240
  %v258 = vpack.c.bf16 0.0, %v256
  %259 = vst [vmem:[%s257] sm:$0xf] %v258
  %s260 = scalar_lea.vmem %s0, 208
  %v261 = vld [vmem:[%s260] sm:$0xff]
  %s262 = scalar_lea.vmem %s1, 52
  %v263 = vpack.c.bf16 0.0, %v261
  %264 = vst [vmem:[%s262] sm:$0xf] %v263
  %s265 = scalar_lea.vmem %s0, 464
  %v266 = vld [vmem:[%s265] sm:$0xff]
  %s267 = scalar_lea.vmem %s1, 116
  %v268 = vpack.c.bf16 0.0, %v266
  %269 = vst [vmem:[%s267] sm:$0xf] %v268
  %s270 = scalar_lea.vmem %s0, 720
  %v271 = vld [vmem:[%s270] sm:$0xff]
  %s272 = scalar_lea.vmem %s1, 180
  %v273 = vpack.c.bf16 0.0, %v271
  %274 = vst [vmem:[%s272] sm:$0xf] %v273
  %s275 = scalar_lea.vmem %s0, 976
  %v276 = vld [vmem:[%s275] sm:$0xff]
  %s277 = scalar_lea.vmem %s1, 244
  %v278 = vpack.c.bf16 0.0, %v276
  %279 = vst [vmem:[%s277] sm:$0xf] %v278
  %s280 = scalar_lea.vmem %s0, 224
  %v281 = vld [vmem:[%s280] sm:$0xff]
  %s282 = scalar_lea.vmem %s1, 56
  %v283 = vpack.c.bf16 0.0, %v281
  %284 = vst [vmem:[%s282] sm:$0xf] %v283
  %s285 = scalar_lea.vmem %s0, 480
  %v286 = vld [vmem:[%s285] sm:$0xff]
  %s287 = scalar_lea.vmem %s1, 120
  %v288 = vpack.c.bf16 0.0, %v286
  %289 = vst [vmem:[%s287] sm:$0xf] %v288
  %s290 = scalar_lea.vmem %s0, 736
  %v291 = vld [vmem:[%s290] sm:$0xff]
  %s292 = scalar_lea.vmem %s1, 184
  %v293 = vpack.c.bf16 0.0, %v291
  %294 = vst [vmem:[%s292] sm:$0xf] %v293
  %s295 = scalar_lea.vmem %s0, 992
  %v296 = vld [vmem:[%s295] sm:$0xff]
  %s297 = scalar_lea.vmem %s1, 248
  %v298 = vpack.c.bf16 0.0, %v296
  %299 = vst [vmem:[%s297] sm:$0xf] %v298
  %s300 = scalar_lea.vmem %s0, 240
  %v301 = vld [vmem:[%s300] sm:$0xff]
  %s302 = scalar_lea.vmem %s1, 60
  %v303 = vpack.c.bf16 0.0, %v301
  %304 = vst [vmem:[%s302] sm:$0xf] %v303
  %s305 = scalar_lea.vmem %s0, 496
  %v306 = vld [vmem:[%s305] sm:$0xff]
  %s307 = scalar_lea.vmem %s1, 124
  %v308 = vpack.c.bf16 0.0, %v306
  %309 = vst [vmem:[%s307] sm:$0xf] %v308
  %s310 = scalar_lea.vmem %s0, 752
  %v311 = vld [vmem:[%s310] sm:$0xff]
  %s312 = scalar_lea.vmem %s1, 188
  %v313 = vpack.c.bf16 0.0, %v311
  %314 = vst [vmem:[%s312] sm:$0xf] %v313
  %s315 = scalar_lea.vmem %s0, 1008
  %v316 = vld [vmem:[%s315] sm:$0xff]
  %s317 = scalar_lea.vmem %s1, 252
  %v318 = vpack.c.bf16 0.0, %v316
  %319 = vst [vmem:[%s317] sm:$0xf] %v318

// kernel: reverse.1
$region0: #{reverse.1}
  %s0 = inlined_call_operand.vmem [shape: f32[8,1,8,256], index: 0, kind: input, shape index: {}]
  %s1 = inlined_call_operand.vmem [shape: f32[8,1,8,256], index: 1, kind: output, shape index: {}]
  %v2 = vlaneseq
  %v3 = vsub.s32 127, %v2
  %4 = vset.pattern.permute.xlu0 %v3
  $region1: #{reverse.1} parent=0
    #allocation0 [shape = 'u8[65536]{0}', space=vmem, size = 0x10000, scoped, tag = 'operand span for operand 0']
    #allocation1 [shape = 'u8[65536]{0}', space=vmem, size = 0x10000, scoped, tag = 'operand span for operand 1']
    loop: start=0, step=1, limit=4
    $region2: #{reverse.1} parent=1 // loop_pre_header
      _
    $region3: #{reverse.1} parent=1 // loop_header
      %s6 = sphi 0, %s10
      %p7 = scmp.ge.s32.totalorder %s6, 4
      %s13 = sphi 0, %s39
      %s14 = sphi 0, %s35
      %s15 = sphi 0, %s31
      %s16 = sphi 0, %s27
      %s17 = sphi 0, %s13
      %s18 = sphi 0, %s14
      %s19 = sphi 0, %s15
      %s20 = sphi 0, %s16
      %s21 = sphi 0, %s17
      %s22 = sphi 0, %s18
      %s23 = sphi 0, %s19
      %s24 = sphi 0, %s20
    $region4: #{reverse.1} parent=1 // loop_header_branch
      %9 = sbr.rel (%p7) target = $region8
    $region5: #{reverse.1} parent=1 // loop_body
      %s11 = ssub.s32 %s6, 1
      %s12 = ssub.s32 %s6, 2
      %s25 = sadd.s32 1, %s16
      %p26 = scmp.ge.s32.totalorder %s25, 2
      %s27 = scalar_select %p26, 0, %s25
      %s28 = sadd.s32 1, %s15
      %s29 = scalar_select %p26, %s28, %s15
      %p30 = scmp.ge.s32.totalorder %s29, 1
      %s31 = scalar_select %p30, 0, %s29
      %s32 = sadd.s32 1, %s14
      %s33 = scalar_select %p30, %s32, %s14
      %p34 = scmp.ge.s32.totalorder %s33, 1
      %s35 = scalar_select %p34, 0, %s33
      %s36 = sadd.s32 1, %s13
      %s37 = scalar_select %p34, %s36, %s13
      %p38 = scmp.ge.s32.totalorder %s37, 1
      %s39 = scalar_select %p38, 0, %s37
      %p40 = scmp.le.s32.totalorder 1, %s6
      %p41 = scmp.lt.s32.totalorder %s6, 3
      %p42 = pnand %p40, %p41
      %p43 = pneg %p42
      // Predicated region
      $region9: #{reverse.1} parent=5 // pred_check
        _
      $region10: #{reverse.1} parent=5 // pred_check_branch
        %45 = sbr.rel (%p42) target = $region12
      $region11: #{reverse.1} parent=5 // pred_region
        %s46 = ssub.s32 %s6, 1
      $region12: #{reverse.1} parent=5 // pred_fallthru
        _
      %p47 = scmp.lt.s32.totalorder %s6, 2
      // Predicated region
      $region13: #{reverse.1} parent=5 // pred_check
        %p48 = pneg %p47
      $region14: #{reverse.1} parent=5 // pred_check_branch
        %50 = sbr.rel (%p48) target = $region16
      $region15: #{reverse.1} parent=5 // pred_region
        %s51 = sand.u32 %s6, 1
        %s52 = sand.u32 %s6, 1
        %s53 = smul.addr %s52, 64
        %s54 = scalar_lea.vmem [#allocation0], %s53
        %s55 = ssub.s32 1, %s16
        %s56 = smul.u32 8, %s13
        %s57 = smul.addr %s15, 2
        %s58 = sadd.s32 %s55, %s57
        %s59 = smul.addr %s14, 2
        %s60 = sadd.s32 %s58, %s59
        %s61 = smul.addr %s56, 2
        %s62 = sadd.s32 %s60, %s61
        %s63 = smul.addr %s62, 8
        %s64 = scalar_lea.vmem %s0, %s63
        // Predicated region
        $region17: #{reverse.1} parent=15 // pred_check
          _
        $region18: #{reverse.1} parent=15 // pred_check_branch
          %66 = sbr.rel (0) target = $region20
        $region19: #{reverse.1} parent=15 // pred_region
          // Predicated region
          $region21: #{reverse.1} parent=19 // pred_check
            _
          $region22: #{reverse.1} parent=19 // pred_check_branch
            %68 = sbr.rel (0) target = $region24
          $region23: #{reverse.1} parent=19 // pred_region
            // Predicated region
            $region36: #{reverse.1} parent=23 // pred_check
              _
            $region37: #{reverse.1} parent=23 // pred_check_branch
              %98 = sbr.rel (0) target = $region39
            $region38: #{reverse.1} parent=23 // pred_region
              loop: start=0, step=1, limit=1
              $region40: #{reverse.1} parent=38 // loop_pre_header
                _
              $region41: #{reverse.1} parent=38 // loop_header
                %s100 = sphi 0, %s104
                %p101 = scmp.ge.s32.totalorder %s100, 1
                %s105 = sphi %s64, %s64
                %s106 = sphi %s54, %s54
              $region42: #{reverse.1} parent=38 // loop_header_branch
                %103 = sbr.rel (%p101) target = $region46
              $region43: #{reverse.1} parent=38 // loop_body
                %v107 = vld [vmem:[%s105] sm:$0xff]
                %108 = vst [vmem:[%s106] sm:$0xff] %v107
                %v109 = vld [vmem:[%s105 + $0x10] sm:$0xff]
                %110 = vst [vmem:[%s106 + $0x8] sm:$0xff] %v109
                %v111 = vld [vmem:[%s105 + $0x20] sm:$0xff]
                %112 = vst [vmem:[%s106 + $0x10] sm:$0xff] %v111
                %v113 = vld [vmem:[%s105 + $0x30] sm:$0xff]
                %114 = vst [vmem:[%s106 + $0x18] sm:$0xff] %v113
                %v115 = vld [vmem:[%s105 + $0x40] sm:$0xff]
                %116 = vst [vmem:[%s106 + $0x20] sm:$0xff] %v115
                %v117 = vld [vmem:[%s105 + $0x50] sm:$0xff]
                %118 = vst [vmem:[%s106 + $0x28] sm:$0xff] %v117
                %v119 = vld [vmem:[%s105 + $0x60] sm:$0xff]
                %120 = vst [vmem:[%s106 + $0x30] sm:$0xff] %v119
                %v121 = vld [vmem:[%s105 + $0x70] sm:$0xff]
                %122 = vst [vmem:[%s106 + $0x38] sm:$0xff] %v121
              $region44: #{reverse.1} parent=38 // loop_footer
                %s104 = sadd.s32 1, %s100
              $region45: #{reverse.1} parent=38 // loop_footer_branch
                %99 = sbr.rel target = $region41
              $region46: #{reverse.1} parent=38 // loop_exit
                _
            $region39: #{reverse.1} parent=23 // pred_fallthru
              _
            // Predicated region
            $region47: #{reverse.1} parent=23 // pred_check
              _
            $region48: #{reverse.1} parent=23 // pred_check_branch
              %124 = sbr.rel target = $region50
            $region49: #{reverse.1} parent=23 // pred_region
              _
            $region50: #{reverse.1} parent=23 // pred_fallthru
              _
          $region24: #{reverse.1} parent=19 // pred_fallthru
            _
          // Predicated region
          $region25: #{reverse.1} parent=19 // pred_check
            _
          $region26: #{reverse.1} parent=19 // pred_check_branch
            %70 = sbr.rel target = $region28
          $region27: #{reverse.1} parent=19 // pred_region
            %s72 = ssub.s32 256, 1
            loop: start=0, step=1, limit=1
            $region29: #{reverse.1} parent=27 // loop_pre_header
              _
            $region30: #{reverse.1} parent=27 // loop_header
              %s74 = sphi 0, %s78
              %p75 = scmp.ge.s32.totalorder %s74, 1
              %s79 = sphi %s64, %s64
              %s80 = sphi %s54, %s54
            $region31: #{reverse.1} parent=27 // loop_header_branch
              %77 = sbr.rel (%p75) target = $region35
            $region32: #{reverse.1} parent=27 // loop_body
              %v81 = vld [vmem:[%s79] sm:%s72]
              %82 = vst [vmem:[%s80] sm:%s72] %v81
              %v83 = vld [vmem:[%s79 + $0x10] sm:%s72]
              %84 = vst [vmem:[%s80 + $0x8] sm:%s72] %v83
              %v85 = vld [vmem:[%s79 + $0x20] sm:%s72]
              %86 = vst [vmem:[%s80 + $0x10] sm:%s72] %v85
              %v87 = vld [vmem:[%s79 + $0x30] sm:%s72]
              %88 = vst [vmem:[%s80 + $0x18] sm:%s72] %v87
              %v89 = vld [vmem:[%s79 + $0x40] sm:%s72]
              %90 = vst [vmem:[%s80 + $0x20] sm:%s72] %v89
              %v91 = vld [vmem:[%s79 + $0x50] sm:%s72]
              %92 = vst [vmem:[%s80 + $0x28] sm:%s72] %v91
              %v93 = vld [vmem:[%s79 + $0x60] sm:%s72]
              %94 = vst [vmem:[%s80 + $0x30] sm:%s72] %v93
              %v95 = vld [vmem:[%s79 + $0x70] sm:%s72]
              %96 = vst [vmem:[%s80 + $0x38] sm:%s72] %v95
            $region33: #{reverse.1} parent=27 // loop_footer
              %s78 = sadd.s32 1, %s74
            $region34: #{reverse.1} parent=27 // loop_footer_branch
              %73 = sbr.rel target = $region30
            $region35: #{reverse.1} parent=27 // loop_exit
              _
          $region28: #{reverse.1} parent=19 // pred_fallthru
            _
        $region20: #{reverse.1} parent=15 // pred_fallthru
          _
        %125 = vnop
      $region16: #{reverse.1} parent=5 // pred_fallthru
        _
      %p126 = scmp.le.s32.totalorder 1, %s6
      %p127 = scmp.lt.s32.totalorder %s6, 3
      %p128 = pnand %p126, %p127
      %p129 = pneg %p128
      // Predicated region
      $region51: #{reverse.1} parent=5 // pred_check
        _
      $region52: #{reverse.1} parent=5 // pred_check_branch
        %131 = sbr.rel (%p128) target = $region54
      $region53: #{reverse.1} parent=5 // pred_region
        %s132 = ssub.s32 %s6, 1
        %s133 = sand.u32 %s11, 1
        %s134 = sand.u32 %s11, 1
        %s135 = smul.addr %s134, 64
        %s136 = scalar_lea.vmem [#allocation0], %s135
        %s137 = sand.u32 %s11, 1
        %s138 = sand.u32 %s11, 1
        %s139 = smul.addr %s138, 64
        %s140 = scalar_lea.vmem [#allocation0], %s139
        %s141 = sand.u32 %s11, 1
        %s142 = sand.u32 %s11, 1
        %s143 = smul.addr %s142, 64
        %s144 = scalar_lea.vmem [#allocation1], %s143
        %s145 = ssub.s32 1, %s20
        %s146 = smul.u32 8, %s17
        %s147 = smul.u32 8, %s17
        %v148 = vld [vmem:[%s136] sm:$0xff]
        %149 = vperm.xlu0 %4, %v148
        %v150 = vpop.permute.xlu0 %149
        %151 = vst [vmem:[%s144] sm:$0xff] %v150
        %s152 = scalar_lea.vmem %s144, 8 [#allocation1]
        %s153 = scalar_lea.vmem %s136, 8 [#allocation0]
        %v154 = vld [vmem:[%s153] sm:$0xff]
        %155 = vperm.xlu0 %4, %v154
        %v156 = vpop.permute.xlu0 %155
        %157 = vst [vmem:[%s152] sm:$0xff] %v156
        %s158 = scalar_lea.vmem %s144, 16 [#allocation1]
        %s159 = scalar_lea.vmem %s136, 16 [#allocation0]
        %v160 = vld [vmem:[%s159] sm:$0xff]
        %161 = vperm.xlu0 %4, %v160
        %v162 = vpop.permute.xlu0 %161
        %163 = vst [vmem:[%s158] sm:$0xff] %v162
        %s164 = scalar_lea.vmem %s144, 24 [#allocation1]
        %s165 = scalar_lea.vmem %s136, 24 [#allocation0]
        %v166 = vld [vmem:[%s165] sm:$0xff]
        %167 = vperm.xlu0 %4, %v166
        %v168 = vpop.permute.xlu0 %167
        %169 = vst [vmem:[%s164] sm:$0xff] %v168
        %s170 = scalar_lea.vmem %s144, 32 [#allocation1]
        %s171 = scalar_lea.vmem %s136, 32 [#allocation0]
        %v172 = vld [vmem:[%s171] sm:$0xff]
        %173 = vperm.xlu0 %4, %v172
        %v174 = vpop.permute.xlu0 %173
        %175 = vst [vmem:[%s170] sm:$0xff] %v174
        %s176 = scalar_lea.vmem %s144, 40 [#allocation1]
        %s177 = scalar_lea.vmem %s136, 40 [#allocation0]
        %v178 = vld [vmem:[%s177] sm:$0xff]
        %179 = vperm.xlu0 %4, %v178
        %v180 = vpop.permute.xlu0 %179
        %181 = vst [vmem:[%s176] sm:$0xff] %v180
        %s182 = scalar_lea.vmem %s144, 48 [#allocation1]
        %s183 = scalar_lea.vmem %s136, 48 [#allocation0]
        %v184 = vld [vmem:[%s183] sm:$0xff]
        %185 = vperm.xlu0 %4, %v184
        %v186 = vpop.permute.xlu0 %185
        %187 = vst [vmem:[%s182] sm:$0xff] %v186
        %s188 = scalar_lea.vmem %s144, 56 [#allocation1]
        %s189 = scalar_lea.vmem %s136, 56 [#allocation0]
        %v190 = vld [vmem:[%s189] sm:$0xff]
        %191 = vperm.xlu0 %4, %v190
        %v192 = vpop.permute.xlu0 %191
        %193 = vst [vmem:[%s188] sm:$0xff] %v192
        %s194 = sand.u32 %s11, 1
        %s195 = sand.u32 %s11, 1
        %s196 = smul.addr %s195, 64
        %s197 = scalar_lea.vmem [#allocation1], %s196
        %s198 = smul.u32 8, %s17
        %s199 = smul.addr %s19, 2
        %s200 = sadd.s32 %s20, %s199
        %s201 = smul.addr %s18, 2
        %s202 = sadd.s32 %s200, %s201
        %s203 = smul.addr %s198, 2
        %s204 = sadd.s32 %s202, %s203
        %s205 = smul.addr %s204, 8
        %s206 = scalar_lea.vmem %s1, %s205
        // Predicated region
        $region55: #{reverse.1} parent=53 // pred_check
          _
        $region56: #{reverse.1} parent=53 // pred_check_branch
          %208 = sbr.rel (0) target = $region58
        $region57: #{reverse.1} parent=53 // pred_region
          // Predicated region
          $region59: #{reverse.1} parent=57 // pred_check
            _
          $region60: #{reverse.1} parent=57 // pred_check_branch
            %210 = sbr.rel (0) target = $region62
          $region61: #{reverse.1} parent=57 // pred_region
            // Predicated region
            $region74: #{reverse.1} parent=61 // pred_check
              _
            $region75: #{reverse.1} parent=61 // pred_check_branch
              %240 = sbr.rel (0) target = $region77
            $region76: #{reverse.1} parent=61 // pred_region
              loop: start=0, step=1, limit=1
              $region78: #{reverse.1} parent=76 // loop_pre_header
                _
              $region79: #{reverse.1} parent=76 // loop_header
                %s242 = sphi 0, %s246
                %p243 = scmp.ge.s32.totalorder %s242, 1
                %s247 = sphi %s197, %s197
                %s248 = sphi %s206, %s206
              $region80: #{reverse.1} parent=76 // loop_header_branch
                %245 = sbr.rel (%p243) target = $region84
              $region81: #{reverse.1} parent=76 // loop_body
                %v249 = vld [vmem:[%s247] sm:$0xff]
                %250 = vst [vmem:[%s248] sm:$0xff] %v249
                %v251 = vld [vmem:[%s247 + $0x8] sm:$0xff]
                %252 = vst [vmem:[%s248 + $0x10] sm:$0xff] %v251
                %v253 = vld [vmem:[%s247 + $0x10] sm:$0xff]
                %254 = vst [vmem:[%s248 + $0x20] sm:$0xff] %v253
                %v255 = vld [vmem:[%s247 + $0x18] sm:$0xff]
                %256 = vst [vmem:[%s248 + $0x30] sm:$0xff] %v255
                %v257 = vld [vmem:[%s247 + $0x20] sm:$0xff]
                %258 = vst [vmem:[%s248 + $0x40] sm:$0xff] %v257
                %v259 = vld [vmem:[%s247 + $0x28] sm:$0xff]
                %260 = vst [vmem:[%s248 + $0x50] sm:$0xff] %v259
                %v261 = vld [vmem:[%s247 + $0x30] sm:$0xff]
                %262 = vst [vmem:[%s248 + $0x60] sm:$0xff] %v261
                %v263 = vld [vmem:[%s247 + $0x38] sm:$0xff]
                %264 = vst [vmem:[%s248 + $0x70] sm:$0xff] %v263
              $region82: #{reverse.1} parent=76 // loop_footer
                %s246 = sadd.s32 1, %s242
              $region83: #{reverse.1} parent=76 // loop_footer_branch
                %241 = sbr.rel target = $region79
              $region84: #{reverse.1} parent=76 // loop_exit
                _
            $region77: #{reverse.1} parent=61 // pred_fallthru
              _
            // Predicated region
            $region85: #{reverse.1} parent=61 // pred_check
              _
            $region86: #{reverse.1} parent=61 // pred_check_branch
              %266 = sbr.rel target = $region88
            $region87: #{reverse.1} parent=61 // pred_region
              _
            $region88: #{reverse.1} parent=61 // pred_fallthru
              _
          $region62: #{reverse.1} parent=57 // pred_fallthru
            _
          // Predicated region
          $region63: #{reverse.1} parent=57 // pred_check
            _
          $region64: #{reverse.1} parent=57 // pred_check_branch
            %212 = sbr.rel target = $region66
          $region65: #{reverse.1} parent=57 // pred_region
            %s214 = ssub.s32 256, 1
            loop: start=0, step=1, limit=1
            $region67: #{reverse.1} parent=65 // loop_pre_header
              _
            $region68: #{reverse.1} parent=65 // loop_header
              %s216 = sphi 0, %s220
              %p217 = scmp.ge.s32.totalorder %s216, 1
              %s221 = sphi %s197, %s197
              %s222 = sphi %s206, %s206
            $region69: #{reverse.1} parent=65 // loop_header_branch
              %219 = sbr.rel (%p217) target = $region73
            $region70: #{reverse.1} parent=65 // loop_body
              %v223 = vld [vmem:[%s221] sm:%s214]
              %224 = vst [vmem:[%s222] sm:%s214] %v223
              %v225 = vld [vmem:[%s221 + $0x8] sm:%s214]
              %226 = vst [vmem:[%s222 + $0x10] sm:%s214] %v225
              %v227 = vld [vmem:[%s221 + $0x10] sm:%s214]
              %228 = vst [vmem:[%s222 + $0x20] sm:%s214] %v227
              %v229 = vld [vmem:[%s221 + $0x18] sm:%s214]
              %230 = vst [vmem:[%s222 + $0x30] sm:%s214] %v229
              %v231 = vld [vmem:[%s221 + $0x20] sm:%s214]
              %232 = vst [vmem:[%s222 + $0x40] sm:%s214] %v231
              %v233 = vld [vmem:[%s221 + $0x28] sm:%s214]
              %234 = vst [vmem:[%s222 + $0x50] sm:%s214] %v233
              %v235 = vld [vmem:[%s221 + $0x30] sm:%s214]
              %236 = vst [vmem:[%s222 + $0x60] sm:%s214] %v235
              %v237 = vld [vmem:[%s221 + $0x38] sm:%s214]
              %238 = vst [vmem:[%s222 + $0x70] sm:%s214] %v237
            $region71: #{reverse.1} parent=65 // loop_footer
              %s220 = sadd.s32 1, %s216
            $region72: #{reverse.1} parent=65 // loop_footer_branch
              %215 = sbr.rel target = $region68
            $region73: #{reverse.1} parent=65 // loop_exit
              _
          $region66: #{reverse.1} parent=57 // pred_fallthru
            _
        $region58: #{reverse.1} parent=53 // pred_fallthru
          _
        %267 = vnop
      $region54: #{reverse.1} parent=5 // pred_fallthru
        _
      %p268 = scmp.le.s32.totalorder 2, %s6
      // Predicated region
      $region89: #{reverse.1} parent=5 // pred_check
        %p269 = pneg %p268
      $region90: #{reverse.1} parent=5 // pred_check_branch
        %271 = sbr.rel (%p269) target = $region92
      $region91: #{reverse.1} parent=5 // pred_region
        %s272 = ssub.s32 %s6, 2
        %s273 = sand.u32 %s12, 1
        %s274 = sand.u32 %s12, 1
        %s275 = smul.addr %s274, 64
        %s276 = scalar_lea.vmem [#allocation1], %s275
      $region92: #{reverse.1} parent=5 // pred_fallthru
        _
    $region6: #{reverse.1} parent=1 // loop_footer
      %s10 = sadd.s32 1, %s6
    $region7: #{reverse.1} parent=1 // loop_footer_branch
      %5 = sbr.rel target = $region3
    $region8: #{reverse.1} parent=1 // loop_exit
      _

// kernel: squeeze.7
$region0: #{squeeze.7}
  %s0 = inlined_call_operand.vmem [shape: f32[8,1,8,256], index: 0, kind: input, shape index: {}]
  %s1 = inlined_call_operand.vmem [shape: f32[8,8,16,16], index: 1, kind: output, shape index: {}]
  %v2 = vld [vmem:[%s0] sm:$0xff]
  %vm3 = vcmask 130048
  %4 = vst.msk [vmem:[%s1] ss:$16 sm:$0x3] %vm3, %v2
  %5 = vst.msk [vmem:[%s1] ss:$16 sm:$0xc] %vm3, %v2
  %6 = vst.msk [vmem:[%s1] ss:$16 sm:$0x30] %vm3, %v2
  %7 = vst.msk [vmem:[%s1] ss:$16 sm:$0xc0] %vm3, %v2
  %s8 = scalar_lea.vmem %s0, 8
  %v9 = vld [vmem:[%s8] sm:$0xff]
  %vm10 = vcmask 130048
  %s11 = scalar_lea.vmem %s1, 8
  %12 = vst.msk [vmem:[%s11] ss:$16 sm:$0x3] %vm10, %v9
  %s13 = scalar_lea.vmem %s1, 8
  %14 = vst.msk [vmem:[%s13] ss:$16 sm:$0xc] %vm10, %v9
  %s15 = scalar_lea.vmem %s1, 8
  %16 = vst.msk [vmem:[%s15] ss:$16 sm:$0x30] %vm10, %v9
  %s17 = scalar_lea.vmem %s1, 8
  %18 = vst.msk [vmem:[%s17] ss:$16 sm:$0xc0] %vm10, %v9
  %s19 = scalar_lea.vmem %s0, 16
  %v20 = vld [vmem:[%s19] sm:$0xff]
  %vm21 = vcmask 130048
  %s22 = scalar_lea.vmem %s1, 128
  %23 = vst.msk [vmem:[%s22] ss:$16 sm:$0x3] %vm21, %v20
  %s24 = scalar_lea.vmem %s1, 128
  %25 = vst.msk [vmem:[%s24] ss:$16 sm:$0xc] %vm21, %v20
  %s26 = scalar_lea.vmem %s1, 128
  %27 = vst.msk [vmem:[%s26] ss:$16 sm:$0x30] %vm21, %v20
  %s28 = scalar_lea.vmem %s1, 128
  %29 = vst.msk [vmem:[%s28] ss:$16 sm:$0xc0] %vm21, %v20
  %s30 = scalar_lea.vmem %s0, 24
  %v31 = vld [vmem:[%s30] sm:$0xff]
  %vm32 = vcmask 130048
  %s33 = scalar_lea.vmem %s1, 136
  %34 = vst.msk [vmem:[%s33] ss:$16 sm:$0x3] %vm32, %v31
  %s35 = scalar_lea.vmem %s1, 136
  %36 = vst.msk [vmem:[%s35] ss:$16 sm:$0xc] %vm32, %v31
  %s37 = scalar_lea.vmem %s1, 136
  %38 = vst.msk [vmem:[%s37] ss:$16 sm:$0x30] %vm32, %v31
  %s39 = scalar_lea.vmem %s1, 136
  %40 = vst.msk [vmem:[%s39] ss:$16 sm:$0xc0] %vm32, %v31
  %s41 = scalar_lea.vmem %s0, 32
  %v42 = vld [vmem:[%s41] sm:$0xff]
  %vm43 = vcmask 130048
  %s44 = scalar_lea.vmem %s1, 256
  %45 = vst.msk [vmem:[%s44] ss:$16 sm:$0x3] %vm43, %v42
  %s46 = scalar_lea.vmem %s1, 256
  %47 = vst.msk [vmem:[%s46] ss:$16 sm:$0xc] %vm43, %v42
  %s48 = scalar_lea.vmem %s1, 256
  %49 = vst.msk [vmem:[%s48] ss:$16 sm:$0x30] %vm43, %v42
  %s50 = scalar_lea.vmem %s1, 256
  %51 = vst.msk [vmem:[%s50] ss:$16 sm:$0xc0] %vm43, %v42
  %s52 = scalar_lea.vmem %s0, 40
  %v53 = vld [vmem:[%s52] sm:$0xff]
  %vm54 = vcmask 130048
  %s55 = scalar_lea.vmem %s1, 264
  %56 = vst.msk [vmem:[%s55] ss:$16 sm:$0x3] %vm54, %v53
  %s57 = scalar_lea.vmem %s1, 264
  %58 = vst.msk [vmem:[%s57] ss:$16 sm:$0xc] %vm54, %v53
  %s59 = scalar_lea.vmem %s1, 264
  %60 = vst.msk [vmem:[%s59] ss:$16 sm:$0x30] %vm54, %v53
  %s61 = scalar_lea.vmem %s1, 264
  %62 = vst.msk [vmem:[%s61] ss:$16 sm:$0xc0] %vm54, %v53
  %s63 = scalar_lea.vmem %s0, 48
  %v64 = vld [vmem:[%s63] sm:$0xff]
  %vm65 = vcmask 130048
  %s66 = scalar_lea.vmem %s1, 384
  %67 = vst.msk [vmem:[%s66] ss:$16 sm:$0x3] %vm65, %v64
  %s68 = scalar_lea.vmem %s1, 384
  %69 = vst.msk [vmem:[%s68] ss:$16 sm:$0xc] %vm65, %v64
  %s70 = scalar_lea.vmem %s1, 384
  %71 = vst.msk [vmem:[%s70] ss:$16 sm:$0x30] %vm65, %v64
  %s72 = scalar_lea.vmem %s1, 384
  %73 = vst.msk [vmem:[%s72] ss:$16 sm:$0xc0] %vm65, %v64
  %s74 = scalar_lea.vmem %s0, 56
  %v75 = vld [vmem:[%s74] sm:$0xff]
  %vm76 = vcmask 130048
  %s77 = scalar_lea.vmem %s1, 392
  %78 = vst.msk [vmem:[%s77] ss:$16 sm:$0x3] %vm76, %v75
  %s79 = scalar_lea.vmem %s1, 392
  %80 = vst.msk [vmem:[%s79] ss:$16 sm:$0xc] %vm76, %v75
  %s81 = scalar_lea.vmem %s1, 392
  %82 = vst.msk [vmem:[%s81] ss:$16 sm:$0x30] %vm76, %v75
  %s83 = scalar_lea.vmem %s1, 392
  %84 = vst.msk [vmem:[%s83] ss:$16 sm:$0xc0] %vm76, %v75
  %s85 = scalar_lea.vmem %s0, 64
  %v86 = vld [vmem:[%s85] sm:$0xff]
  %vm87 = vcmask 130048
  %s88 = scalar_lea.vmem %s1, 512
  %89 = vst.msk [vmem:[%s88] ss:$16 sm:$0x3] %vm87, %v86
  %s90 = scalar_lea.vmem %s1, 512
  %91 = vst.msk [vmem:[%s90] ss:$16 sm:$0xc] %vm87, %v86
  %s92 = scalar_lea.vmem %s1, 512
  %93 = vst.msk [vmem:[%s92] ss:$16 sm:$0x30] %vm87, %v86
  %s94 = scalar_lea.vmem %s1, 512
  %95 = vst.msk [vmem:[%s94] ss:$16 sm:$0xc0] %vm87, %v86
  %s96 = scalar_lea.vmem %s0, 72
  %v97 = vld [vmem:[%s96] sm:$0xff]
  %vm98 = vcmask 130048
  %s99 = scalar_lea.vmem %s1, 520
  %100 = vst.msk [vmem:[%s99] ss:$16 sm:$0x3] %vm98, %v97
  %s101 = scalar_lea.vmem %s1, 520
  %102 = vst.msk [vmem:[%s101] ss:$16 sm:$0xc] %vm98, %v97
  %s103 = scalar_lea.vmem %s1, 520
  %104 = vst.msk [vmem:[%s103] ss:$16 sm:$0x30] %vm98, %v97
  %s105 = scalar_lea.vmem %s1, 520
  %106 = vst.msk [vmem:[%s105] ss:$16 sm:$0xc0] %vm98, %v97
  %s107 = scalar_lea.vmem %s0, 80
  %v108 = vld [vmem:[%s107] sm:$0xff]
  %vm109 = vcmask 130048
  %s110 = scalar_lea.vmem %s1, 640
  %111 = vst.msk [vmem:[%s110] ss:$16 sm:$0x3] %vm109, %v108
  %s112 = scalar_lea.vmem %s1, 640
  %113 = vst.msk [vmem:[%s112] ss:$16 sm:$0xc] %vm109, %v108
  %s114 = scalar_lea.vmem %s1, 640
  %115 = vst.msk [vmem:[%s114] ss:$16 sm:$0x30] %vm109, %v108
  %s116 = scalar_lea.vmem %s1, 640
  %117 = vst.msk [vmem:[%s116] ss:$16 sm:$0xc0] %vm109, %v108
  %s118 = scalar_lea.vmem %s0, 88
  %v119 = vld [vmem:[%s118] sm:$0xff]
  %vm120 = vcmask 130048
  %s121 = scalar_lea.vmem %s1, 648
  %122 = vst.msk [vmem:[%s121] ss:$16 sm:$0x3] %vm120, %v119
  %s123 = scalar_lea.vmem %s1, 648
  %124 = vst.msk [vmem:[%s123] ss:$16 sm:$0xc] %vm120, %v119
  %s125 = scalar_lea.vmem %s1, 648
  %126 = vst.msk [vmem:[%s125] ss:$16 sm:$0x30] %vm120, %v119
  %s127 = scalar_lea.vmem %s1, 648
  %128 = vst.msk [vmem:[%s127] ss:$16 sm:$0xc0] %vm120, %v119
  %s129 = scalar_lea.vmem %s0, 96
  %v130 = vld [vmem:[%s129] sm:$0xff]
  %vm131 = vcmask 130048
  %s132 = scalar_lea.vmem %s1, 768
  %133 = vst.msk [vmem:[%s132] ss:$16 sm:$0x3] %vm131, %v130
  %s134 = scalar_lea.vmem %s1, 768
  %135 = vst.msk [vmem:[%s134] ss:$16 sm:$0xc] %vm131, %v130
  %s136 = scalar_lea.vmem %s1, 768
  %137 = vst.msk [vmem:[%s136] ss:$16 sm:$0x30] %vm131, %v130
  %s138 = scalar_lea.vmem %s1, 768
  %139 = vst.msk [vmem:[%s138] ss:$16 sm:$0xc0] %vm131, %v130
  %s140 = scalar_lea.vmem %s0, 104
  %v141 = vld [vmem:[%s140] sm:$0xff]
  %vm142 = vcmask 130048
  %s143 = scalar_lea.vmem %s1, 776
  %144 = vst.msk [vmem:[%s143] ss:$16 sm:$0x3] %vm142, %v141
  %s145 = scalar_lea.vmem %s1, 776
  %146 = vst.msk [vmem:[%s145] ss:$16 sm:$0xc] %vm142, %v141
  %s147 = scalar_lea.vmem %s1, 776
  %148 = vst.msk [vmem:[%s147] ss:$16 sm:$0x30] %vm142, %v141
  %s149 = scalar_lea.vmem %s1, 776
  %150 = vst.msk [vmem:[%s149] ss:$16 sm:$0xc0] %vm142, %v141
  %s151 = scalar_lea.vmem %s0, 112
  %v152 = vld [vmem:[%s151] sm:$0xff]
  %vm153 = vcmask 130048
  %s154 = scalar_lea.vmem %s1, 896
  %155 = vst.msk [vmem:[%s154] ss:$16 sm:$0x3] %vm153, %v152
  %s156 = scalar_lea.vmem %s1, 896
  %157 = vst.msk [vmem:[%s156] ss:$16 sm:$0xc] %vm153, %v152
  %s158 = scalar_lea.vmem %s1, 896
  %159 = vst.msk [vmem:[%s158] ss:$16 sm:$0x30] %vm153, %v152
  %s160 = scalar_lea.vmem %s1, 896
  %161 = vst.msk [vmem:[%s160] ss:$16 sm:$0xc0] %vm153, %v152
  %s162 = scalar_lea.vmem %s0, 120
  %v163 = vld [vmem:[%s162] sm:$0xff]
  %vm164 = vcmask 130048
  %s165 = scalar_lea.vmem %s1, 904
  %166 = vst.msk [vmem:[%s165] ss:$16 sm:$0x3] %vm164, %v163
  %s167 = scalar_lea.vmem %s1, 904
  %168 = vst.msk [vmem:[%s167] ss:$16 sm:$0xc] %vm164, %v163
  %s169 = scalar_lea.vmem %s1, 904
  %170 = vst.msk [vmem:[%s169] ss:$16 sm:$0x30] %vm164, %v163
  %s171 = scalar_lea.vmem %s1, 904
  %172 = vst.msk [vmem:[%s171] ss:$16 sm:$0xc0] %vm164, %v163
  %v173 = vld.sshfl [vmem:[%s0] sm:$0xff pattern:$0xb3a29180]
  %174 = vrot.lane.b32.xlu0 %v173, 112
  %v175 = vpop.permute.xlu0 %174
  %vm176 = vcmask 130048
  %s177 = scalar_lea.vmem %s1, 1
  %178 = vst.msk [vmem:[%s177] ss:$8 sm:$0xf] %vm176, %v175
  %s179 = scalar_lea.vmem %s1, 1
  %180 = vst.msk [vmem:[%s179] ss:$8 sm:$0xf0] %vm176, %v175
  %s181 = scalar_lea.vmem %s0, 4
  %v182 = vld.sshfl [vmem:[%s181] sm:$0xff pattern:$0xb3a29180]
  %183 = vrot.lane.b32.xlu0 %v182, 112
  %v184 = vpop.permute.xlu0 %183
  %vm185 = vcmask 130048
  %s186 = scalar_lea.vmem %s1, 65
  %187 = vst.msk [vmem:[%s186] ss:$8 sm:$0xf] %vm185, %v184
  %s188 = scalar_lea.vmem %s1, 65
  %189 = vst.msk [vmem:[%s188] ss:$8 sm:$0xf0] %vm185, %v184
  %s190 = scalar_lea.vmem %s0, 16
  %v191 = vld.sshfl [vmem:[%s190] sm:$0xff pattern:$0xb3a29180]
  %192 = vrot.lane.b32.xlu0 %v191, 112
  %v193 = vpop.permute.xlu0 %192
  %vm194 = vcmask 130048
  %s195 = scalar_lea.vmem %s1, 129
  %196 = vst.msk [vmem:[%s195] ss:$8 sm:$0xf] %vm194, %v193
  %s197 = scalar_lea.vmem %s1, 129
  %198 = vst.msk [vmem:[%s197] ss:$8 sm:$0xf0] %vm194, %v193
  %s199 = scalar_lea.vmem %s0, 20
  %v200 = vld.sshfl [vmem:[%s199] sm:$0xff pattern:$0xb3a29180]
  %201 = vrot.lane.b32.xlu0 %v200, 112
  %v202 = vpop.permute.xlu0 %201
  %vm203 = vcmask 130048
  %s204 = scalar_lea.vmem %s1, 193
  %205 = vst.msk [vmem:[%s204] ss:$8 sm:$0xf] %vm203, %v202
  %s206 = scalar_lea.vmem %s1, 193
  %207 = vst.msk [vmem:[%s206] ss:$8 sm:$0xf0] %vm203, %v202
  %s208 = scalar_lea.vmem %s0, 32
  %v209 = vld.sshfl [vmem:[%s208] sm:$0xff pattern:$0xb3a29180]
  %210 = vrot.lane.b32.xlu0 %v209, 112
  %v211 = vpop.permute.xlu0 %210
  %vm212 = vcmask 130048
  %s213 = scalar_lea.vmem %s1, 257
  %214 = vst.msk [vmem:[%s213] ss:$8 sm:$0xf] %vm212, %v211
  %s215 = scalar_lea.vmem %s1, 257
  %216 = vst.msk [vmem:[%s215] ss:$8 sm:$0xf0] %vm212, %v211
  %s217 = scalar_lea.vmem %s0, 36
  %v218 = vld.sshfl [vmem:[%s217] sm:$0xff pattern:$0xb3a29180]
  %219 = vrot.lane.b32.xlu0 %v218, 112
  %v220 = vpop.permute.xlu0 %219
  %vm221 = vcmask 130048
  %s222 = scalar_lea.vmem %s1, 321
  %223 = vst.msk [vmem:[%s222] ss:$8 sm:$0xf] %vm221, %v220
  %s224 = scalar_lea.vmem %s1, 321
  %225 = vst.msk [vmem:[%s224] ss:$8 sm:$0xf0] %vm221, %v220
  %s226 = scalar_lea.vmem %s0, 48
  %v227 = vld.sshfl [vmem:[%s226] sm:$0xff pattern:$0xb3a29180]
  %228 = vrot.lane.b32.xlu0 %v227, 112
  %v229 = vpop.permute.xlu0 %228
  %vm230 = vcmask 130048
  %s231 = scalar_lea.vmem %s1, 385
  %232 = vst.msk [vmem:[%s231] ss:$8 sm:$0xf] %vm230, %v229
  %s233 = scalar_lea.vmem %s1, 385
  %234 = vst.msk [vmem:[%s233] ss:$8 sm:$0xf0] %vm230, %v229
  %s235 = scalar_lea.vmem %s0, 52
  %v236 = vld.sshfl [vmem:[%s235] sm:$0xff pattern:$0xb3a29180]
  %237 = vrot.lane.b32.xlu0 %v236, 112
  %v238 = vpop.permute.xlu0 %237
  %vm239 = vcmask 130048
  %s240 = scalar_lea.vmem %s1, 449
  %241 = vst.msk [vmem:[%s240] ss:$8 sm:$0xf] %vm239, %v238
  %s242 = scalar_lea.vmem %s1, 449
  %243 = vst.msk [vmem:[%s242] ss:$8 sm:$0xf0] %vm239, %v238
  %s244 = scalar_lea.vmem %s0, 64
  %v245 = vld.sshfl [vmem:[%s244] sm:$0xff pattern:$0xb3a29180]
  %246 = vrot.lane.b32.xlu0 %v245, 112
  %v247 = vpop.permute.xlu0 %246
  %vm248 = vcmask 130048
  %s249 = scalar_lea.vmem %s1, 513
  %250 = vst.msk [vmem:[%s249] ss:$8 sm:$0xf] %vm248, %v247
  %s251 = scalar_lea.vmem %s1, 513
  %252 = vst.msk [vmem:[%s251] ss:$8 sm:$0xf0] %vm248, %v247
  %s253 = scalar_lea.vmem %s0, 68
  %v254 = vld.sshfl [vmem:[%s253] sm:$0xff pattern:$0xb3a29180]
  %255 = vrot.lane.b32.xlu0 %v254, 112
  %v256 = vpop.permute.xlu0 %255
  %vm257 = vcmask 130048
  %s258 = scalar_lea.vmem %s1, 577
  %259 = vst.msk [vmem:[%s258] ss:$8 sm:$0xf] %vm257, %v256
  %s260 = scalar_lea.vmem %s1, 577
  %261 = vst.msk [vmem:[%s260] ss:$8 sm:$0xf0] %vm257, %v256
  %s262 = scalar_lea.vmem %s0, 80
  %v263 = vld.sshfl [vmem:[%s262] sm:$0xff pattern:$0xb3a29180]
  %264 = vrot.lane.b32.xlu0 %v263, 112
  %v265 = vpop.permute.xlu0 %264
  %vm266 = vcmask 130048
  %s267 = scalar_lea.vmem %s1, 641
  %268 = vst.msk [vmem:[%s267] ss:$8 sm:$0xf] %vm266, %v265
  %s269 = scalar_lea.vmem %s1, 641
  %270 = vst.msk [vmem:[%s269] ss:$8 sm:$0xf0] %vm266, %v265
  %s271 = scalar_lea.vmem %s0, 84
  %v272 = vld.sshfl [vmem:[%s271] sm:$0xff pattern:$0xb3a29180]
  %273 = vrot.lane.b32.xlu0 %v272, 112
  %v274 = vpop.permute.xlu0 %273
  %vm275 = vcmask 130048
  %s276 = scalar_lea.vmem %s1, 705
  %277 = vst.msk [vmem:[%s276] ss:$8 sm:$0xf] %vm275, %v274
  %s278 = scalar_lea.vmem %s1, 705
  %279 = vst.msk [vmem:[%s278] ss:$8 sm:$0xf0] %vm275, %v274
  %s280 = scalar_lea.vmem %s0, 96
  %v281 = vld.sshfl [vmem:[%s280] sm:$0xff pattern:$0xb3a29180]
  %282 = vrot.lane.b32.xlu0 %v281, 112
  %v283 = vpop.permute.xlu0 %282
  %vm284 = vcmask 130048
  %s285 = scalar_lea.vmem %s1, 769
  %286 = vst.msk [vmem:[%s285] ss:$8 sm:$0xf] %vm284, %v283
  %s287 = scalar_lea.vmem %s1, 769
  %288 = vst.msk [vmem:[%s287] ss:$8 sm:$0xf0] %vm284, %v283
  %s289 = scalar_lea.vmem %s0, 100
  %v290 = vld.sshfl [vmem:[%s289] sm:$0xff pattern:$0xb3a29180]
  %291 = vrot.lane.b32.xlu0 %v290, 112
  %v292 = vpop.permute.xlu0 %291
  %vm293 = vcmask 130048
  %s294 = scalar_lea.vmem %s1, 833
  %295 = vst.msk [vmem:[%s294] ss:$8 sm:$0xf] %vm293, %v292
  %s296 = scalar_lea.vmem %s1, 833
  %297 = vst.msk [vmem:[%s296] ss:$8 sm:$0xf0] %vm293, %v292
  %s298 = scalar_lea.vmem %s0, 112
  %v299 = vld.sshfl [vmem:[%s298] sm:$0xff pattern:$0xb3a29180]
  %300 = vrot.lane.b32.xlu0 %v299, 112
  %v301 = vpop.permute.xlu0 %300
  %vm302 = vcmask 130048
  %s303 = scalar_lea.vmem %s1, 897
  %304 = vst.msk [vmem:[%s303] ss:$8 sm:$0xf] %vm302, %v301
  %s305 = scalar_lea.vmem %s1, 897
  %306 = vst.msk [vmem:[%s305] ss:$8 sm:$0xf0] %vm302, %v301
  %s307 = scalar_lea.vmem %s0, 116
  %v308 = vld.sshfl [vmem:[%s307] sm:$0xff pattern:$0xb3a29180]
  %309 = vrot.lane.b32.xlu0 %v308, 112
  %v310 = vpop.permute.xlu0 %309
  %vm311 = vcmask 130048
  %s312 = scalar_lea.vmem %s1, 961
  %313 = vst.msk [vmem:[%s312] ss:$8 sm:$0xf] %vm311, %v310
  %s314 = scalar_lea.vmem %s1, 961
  %315 = vst.msk [vmem:[%s314] ss:$8 sm:$0xf0] %vm311, %v310
  %v316 = vld.sshfl [vmem:[%s0] sm:$0xff pattern:$0xb3a29180]
  %317 = vrot.lane.b32.xlu0 %v316, 96
  %v318 = vpop.permute.xlu0 %317
  %vm319 = vcmask 130048
  %s320 = scalar_lea.vmem %s1, 2
  %321 = vst.msk [vmem:[%s320] ss:$8 sm:$0xf] %vm319, %v318
  %s322 = scalar_lea.vmem %s1, 2
  %323 = vst.msk [vmem:[%s322] ss:$8 sm:$0xf0] %vm319, %v318
  %s324 = scalar_lea.vmem %s0, 4
  %v325 = vld.sshfl [vmem:[%s324] sm:$0xff pattern:$0xb3a29180]
  %326 = vrot.lane.b32.xlu0 %v325, 96
  %v327 = vpop.permute.xlu0 %326
  %vm328 = vcmask 130048
  %s329 = scalar_lea.vmem %s1, 66
  %330 = vst.msk [vmem:[%s329] ss:$8 sm:$0xf] %vm328, %v327
  %s331 = scalar_lea.vmem %s1, 66
  %332 = vst.msk [vmem:[%s331] ss:$8 sm:$0xf0] %vm328, %v327
  %s333 = scalar_lea.vmem %s0, 16
  %v334 = vld.sshfl [vmem:[%s333] sm:$0xff pattern:$0xb3a29180]
  %335 = vrot.lane.b32.xlu0 %v334, 96
  %v336 = vpop.permute.xlu0 %335
  %vm337 = vcmask 130048
  %s338 = scalar_lea.vmem %s1, 130
  %339 = vst.msk [vmem:[%s338] ss:$8 sm:$0xf] %vm337, %v336
  %s340 = scalar_lea.vmem %s1, 130
  %341 = vst.msk [vmem:[%s340] ss:$8 sm:$0xf0] %vm337, %v336
  %s342 = scalar_lea.vmem %s0, 20
  %v343 = vld.sshfl [vmem:[%s342] sm:$0xff pattern:$0xb3a29180]
  %344 = vrot.lane.b32.xlu0 %v343, 96
  %v345 = vpop.permute.xlu0 %344
  %vm346 = vcmask 130048
  %s347 = scalar_lea.vmem %s1, 194
  %348 = vst.msk [vmem:[%s347] ss:$8 sm:$0xf] %vm346, %v345
  %s349 = scalar_lea.vmem %s1, 194
  %350 = vst.msk [vmem:[%s349] ss:$8 sm:$0xf0] %vm346, %v345
  %s351 = scalar_lea.vmem %s0, 32
  %v352 = vld.sshfl [vmem:[%s351] sm:$0xff pattern:$0xb3a29180]
  %353 = vrot.lane.b32.xlu0 %v352, 96
  %v354 = vpop.permute.xlu0 %353
  %vm355 = vcmask 130048
  %s356 = scalar_lea.vmem %s1, 258
  %357 = vst.msk [vmem:[%s356] ss:$8 sm:$0xf] %vm355, %v354
  %s358 = scalar_lea.vmem %s1, 258
  %359 = vst.msk [vmem:[%s358] ss:$8 sm:$0xf0] %vm355, %v354
  %s360 = scalar_lea.vmem %s0, 36
  %v361 = vld.sshfl [vmem:[%s360] sm:$0xff pattern:$0xb3a29180]
  %362 = vrot.lane.b32.xlu0 %v361, 96
  %v363 = vpop.permute.xlu0 %362
  %vm364 = vcmask 130048
  %s365 = scalar_lea.vmem %s1, 322
  %366 = vst.msk [vmem:[%s365] ss:$8 sm:$0xf] %vm364, %v363
  %s367 = scalar_lea.vmem %s1, 322
  %368 = vst.msk [vmem:[%s367] ss:$8 sm:$0xf0] %vm364, %v363
  %s369 = scalar_lea.vmem %s0, 48
  %v370 = vld.sshfl [vmem:[%s369] sm:$0xff pattern:$0xb3a29180]
  %371 = vrot.lane.b32.xlu0 %v370, 96
  %v372 = vpop.permute.xlu0 %371
  %vm373 = vcmask 130048
  %s374 = scalar_lea.vmem %s1, 386
  %375 = vst.msk [vmem:[%s374] ss:$8 sm:$0xf] %vm373, %v372
  %s376 = scalar_lea.vmem %s1, 386
  %377 = vst.msk [vmem:[%s376] ss:$8 sm:$0xf0] %vm373, %v372
  %s378 = scalar_lea.vmem %s0, 52
  %v379 = vld.sshfl [vmem:[%s378] sm:$0xff pattern:$0xb3a29180]
  %380 = vrot.lane.b32.xlu0 %v379, 96
  %v381 = vpop.permute.xlu0 %380
  %vm382 = vcmask 130048
  %s383 = scalar_lea.vmem %s1, 450
  %384 = vst.msk [vmem:[%s383] ss:$8 sm:$0xf] %vm382, %v381
  %s385 = scalar_lea.vmem %s1, 450
  %386 = vst.msk [vmem:[%s385] ss:$8 sm:$0xf0] %vm382, %v381
  %s387 = scalar_lea.vmem %s0, 64
  %v388 = vld.sshfl [vmem:[%s387] sm:$0xff pattern:$0xb3a29180]
  %389 = vrot.lane.b32.xlu0 %v388, 96
  %v390 = vpop.permute.xlu0 %389
  %vm391 = vcmask 130048
  %s392 = scalar_lea.vmem %s1, 514
  %393 = vst.msk [vmem:[%s392] ss:$8 sm:$0xf] %vm391, %v390
  %s394 = scalar_lea.vmem %s1, 514
  %395 = vst.msk [vmem:[%s394] ss:$8 sm:$0xf0] %vm391, %v390
  %s396 = scalar_lea.vmem %s0, 68
  %v397 = vld.sshfl [vmem:[%s396] sm:$0xff pattern:$0xb3a29180]
  %398 = vrot.lane.b32.xlu0 %v397, 96
  %v399 = vpop.permute.xlu0 %398
  %vm400 = vcmask 130048
  %s401 = scalar_lea.vmem %s1, 578
  %402 = vst.msk [vmem:[%s401] ss:$8 sm:$0xf] %vm400, %v399
  %s403 = scalar_lea.vmem %s1, 578
  %404 = vst.msk [vmem:[%s403] ss:$8 sm:$0xf0] %vm400, %v399
  %s405 = scalar_lea.vmem %s0, 80
  %v406 = vld.sshfl [vmem:[%s405] sm:$0xff pattern:$0xb3a29180]
  %407 = vrot.lane.b32.xlu0 %v406, 96
  %v408 = vpop.permute.xlu0 %407
  %vm409 = vcmask 130048
  %s410 = scalar_lea.vmem %s1, 642
  %411 = vst.msk [vmem:[%s410] ss:$8 sm:$0xf] %vm409, %v408
  %s412 = scalar_lea.vmem %s1, 642
  %413 = vst.msk [vmem:[%s412] ss:$8 sm:$0xf0] %vm409, %v408
  %s414 = scalar_lea.vmem %s0, 84
  %v415 = vld.sshfl [vmem:[%s414] sm:$0xff pattern:$0xb3a29180]
  %416 = vrot.lane.b32.xlu0 %v415, 96
  %v417 = vpop.permute.xlu0 %416
  %vm418 = vcmask 130048
  %s419 = scalar_lea.vmem %s1, 706
  %420 = vst.msk [vmem:[%s419] ss:$8 sm:$0xf] %vm418, %v417
  %s421 = scalar_lea.vmem %s1, 706
  %422 = vst.msk [vmem:[%s421] ss:$8 sm:$0xf0] %vm418, %v417
  %s423 = scalar_lea.vmem %s0, 96
  %v424 = vld.sshfl [vmem:[%s423] sm:$0xff pattern:$0xb3a29180]
  %425 = vrot.lane.b32.xlu0 %v424, 96
  %v426 = vpop.permute.xlu0 %425
  %vm427 = vcmask 130048
  %s428 = scalar_lea.vmem %s1, 770
  %429 = vst.msk [vmem:[%s428] ss:$8 sm:$0xf] %vm427, %v426
  %s430 = scalar_lea.vmem %s1, 770
  %431 = vst.msk [vmem:[%s430] ss:$8 sm:$0xf0] %vm427, %v426
  %s432 = scalar_lea.vmem %s0, 100
  %v433 = vld.sshfl [vmem:[%s432] sm:$0xff pattern:$0xb3a29180]
  %434 = vrot.lane.b32.xlu0 %v433, 96
  %v435 = vpop.permute.xlu0 %434
  %vm436 = vcmask 130048
  %s437 = scalar_lea.vmem %s1, 834
  %438 = vst.msk [vmem:[%s437] ss:$8 sm:$0xf] %vm436, %v435
  %s439 = scalar_lea.vmem %s1, 834
  %440 = vst.msk [vmem:[%s439] ss:$8 sm:$0xf0] %vm436, %v435
  %s441 = scalar_lea.vmem %s0, 112
  %v442 = vld.sshfl [vmem:[%s441] sm:$0xff pattern:$0xb3a29180]
  %443 = vrot.lane.b32.xlu0 %v442, 96
  %v444 = vpop.permute.xlu0 %443
  %vm445 = vcmask 130048
  %s446 = scalar_lea.vmem %s1, 898
  %447 = vst.msk [vmem:[%s446] ss:$8 sm:$0xf] %vm445, %v444
  %s448 = scalar_lea.vmem %s1, 898
  %449 = vst.msk [vmem:[%s448] ss:$8 sm:$0xf0] %vm445, %v444
  %s450 = scalar_lea.vmem %s0, 116
  %v451 = vld.sshfl [vmem:[%s450] sm:$0xff pattern:$0xb3a29180]
  %452 = vrot.lane.b32.xlu0 %v451, 96
  %v453 = vpop.permute.xlu0 %452
  %vm454 = vcmask 130048
  %s455 = scalar_lea.vmem %s1, 962
  %456 = vst.msk [vmem:[%s455] ss:$8 sm:$0xf] %vm454, %v453
  %s457 = scalar_lea.vmem %s1, 962
  %458 = vst.msk [vmem:[%s457] ss:$8 sm:$0xf0] %vm454, %v453
  %v459 = vld.sshfl [vmem:[%s0] sm:$0xff pattern:$0xb3a29180]
  %460 = vrot.lane.b32.xlu0 %v459, 80
  %v461 = vpop.permute.xlu0 %460
  %vm462 = vcmask 130048
  %s463 = scalar_lea.vmem %s1, 3
  %464 = vst.msk [vmem:[%s463] ss:$8 sm:$0xf] %vm462, %v461
  %s465 = scalar_lea.vmem %s1, 3
  %466 = vst.msk [vmem:[%s465] ss:$8 sm:$0xf0] %vm462, %v461
  %s467 = scalar_lea.vmem %s0, 4
  %v468 = vld.sshfl [vmem:[%s467] sm:$0xff pattern:$0xb3a29180]
  %469 = vrot.lane.b32.xlu0 %v468, 80
  %v470 = vpop.permute.xlu0 %469
  %vm471 = vcmask 130048
  %s472 = scalar_lea.vmem %s1, 67
  %473 = vst.msk [vmem:[%s472] ss:$8 sm:$0xf] %vm471, %v470
  %s474 = scalar_lea.vmem %s1, 67
  %475 = vst.msk [vmem:[%s474] ss:$8 sm:$0xf0] %vm471, %v470
  %s476 = scalar_lea.vmem %s0, 16
  %v477 = vld.sshfl [vmem:[%s476] sm:$0xff pattern:$0xb3a29180]
  %478 = vrot.lane.b32.xlu0 %v477, 80
  %v479 = vpop.permute.xlu0 %478
  %vm480 = vcmask 130048
  %s481 = scalar_lea.vmem %s1, 131
  %482 = vst.msk [vmem:[%s481] ss:$8 sm:$0xf] %vm480, %v479
  %s483 = scalar_lea.vmem %s1, 131
  %484 = vst.msk [vmem:[%s483] ss:$8 sm:$0xf0] %vm480, %v479
  %s485 = scalar_lea.vmem %s0, 20
  %v486 = vld.sshfl [vmem:[%s485] sm:$0xff pattern:$0xb3a29180]
  %487 = vrot.lane.b32.xlu0 %v486, 80
  %v488 = vpop.permute.xlu0 %487
  %vm489 = vcmask 130048
  %s490 = scalar_lea.vmem %s1, 195
  %491 = vst.msk [vmem:[%s490] ss:$8 sm:$0xf] %vm489, %v488
  %s492 = scalar_lea.vmem %s1, 195
  %493 = vst.msk [vmem:[%s492] ss:$8 sm:$0xf0] %vm489, %v488
  %s494 = scalar_lea.vmem %s0, 32
  %v495 = vld.sshfl [vmem:[%s494] sm:$0xff pattern:$0xb3a29180]
  %496 = vrot.lane.b32.xlu0 %v495, 80
  %v497 = vpop.permute.xlu0 %496
  %vm498 = vcmask 130048
  %s499 = scalar_lea.vmem %s1, 259
  %500 = vst.msk [vmem:[%s499] ss:$8 sm:$0xf] %vm498, %v497
  %s501 = scalar_lea.vmem %s1, 259
  %502 = vst.msk [vmem:[%s501] ss:$8 sm:$0xf0] %vm498, %v497
  %s503 = scalar_lea.vmem %s0, 36
  %v504 = vld.sshfl [vmem:[%s503] sm:$0xff pattern:$0xb3a29180]
  %505 = vrot.lane.b32.xlu0 %v504, 80
  %v506 = vpop.permute.xlu0 %505
  %vm507 = vcmask 130048
  %s508 = scalar_lea.vmem %s1, 323
  %509 = vst.msk [vmem:[%s508] ss:$8 sm:$0xf] %vm507, %v506
  %s510 = scalar_lea.vmem %s1, 323
  %511 = vst.msk [vmem:[%s510] ss:$8 sm:$0xf0] %vm507, %v506
  %s512 = scalar_lea.vmem %s0, 48
  %v513 = vld.sshfl [vmem:[%s512] sm:$0xff pattern:$0xb3a29180]
  %514 = vrot.lane.b32.xlu0 %v513, 80
  %v515 = vpop.permute.xlu0 %514
  %vm516 = vcmask 130048
  %s517 = scalar_lea.vmem %s1, 387
  %518 = vst.msk [vmem:[%s517] ss:$8 sm:$0xf] %vm516, %v515
  %s519 = scalar_lea.vmem %s1, 387
  %520 = vst.msk [vmem:[%s519] ss:$8 sm:$0xf0] %vm516, %v515
  %s521 = scalar_lea.vmem %s0, 52
  %v522 = vld.sshfl [vmem:[%s521] sm:$0xff pattern:$0xb3a29180]
  %523 = vrot.lane.b32.xlu0 %v522, 80
  %v524 = vpop.permute.xlu0 %523
  %vm525 = vcmask 130048
  %s526 = scalar_lea.vmem %s1, 451
  %527 = vst.msk [vmem:[%s526] ss:$8 sm:$0xf] %vm525, %v524
  %s528 = scalar_lea.vmem %s1, 451
  %529 = vst.msk [vmem:[%s528] ss:$8 sm:$0xf0] %vm525, %v524
  %s530 = scalar_lea.vmem %s0, 64
  %v531 = vld.sshfl [vmem:[%s530] sm:$0xff pattern:$0xb3a29180]
  %532 = vrot.lane.b32.xlu0 %v531, 80
  %v533 = vpop.permute.xlu0 %532
  %vm534 = vcmask 130048
  %s535 = scalar_lea.vmem %s1, 515
  %536 = vst.msk [vmem:[%s535] ss:$8 sm:$0xf] %vm534, %v533
  %s537 = scalar_lea.vmem %s1, 515
  %538 = vst.msk [vmem:[%s537] ss:$8 sm:$0xf0] %vm534, %v533
  %s539 = scalar_lea.vmem %s0, 68
  %v540 = vld.sshfl [vmem:[%s539] sm:$0xff pattern:$0xb3a29180]
  %541 = vrot.lane.b32.xlu0 %v540, 80
  %v542 = vpop.permute.xlu0 %541
  %vm543 = vcmask 130048
  %s544 = scalar_lea.vmem %s1, 579
  %545 = vst.msk [vmem:[%s544] ss:$8 sm:$0xf] %vm543, %v542
  %s546 = scalar_lea.vmem %s1, 579
  %547 = vst.msk [vmem:[%s546] ss:$8 sm:$0xf0] %vm543, %v542
  %s548 = scalar_lea.vmem %s0, 80
  %v549 = vld.sshfl [vmem:[%s548] sm:$0xff pattern:$0xb3a29180]
  %550 = vrot.lane.b32.xlu0 %v549, 80
  %v551 = vpop.permute.xlu0 %550
  %vm552 = vcmask 130048
  %s553 = scalar_lea.vmem %s1, 643
  %554 = vst.msk [vmem:[%s553] ss:$8 sm:$0xf] %vm552, %v551
  %s555 = scalar_lea.vmem %s1, 643
  %556 = vst.msk [vmem:[%s555] ss:$8 sm:$0xf0] %vm552, %v551
  %s557 = scalar_lea.vmem %s0, 84
  %v558 = vld.sshfl [vmem:[%s557] sm:$0xff pattern:$0xb3a29180]
  %559 = vrot.lane.b32.xlu0 %v558, 80
  %v560 = vpop.permute.xlu0 %559
  %vm561 = vcmask 130048
  %s562 = scalar_lea.vmem %s1, 707
  %563 = vst.msk [vmem:[%s562] ss:$8 sm:$0xf] %vm561, %v560
  %s564 = scalar_lea.vmem %s1, 707
  %565 = vst.msk [vmem:[%s564] ss:$8 sm:$0xf0] %vm561, %v560
  %s566 = scalar_lea.vmem %s0, 96
  %v567 = vld.sshfl [vmem:[%s566] sm:$0xff pattern:$0xb3a29180]
  %568 = vrot.lane.b32.xlu0 %v567, 80
  %v569 = vpop.permute.xlu0 %568
  %vm570 = vcmask 130048
  %s571 = scalar_lea.vmem %s1, 771
  %572 = vst.msk [vmem:[%s571] ss:$8 sm:$0xf] %vm570, %v569
  %s573 = scalar_lea.vmem %s1, 771
  %574 = vst.msk [vmem:[%s573] ss:$8 sm:$0xf0] %vm570, %v569
  %s575 = scalar_lea.vmem %s0, 100
  %v576 = vld.sshfl [vmem:[%s575] sm:$0xff pattern:$0xb3a29180]
  %577 = vrot.lane.b32.xlu0 %v576, 80
  %v578 = vpop.permute.xlu0 %577
  %vm579 = vcmask 130048
  %s580 = scalar_lea.vmem %s1, 835
  %581 = vst.msk [vmem:[%s580] ss:$8 sm:$0xf] %vm579, %v578
  %s582 = scalar_lea.vmem %s1, 835
  %583 = vst.msk [vmem:[%s582] ss:$8 sm:$0xf0] %vm579, %v578
  %s584 = scalar_lea.vmem %s0, 112
  %v585 = vld.sshfl [vmem:[%s584] sm:$0xff pattern:$0xb3a29180]
  %586 = vrot.lane.b32.xlu0 %v585, 80
  %v587 = vpop.permute.xlu0 %586
  %vm588 = vcmask 130048
  %s589 = scalar_lea.vmem %s1, 899
  %590 = vst.msk [vmem:[%s589] ss:$8 sm:$0xf] %vm588, %v587
  %s591 = scalar_lea.vmem %s1, 899
  %592 = vst.msk [vmem:[%s591] ss:$8 sm:$0xf0] %vm588, %v587
  %s593 = scalar_lea.vmem %s0, 116
  %v594 = vld.sshfl [vmem:[%s593] sm:$0xff pattern:$0xb3a29180]
  %595 = vrot.lane.b32.xlu0 %v594, 80
  %v596 = vpop.permute.xlu0 %595
  %vm597 = vcmask 130048
  %s598 = scalar_lea.vmem %s1, 963
  %599 = vst.msk [vmem:[%s598] ss:$8 sm:$0xf] %vm597, %v596
  %s600 = scalar_lea.vmem %s1, 963
  %601 = vst.msk [vmem:[%s600] ss:$8 sm:$0xf0] %vm597, %v596
  %v602 = vld.sshfl [vmem:[%s0] sm:$0xff pattern:$0xb3a29180]
  %603 = vrot.lane.b32.xlu0 %v602, 64
  %v604 = vpop.permute.xlu0 %603
  %vm605 = vcmask 130048
  %s606 = scalar_lea.vmem %s1, 4
  %607 = vst.msk [vmem:[%s606] ss:$8 sm:$0xf] %vm605, %v604
  %s608 = scalar_lea.vmem %s1, 4
  %609 = vst.msk [vmem:[%s608] ss:$8 sm:$0xf0] %vm605, %v604
  %s610 = scalar_lea.vmem %s0, 4
  %v611 = vld.sshfl [vmem:[%s610] sm:$0xff pattern:$0xb3a29180]
  %612 = vrot.lane.b32.xlu0 %v611, 64
  %v613 = vpop.permute.xlu0 %612
  %vm614 = vcmask 130048
  %s615 = scalar_lea.vmem %s1, 68
  %616 = vst.msk [vmem:[%s615] ss:$8 sm:$0xf] %vm614, %v613
  %s617 = scalar_lea.vmem %s1, 68
  %618 = vst.msk [vmem:[%s617] ss:$8 sm:$0xf0] %vm614, %v613
  %s619 = scalar_lea.vmem %s0, 16
  %v620 = vld.sshfl [vmem:[%s619] sm:$0xff pattern:$0xb3a29180]
  %621 = vrot.lane.b32.xlu0 %v620, 64
  %v622 = vpop.permute.xlu0 %621
  %vm623 = vcmask 130048
  %s624 = scalar_lea.vmem %s1, 132
  %625 = vst.msk [vmem:[%s624] ss:$8 sm:$0xf] %vm623, %v622
  %s626 = scalar_lea.vmem %s1, 132
  %627 = vst.msk [vmem:[%s626] ss:$8 sm:$0xf0] %vm623, %v622
  %s628 = scalar_lea.vmem %s0, 20
  %v629 = vld.sshfl [vmem:[%s628] sm:$0xff pattern:$0xb3a29180]
  %630 = vrot.lane.b32.xlu0 %v629, 64
  %v631 = vpop.permute.xlu0 %630
  %vm632 = vcmask 130048
  %s633 = scalar_lea.vmem %s1, 196
  %634 = vst.msk [vmem:[%s633] ss:$8 sm:$0xf] %vm632, %v631
  %s635 = scalar_lea.vmem %s1, 196
  %636 = vst.msk [vmem:[%s635] ss:$8 sm:$0xf0] %vm632, %v631
  %s637 = scalar_lea.vmem %s0, 32
  %v638 = vld.sshfl [vmem:[%s637] sm:$0xff pattern:$0xb3a29180]
  %639 = vrot.lane.b32.xlu0 %v638, 64
  %v640 = vpop.permute.xlu0 %639
  %vm641 = vcmask 130048
  %s642 = scalar_lea.vmem %s1, 260
  %643 = vst.msk [vmem:[%s642] ss:$8 sm:$0xf] %vm641, %v640
  %s644 = scalar_lea.vmem %s1, 260
  %645 = vst.msk [vmem:[%s644] ss:$8 sm:$0xf0] %vm641, %v640
  %s646 = scalar_lea.vmem %s0, 36
  %v647 = vld.sshfl [vmem:[%s646] sm:$0xff pattern:$0xb3a29180]
  %648 = vrot.lane.b32.xlu0 %v647, 64
  %v649 = vpop.permute.xlu0 %648
  %vm650 = vcmask 130048
  %s651 = scalar_lea.vmem %s1, 324
  %652 = vst.msk [vmem:[%s651] ss:$8 sm:$0xf] %vm650, %v649
  %s653 = scalar_lea.vmem %s1, 324
  %654 = vst.msk [vmem:[%s653] ss:$8 sm:$0xf0] %vm650, %v649
  %s655 = scalar_lea.vmem %s0, 48
  %v656 = vld.sshfl [vmem:[%s655] sm:$0xff pattern:$0xb3a29180]
  %657 = vrot.lane.b32.xlu0 %v656, 64
  %v658 = vpop.permute.xlu0 %657
  %vm659 = vcmask 130048
  %s660 = scalar_lea.vmem %s1, 388
  %661 = vst.msk [vmem:[%s660] ss:$8 sm:$0xf] %vm659, %v658
  %s662 = scalar_lea.vmem %s1, 388
  %663 = vst.msk [vmem:[%s662] ss:$8 sm:$0xf0] %vm659, %v658
  %s664 = scalar_lea.vmem %s0, 52
  %v665 = vld.sshfl [vmem:[%s664] sm:$0xff pattern:$0xb3a29180]
  %666 = vrot.lane.b32.xlu0 %v665, 64
  %v667 = vpop.permute.xlu0 %666
  %vm668 = vcmask 130048
  %s669 = scalar_lea.vmem %s1, 452
  %670 = vst.msk [vmem:[%s669] ss:$8 sm:$0xf] %vm668, %v667
  %s671 = scalar_lea.vmem %s1, 452
  %672 = vst.msk [vmem:[%s671] ss:$8 sm:$0xf0] %vm668, %v667
  %s673 = scalar_lea.vmem %s0, 64
  %v674 = vld.sshfl [vmem:[%s673] sm:$0xff pattern:$0xb3a29180]
  %675 = vrot.lane.b32.xlu0 %v674, 64
  %v676 = vpop.permute.xlu0 %675
  %vm677 = vcmask 130048
  %s678 = scalar_lea.vmem %s1, 516
  %679 = vst.msk [vmem:[%s678] ss:$8 sm:$0xf] %vm677, %v676
  %s680 = scalar_lea.vmem %s1, 516
  %681 = vst.msk [vmem:[%s680] ss:$8 sm:$0xf0] %vm677, %v676
  %s682 = scalar_lea.vmem %s0, 68
  %v683 = vld.sshfl [vmem:[%s682] sm:$0xff pattern:$0xb3a29180]
  %684 = vrot.lane.b32.xlu0 %v683, 64
  %v685 = vpop.permute.xlu0 %684
  %vm686 = vcmask 130048
  %s687 = scalar_lea.vmem %s1, 580
  %688 = vst.msk [vmem:[%s687] ss:$8 sm:$0xf] %vm686, %v685
  %s689 = scalar_lea.vmem %s1, 580
  %690 = vst.msk [vmem:[%s689] ss:$8 sm:$0xf0] %vm686, %v685
  %s691 = scalar_lea.vmem %s0, 80
  %v692 = vld.sshfl [vmem:[%s691] sm:$0xff pattern:$0xb3a29180]
  %693 = vrot.lane.b32.xlu0 %v692, 64
  %v694 = vpop.permute.xlu0 %693
  %vm695 = vcmask 130048
  %s696 = scalar_lea.vmem %s1, 644
  %697 = vst.msk [vmem:[%s696] ss:$8 sm:$0xf] %vm695, %v694
  %s698 = scalar_lea.vmem %s1, 644
  %699 = vst.msk [vmem:[%s698] ss:$8 sm:$0xf0] %vm695, %v694
  %s700 = scalar_lea.vmem %s0, 84
  %v701 = vld.sshfl [vmem:[%s700] sm:$0xff pattern:$0xb3a29180]
  %702 = vrot.lane.b32.xlu0 %v701, 64
  %v703 = vpop.permute.xlu0 %702
  %vm704 = vcmask 130048
  %s705 = scalar_lea.vmem %s1, 708
  %706 = vst.msk [vmem:[%s705] ss:$8 sm:$0xf] %vm704, %v703
  %s707 = scalar_lea.vmem %s1, 708
  %708 = vst.msk [vmem:[%s707] ss:$8 sm:$0xf0] %vm704, %v703
  %s709 = scalar_lea.vmem %s0, 96
  %v710 = vld.sshfl [vmem:[%s709] sm:$0xff pattern:$0xb3a29180]
  %711 = vrot.lane.b32.xlu0 %v710, 64
  %v712 = vpop.permute.xlu0 %711
  %vm713 = vcmask 130048
  %s714 = scalar_lea.vmem %s1, 772
  %715 = vst.msk [vmem:[%s714] ss:$8 sm:$0xf] %vm713, %v712
  %s716 = scalar_lea.vmem %s1, 772
  %717 = vst.msk [vmem:[%s716] ss:$8 sm:$0xf0] %vm713, %v712
  %s718 = scalar_lea.vmem %s0, 100
  %v719 = vld.sshfl [vmem:[%s718] sm:$0xff pattern:$0xb3a29180]
  %720 = vrot.lane.b32.xlu0 %v719, 64
  %v721 = vpop.permute.xlu0 %720
  %vm722 = vcmask 130048
  %s723 = scalar_lea.vmem %s1, 836
  %724 = vst.msk [vmem:[%s723] ss:$8 sm:$0xf] %vm722, %v721
  %s725 = scalar_lea.vmem %s1, 836
  %726 = vst.msk [vmem:[%s725] ss:$8 sm:$0xf0] %vm722, %v721
  %s727 = scalar_lea.vmem %s0, 112
  %v728 = vld.sshfl [vmem:[%s727] sm:$0xff pattern:$0xb3a29180]
  %729 = vrot.lane.b32.xlu0 %v728, 64
  %v730 = vpop.permute.xlu0 %729
  %vm731 = vcmask 130048
  %s732 = scalar_lea.vmem %s1, 900
  %733 = vst.msk [vmem:[%s732] ss:$8 sm:$0xf] %vm731, %v730
  %s734 = scalar_lea.vmem %s1, 900
  %735 = vst.msk [vmem:[%s734] ss:$8 sm:$0xf0] %vm731, %v730
  %s736 = scalar_lea.vmem %s0, 116
  %v737 = vld.sshfl [vmem:[%s736] sm:$0xff pattern:$0xb3a29180]
  %738 = vrot.lane.b32.xlu0 %v737, 64
  %v739 = vpop.permute.xlu0 %738
  %vm740 = vcmask 130048
  %s741 = scalar_lea.vmem %s1, 964
  %742 = vst.msk [vmem:[%s741] ss:$8 sm:$0xf] %vm740, %v739
  %s743 = scalar_lea.vmem %s1, 964
  %744 = vst.msk [vmem:[%s743] ss:$8 sm:$0xf0] %vm740, %v739
  %v745 = vld.sshfl [vmem:[%s0] sm:$0xff pattern:$0xb3a29180]
  %746 = vrot.lane.b32.xlu0 %v745, 48
  %v747 = vpop.permute.xlu0 %746
  %vm748 = vcmask 130048
  %s749 = scalar_lea.vmem %s1, 5
  %750 = vst.msk [vmem:[%s749] ss:$8 sm:$0xf] %vm748, %v747
  %s751 = scalar_lea.vmem %s1, 5
  %752 = vst.msk [vmem:[%s751] ss:$8 sm:$0xf0] %vm748, %v747
  %s753 = scalar_lea.vmem %s0, 4
  %v754 = vld.sshfl [vmem:[%s753] sm:$0xff pattern:$0xb3a29180]
  %755 = vrot.lane.b32.xlu0 %v754, 48
  %v756 = vpop.permute.xlu0 %755
  %vm757 = vcmask 130048
  %s758 = scalar_lea.vmem %s1, 69
  %759 = vst.msk [vmem:[%s758] ss:$8 sm:$0xf] %vm757, %v756
  %s760 = scalar_lea.vmem %s1, 69
  %761 = vst.msk [vmem:[%s760] ss:$8 sm:$0xf0] %vm757, %v756
  %s762 = scalar_lea.vmem %s0, 16
  %v763 = vld.sshfl [vmem:[%s762] sm:$0xff pattern:$0xb3a29180]
  %764 = vrot.lane.b32.xlu0 %v763, 48
  %v765 = vpop.permute.xlu0 %764
  %vm766 = vcmask 130048
  %s767 = scalar_lea.vmem %s1, 133
  %768 = vst.msk [vmem:[%s767] ss:$8 sm:$0xf] %vm766, %v765
  %s769 = scalar_lea.vmem %s1, 133
  %770 = vst.msk [vmem:[%s769] ss:$8 sm:$0xf0] %vm766, %v765
  %s771 = scalar_lea.vmem %s0, 20
  %v772 = vld.sshfl [vmem:[%s771] sm:$0xff pattern:$0xb3a29180]
  %773 = vrot.lane.b32.xlu0 %v772, 48
  %v774 = vpop.permute.xlu0 %773
  %vm775 = vcmask 130048
  %s776 = scalar_lea.vmem %s1, 197
  %777 = vst.msk [vmem:[%s776] ss:$8 sm:$0xf] %vm775, %v774
  %s778 = scalar_lea.vmem %s1, 197
  %779 = vst.msk [vmem:[%s778] ss:$8 sm:$0xf0] %vm775, %v774
  %s780 = scalar_lea.vmem %s0, 32
  %v781 = vld.sshfl [vmem:[%s780] sm:$0xff pattern:$0xb3a29180]
  %782 = vrot.lane.b32.xlu0 %v781, 48
  %v783 = vpop.permute.xlu0 %782
  %vm784 = vcmask 130048
  %s785 = scalar_lea.vmem %s1, 261
  %786 = vst.msk [vmem:[%s785] ss:$8 sm:$0xf] %vm784, %v783
  %s787 = scalar_lea.vmem %s1, 261
  %788 = vst.msk [vmem:[%s787] ss:$8 sm:$0xf0] %vm784, %v783
  %s789 = scalar_lea.vmem %s0, 36
  %v790 = vld.sshfl [vmem:[%s789] sm:$0xff pattern:$0xb3a29180]
  %791 = vrot.lane.b32.xlu0 %v790, 48
  %v792 = vpop.permute.xlu0 %791
  %vm793 = vcmask 130048
  %s794 = scalar_lea.vmem %s1, 325
  %795 = vst.msk [vmem:[%s794] ss:$8 sm:$0xf] %vm793, %v792
  %s796 = scalar_lea.vmem %s1, 325
  %797 = vst.msk [vmem:[%s796] ss:$8 sm:$0xf0] %vm793, %v792
  %s798 = scalar_lea.vmem %s0, 48
  %v799 = vld.sshfl [vmem:[%s798] sm:$0xff pattern:$0xb3a29180]
  %800 = vrot.lane.b32.xlu0 %v799, 48
  %v801 = vpop.permute.xlu0 %800
  %vm802 = vcmask 130048
  %s803 = scalar_lea.vmem %s1, 389
  %804 = vst.msk [vmem:[%s803] ss:$8 sm:$0xf] %vm802, %v801
  %s805 = scalar_lea.vmem %s1, 389
  %806 = vst.msk [vmem:[%s805] ss:$8 sm:$0xf0] %vm802, %v801
  %s807 = scalar_lea.vmem %s0, 52
  %v808 = vld.sshfl [vmem:[%s807] sm:$0xff pattern:$0xb3a29180]
  %809 = vrot.lane.b32.xlu0 %v808, 48
  %v810 = vpop.permute.xlu0 %809
  %vm811 = vcmask 130048
  %s812 = scalar_lea.vmem %s1, 453
  %813 = vst.msk [vmem:[%s812] ss:$8 sm:$0xf] %vm811, %v810
  %s814 = scalar_lea.vmem %s1, 453
  %815 = vst.msk [vmem:[%s814] ss:$8 sm:$0xf0] %vm811, %v810
  %s816 = scalar_lea.vmem %s0, 64
  %v817 = vld.sshfl [vmem:[%s816] sm:$0xff pattern:$0xb3a29180]
  %818 = vrot.lane.b32.xlu0 %v817, 48
  %v819 = vpop.permute.xlu0 %818
  %vm820 = vcmask 130048
  %s821 = scalar_lea.vmem %s1, 517
  %822 = vst.msk [vmem:[%s821] ss:$8 sm:$0xf] %vm820, %v819
  %s823 = scalar_lea.vmem %s1, 517
  %824 = vst.msk [vmem:[%s823] ss:$8 sm:$0xf0] %vm820, %v819
  %s825 = scalar_lea.vmem %s0, 68
  %v826 = vld.sshfl [vmem:[%s825] sm:$0xff pattern:$0xb3a29180]
  %827 = vrot.lane.b32.xlu0 %v826, 48
  %v828 = vpop.permute.xlu0 %827
  %vm829 = vcmask 130048
  %s830 = scalar_lea.vmem %s1, 581
  %831 = vst.msk [vmem:[%s830] ss:$8 sm:$0xf] %vm829, %v828
  %s832 = scalar_lea.vmem %s1, 581
  %833 = vst.msk [vmem:[%s832] ss:$8 sm:$0xf0] %vm829, %v828
  %s834 = scalar_lea.vmem %s0, 80
  %v835 = vld.sshfl [vmem:[%s834] sm:$0xff pattern:$0xb3a29180]
  %836 = vrot.lane.b32.xlu0 %v835, 48
  %v837 = vpop.permute.xlu0 %836
  %vm838 = vcmask 130048
  %s839 = scalar_lea.vmem %s1, 645
  %840 = vst.msk [vmem:[%s839] ss:$8 sm:$0xf] %vm838, %v837
  %s841 = scalar_lea.vmem %s1, 645
  %842 = vst.msk [vmem:[%s841] ss:$8 sm:$0xf0] %vm838, %v837
  %s843 = scalar_lea.vmem %s0, 84
  %v844 = vld.sshfl [vmem:[%s843] sm:$0xff pattern:$0xb3a29180]
  %845 = vrot.lane.b32.xlu0 %v844, 48
  %v846 = vpop.permute.xlu0 %845
  %vm847 = vcmask 130048
  %s848 = scalar_lea.vmem %s1, 709
  %849 = vst.msk [vmem:[%s848] ss:$8 sm:$0xf] %vm847, %v846
  %s850 = scalar_lea.vmem %s1, 709
  %851 = vst.msk [vmem:[%s850] ss:$8 sm:$0xf0] %vm847, %v846
  %s852 = scalar_lea.vmem %s0, 96
  %v853 = vld.sshfl [vmem:[%s852] sm:$0xff pattern:$0xb3a29180]
  %854 = vrot.lane.b32.xlu0 %v853, 48
  %v855 = vpop.permute.xlu0 %854
  %vm856 = vcmask 130048
  %s857 = scalar_lea.vmem %s1, 773
  %858 = vst.msk [vmem:[%s857] ss:$8 sm:$0xf] %vm856, %v855
  %s859 = scalar_lea.vmem %s1, 773
  %860 = vst.msk [vmem:[%s859] ss:$8 sm:$0xf0] %vm856, %v855
  %s861 = scalar_lea.vmem %s0, 100
  %v862 = vld.sshfl [vmem:[%s861] sm:$0xff pattern:$0xb3a29180]
  %863 = vrot.lane.b32.xlu0 %v862, 48
  %v864 = vpop.permute.xlu0 %863
  %vm865 = vcmask 130048
  %s866 = scalar_lea.vmem %s1, 837
  %867 = vst.msk [vmem:[%s866] ss:$8 sm:$0xf] %vm865, %v864
  %s868 = scalar_lea.vmem %s1, 837
  %869 = vst.msk [vmem:[%s868] ss:$8 sm:$0xf0] %vm865, %v864
  %s870 = scalar_lea.vmem %s0, 112
  %v871 = vld.sshfl [vmem:[%s870] sm:$0xff pattern:$0xb3a29180]
  %872 = vrot.lane.b32.xlu0 %v871, 48
  %v873 = vpop.permute.xlu0 %872
  %vm874 = vcmask 130048
  %s875 = scalar_lea.vmem %s1, 901
  %876 = vst.msk [vmem:[%s875] ss:$8 sm:$0xf] %vm874, %v873
  %s877 = scalar_lea.vmem %s1, 901
  %878 = vst.msk [vmem:[%s877] ss:$8 sm:$0xf0] %vm874, %v873
  %s879 = scalar_lea.vmem %s0, 116
  %v880 = vld.sshfl [vmem:[%s879] sm:$0xff pattern:$0xb3a29180]
  %881 = vrot.lane.b32.xlu0 %v880, 48
  %v882 = vpop.permute.xlu0 %881
  %vm883 = vcmask 130048
  %s884 = scalar_lea.vmem %s1, 965
  %885 = vst.msk [vmem:[%s884] ss:$8 sm:$0xf] %vm883, %v882
  %s886 = scalar_lea.vmem %s1, 965
  %887 = vst.msk [vmem:[%s886] ss:$8 sm:$0xf0] %vm883, %v882
  %v888 = vld.sshfl [vmem:[%s0] sm:$0xff pattern:$0xb3a29180]
  %889 = vrot.lane.b32.xlu0 %v888, 32
  %v890 = vpop.permute.xlu0 %889
  %vm891 = vcmask 130048
  %s892 = scalar_lea.vmem %s1, 6
  %893 = vst.msk [vmem:[%s892] ss:$8 sm:$0xf] %vm891, %v890
  %s894 = scalar_lea.vmem %s1, 6
  %895 = vst.msk [vmem:[%s894] ss:$8 sm:$0xf0] %vm891, %v890
  %s896 = scalar_lea.vmem %s0, 4
  %v897 = vld.sshfl [vmem:[%s896] sm:$0xff pattern:$0xb3a29180]
  %898 = vrot.lane.b32.xlu0 %v897, 32
  %v899 = vpop.permute.xlu0 %898
  %vm900 = vcmask 130048
  %s901 = scalar_lea.vmem %s1, 70
  %902 = vst.msk [vmem:[%s901] ss:$8 sm:$0xf] %vm900, %v899
  %s903 = scalar_lea.vmem %s1, 70
  %904 = vst.msk [vmem:[%s903] ss:$8 sm:$0xf0] %vm900, %v899
  %s905 = scalar_lea.vmem %s0, 16
  %v906 = vld.sshfl [vmem:[%s905] sm:$0xff pattern:$0xb3a29180]
  %907 = vrot.lane.b32.xlu0 %v906, 32
  %v908 = vpop.permute.xlu0 %907
  %vm909 = vcmask 130048
  %s910 = scalar_lea.vmem %s1, 134
  %911 = vst.msk [vmem:[%s910] ss:$8 sm:$0xf] %vm909, %v908
  %s912 = scalar_lea.vmem %s1, 134
  %913 = vst.msk [vmem:[%s912] ss:$8 sm:$0xf0] %vm909, %v908
  %s914 = scalar_lea.vmem %s0, 20
  %v915 = vld.sshfl [vmem:[%s914] sm:$0xff pattern:$0xb3a29180]
  %916 = vrot.lane.b32.xlu0 %v915, 32
  %v917 = vpop.permute.xlu0 %916
  %vm918 = vcmask 130048
  %s919 = scalar_lea.vmem %s1, 198
  %920 = vst.msk [vmem:[%s919] ss:$8 sm:$0xf] %vm918, %v917
  %s921 = scalar_lea.vmem %s1, 198
  %922 = vst.msk [vmem:[%s921] ss:$8 sm:$0xf0] %vm918, %v917
  %s923 = scalar_lea.vmem %s0, 32
  %v924 = vld.sshfl [vmem:[%s923] sm:$0xff pattern:$0xb3a29180]
  %925 = vrot.lane.b32.xlu0 %v924, 32
  %v926 = vpop.permute.xlu0 %925
  %vm927 = vcmask 130048
  %s928 = scalar_lea.vmem %s1, 262
  %929 = vst.msk [vmem:[%s928] ss:$8 sm:$0xf] %vm927, %v926
  %s930 = scalar_lea.vmem %s1, 262
  %931 = vst.msk [vmem:[%s930] ss:$8 sm:$0xf0] %vm927, %v926
  %s932 = scalar_lea.vmem %s0, 36
  %v933 = vld.sshfl [vmem:[%s932] sm:$0xff pattern:$0xb3a29180]
  %934 = vrot.lane.b32.xlu0 %v933, 32
  %v935 = vpop.permute.xlu0 %934
  %vm936 = vcmask 130048
  %s937 = scalar_lea.vmem %s1, 326
  %938 = vst.msk [vmem:[%s937] ss:$8 sm:$0xf] %vm936, %v935
  %s939 = scalar_lea.vmem %s1, 326
  %940 = vst.msk [vmem:[%s939] ss:$8 sm:$0xf0] %vm936, %v935
  %s941 = scalar_lea.vmem %s0, 48
  %v942 = vld.sshfl [vmem:[%s941] sm:$0xff pattern:$0xb3a29180]
  %943 = vrot.lane.b32.xlu0 %v942, 32
  %v944 = vpop.permute.xlu0 %943
  %vm945 = vcmask 130048
  %s946 = scalar_lea.vmem %s1, 390
  %947 = vst.msk [vmem:[%s946] ss:$8 sm:$0xf] %vm945, %v944
  %s948 = scalar_lea.vmem %s1, 390
  %949 = vst.msk [vmem:[%s948] ss:$8 sm:$0xf0] %vm945, %v944
  %s950 = scalar_lea.vmem %s0, 52
  %v951 = vld.sshfl [vmem:[%s950] sm:$0xff pattern:$0xb3a29180]
  %952 = vrot.lane.b32.xlu0 %v951, 32
  %v953 = vpop.permute.xlu0 %952
  %vm954 = vcmask 130048
  %s955 = scalar_lea.vmem %s1, 454
  %956 = vst.msk [vmem:[%s955] ss:$8 sm:$0xf] %vm954, %v953
  %s957 = scalar_lea.vmem %s1, 454
  %958 = vst.msk [vmem:[%s957] ss:$8 sm:$0xf0] %vm954, %v953
  %s959 = scalar_lea.vmem %s0, 64
  %v960 = vld.sshfl [vmem:[%s959] sm:$0xff pattern:$0xb3a29180]
  %961 = vrot.lane.b32.xlu0 %v960, 32
  %v962 = vpop.permute.xlu0 %961
  %vm963 = vcmask 130048
  %s964 = scalar_lea.vmem %s1, 518
  %965 = vst.msk [vmem:[%s964] ss:$8 sm:$0xf] %vm963, %v962
  %s966 = scalar_lea.vmem %s1, 518
  %967 = vst.msk [vmem:[%s966] ss:$8 sm:$0xf0] %vm963, %v962
  %s968 = scalar_lea.vmem %s0, 68
  %v969 = vld.sshfl [vmem:[%s968] sm:$0xff pattern:$0xb3a29180]
  %970 = vrot.lane.b32.xlu0 %v969, 32
  %v971 = vpop.permute.xlu0 %970
  %vm972 = vcmask 130048
  %s973 = scalar_lea.vmem %s1, 582
  %974 = vst.msk [vmem:[%s973] ss:$8 sm:$0xf] %vm972, %v971
  %s975 = scalar_lea.vmem %s1, 582
  %976 = vst.msk [vmem:[%s975] ss:$8 sm:$0xf0] %vm972, %v971
  %s977 = scalar_lea.vmem %s0, 80
  %v978 = vld.sshfl [vmem:[%s977] sm:$0xff pattern:$0xb3a29180]
  %979 = vrot.lane.b32.xlu0 %v978, 32
  %v980 = vpop.permute.xlu0 %979
  %vm981 = vcmask 130048
  %s982 = scalar_lea.vmem %s1, 646
  %983 = vst.msk [vmem:[%s982] ss:$8 sm:$0xf] %vm981, %v980
  %s984 = scalar_lea.vmem %s1, 646
  %985 = vst.msk [vmem:[%s984] ss:$8 sm:$0xf0] %vm981, %v980
  %s986 = scalar_lea.vmem %s0, 84
  %v987 = vld.sshfl [vmem:[%s986] sm:$0xff pattern:$0xb3a29180]
  %988 = vrot.lane.b32.xlu0 %v987, 32
  %v989 = vpop.permute.xlu0 %988
  %vm990 = vcmask 130048
  %s991 = scalar_lea.vmem %s1, 710
  %992 = vst.msk [vmem:[%s991] ss:$8 sm:$0xf] %vm990, %v989
  %s993 = scalar_lea.vmem %s1, 710
  %994 = vst.msk [vmem:[%s993] ss:$8 sm:$0xf0] %vm990, %v989
  %s995 = scalar_lea.vmem %s0, 96
  %v996 = vld.sshfl [vmem:[%s995] sm:$0xff pattern:$0xb3a29180]
  %997 = vrot.lane.b32.xlu0 %v996, 32
  %v998 = vpop.permute.xlu0 %997
  %vm999 = vcmask 130048
  %s1000 = scalar_lea.vmem %s1, 774
  %1001 = vst.msk [vmem:[%s1000] ss:$8 sm:$0xf] %vm999, %v998
  %s1002 = scalar_lea.vmem %s1, 774
  %1003 = vst.msk [vmem:[%s1002] ss:$8 sm:$0xf0] %vm999, %v998
  %s1004 = scalar_lea.vmem %s0, 100
  %v1005 = vld.sshfl [vmem:[%s1004] sm:$0xff pattern:$0xb3a29180]
  %1006 = vrot.lane.b32.xlu0 %v1005, 32
  %v1007 = vpop.permute.xlu0 %1006
  %vm1008 = vcmask 130048
  %s1009 = scalar_lea.vmem %s1, 838
  %1010 = vst.msk [vmem:[%s1009] ss:$8 sm:$0xf] %vm1008, %v1007
  %s1011 = scalar_lea.vmem %s1, 838
  %1012 = vst.msk [vmem:[%s1011] ss:$8 sm:$0xf0] %vm1008, %v1007
  %s1013 = scalar_lea.vmem %s0, 112
  %v1014 = vld.sshfl [vmem:[%s1013] sm:$0xff pattern:$0xb3a29180]
  %1015 = vrot.lane.b32.xlu0 %v1014, 32
  %v1016 = vpop.permute.xlu0 %1015
  %vm1017 = vcmask 130048
  %s1018 = scalar_lea.vmem %s1, 902
  %1019 = vst.msk [vmem:[%s1018] ss:$8 sm:$0xf] %vm1017, %v1016
  %s1020 = scalar_lea.vmem %s1, 902
  %1021 = vst.msk [vmem:[%s1020] ss:$8 sm:$0xf0] %vm1017, %v1016
  %s1022 = scalar_lea.vmem %s0, 116
  %v1023 = vld.sshfl [vmem:[%s1022] sm:$0xff pattern:$0xb3a29180]
  %1024 = vrot.lane.b32.xlu0 %v1023, 32
  %v1025 = vpop.permute.xlu0 %1024
  %vm1026 = vcmask 130048
  %s1027 = scalar_lea.vmem %s1, 966
  %1028 = vst.msk [vmem:[%s1027] ss:$8 sm:$0xf] %vm1026, %v1025
  %s1029 = scalar_lea.vmem %s1, 966
  %1030 = vst.msk [vmem:[%s1029] ss:$8 sm:$0xf0] %vm1026, %v1025
  %v1031 = vld.sshfl [vmem:[%s0] sm:$0xff pattern:$0xb3a29180]
  %1032 = vrot.lane.b32.xlu0 %v1031, 16
  %v1033 = vpop.permute.xlu0 %1032
  %vm1034 = vcmask 130048
  %s1035 = scalar_lea.vmem %s1, 7
  %1036 = vst.msk [vmem:[%s1035] ss:$8 sm:$0xf] %vm1034, %v1033
  %s1037 = scalar_lea.vmem %s1, 7
  %1038 = vst.msk [vmem:[%s1037] ss:$8 sm:$0xf0] %vm1034, %v1033
  %s1039 = scalar_lea.vmem %s0, 4
  %v1040 = vld.sshfl [vmem:[%s1039] sm:$0xff pattern:$0xb3a29180]
  %1041 = vrot.lane.b32.xlu0 %v1040, 16
  %v1042 = vpop.permute.xlu0 %1041
  %vm1043 = vcmask 130048
  %s1044 = scalar_lea.vmem %s1, 71
  %1045 = vst.msk [vmem:[%s1044] ss:$8 sm:$0xf] %vm1043, %v1042
  %s1046 = scalar_lea.vmem %s1, 71
  %1047 = vst.msk [vmem:[%s1046] ss:$8 sm:$0xf0] %vm1043, %v1042
  %s1048 = scalar_lea.vmem %s0, 16
  %v1049 = vld.sshfl [vmem:[%s1048] sm:$0xff pattern:$0xb3a29180]
  %1050 = vrot.lane.b32.xlu0 %v1049, 16
  %v1051 = vpop.permute.xlu0 %1050
  %vm1052 = vcmask 130048
  %s1053 = scalar_lea.vmem %s1, 135
  %1054 = vst.msk [vmem:[%s1053] ss:$8 sm:$0xf] %vm1052, %v1051
  %s1055 = scalar_lea.vmem %s1, 135
  %1056 = vst.msk [vmem:[%s1055] ss:$8 sm:$0xf0] %vm1052, %v1051
  %s1057 = scalar_lea.vmem %s0, 20
  %v1058 = vld.sshfl [vmem:[%s1057] sm:$0xff pattern:$0xb3a29180]
  %1059 = vrot.lane.b32.xlu0 %v1058, 16
  %v1060 = vpop.permute.xlu0 %1059
  %vm1061 = vcmask 130048
  %s1062 = scalar_lea.vmem %s1, 199
  %1063 = vst.msk [vmem:[%s1062] ss:$8 sm:$0xf] %vm1061, %v1060
  %s1064 = scalar_lea.vmem %s1, 199
  %1065 = vst.msk [vmem:[%s1064] ss:$8 sm:$0xf0] %vm1061, %v1060
  %s1066 = scalar_lea.vmem %s0, 32
  %v1067 = vld.sshfl [vmem:[%s1066] sm:$0xff pattern:$0xb3a29180]
  %1068 = vrot.lane.b32.xlu0 %v1067, 16
  %v1069 = vpop.permute.xlu0 %1068
  %vm1070 = vcmask 130048
  %s1071 = scalar_lea.vmem %s1, 263
  %1072 = vst.msk [vmem:[%s1071] ss:$8 sm:$0xf] %vm1070, %v1069
  %s1073 = scalar_lea.vmem %s1, 263
  %1074 = vst.msk [vmem:[%s1073] ss:$8 sm:$0xf0] %vm1070, %v1069
  %s1075 = scalar_lea.vmem %s0, 36
  %v1076 = vld.sshfl [vmem:[%s1075] sm:$0xff pattern:$0xb3a29180]
  %1077 = vrot.lane.b32.xlu0 %v1076, 16
  %v1078 = vpop.permute.xlu0 %1077
  %vm1079 = vcmask 130048
  %s1080 = scalar_lea.vmem %s1, 327
  %1081 = vst.msk [vmem:[%s1080] ss:$8 sm:$0xf] %vm1079, %v1078
  %s1082 = scalar_lea.vmem %s1, 327
  %1083 = vst.msk [vmem:[%s1082] ss:$8 sm:$0xf0] %vm1079, %v1078
  %s1084 = scalar_lea.vmem %s0, 48
  %v1085 = vld.sshfl [vmem:[%s1084] sm:$0xff pattern:$0xb3a29180]
  %1086 = vrot.lane.b32.xlu0 %v1085, 16
  %v1087 = vpop.permute.xlu0 %1086
  %vm1088 = vcmask 130048
  %s1089 = scalar_lea.vmem %s1, 391
  %1090 = vst.msk [vmem:[%s1089] ss:$8 sm:$0xf] %vm1088, %v1087
  %s1091 = scalar_lea.vmem %s1, 391
  %1092 = vst.msk [vmem:[%s1091] ss:$8 sm:$0xf0] %vm1088, %v1087
  %s1093 = scalar_lea.vmem %s0, 52
  %v1094 = vld.sshfl [vmem:[%s1093] sm:$0xff pattern:$0xb3a29180]
  %1095 = vrot.lane.b32.xlu0 %v1094, 16
  %v1096 = vpop.permute.xlu0 %1095
  %vm1097 = vcmask 130048
  %s1098 = scalar_lea.vmem %s1, 455
  %1099 = vst.msk [vmem:[%s1098] ss:$8 sm:$0xf] %vm1097, %v1096
  %s1100 = scalar_lea.vmem %s1, 455
  %1101 = vst.msk [vmem:[%s1100] ss:$8 sm:$0xf0] %vm1097, %v1096
  %s1102 = scalar_lea.vmem %s0, 64
  %v1103 = vld.sshfl [vmem:[%s1102] sm:$0xff pattern:$0xb3a29180]
  %1104 = vrot.lane.b32.xlu0 %v1103, 16
  %v1105 = vpop.permute.xlu0 %1104
  %vm1106 = vcmask 130048
  %s1107 = scalar_lea.vmem %s1, 519
  %1108 = vst.msk [vmem:[%s1107] ss:$8 sm:$0xf] %vm1106, %v1105
  %s1109 = scalar_lea.vmem %s1, 519
  %1110 = vst.msk [vmem:[%s1109] ss:$8 sm:$0xf0] %vm1106, %v1105
  %s1111 = scalar_lea.vmem %s0, 68
  %v1112 = vld.sshfl [vmem:[%s1111] sm:$0xff pattern:$0xb3a29180]
  %1113 = vrot.lane.b32.xlu0 %v1112, 16
  %v1114 = vpop.permute.xlu0 %1113
  %vm1115 = vcmask 130048
  %s1116 = scalar_lea.vmem %s1, 583
  %1117 = vst.msk [vmem:[%s1116] ss:$8 sm:$0xf] %vm1115, %v1114
  %s1118 = scalar_lea.vmem %s1, 583
  %1119 = vst.msk [vmem:[%s1118] ss:$8 sm:$0xf0] %vm1115, %v1114
  %s1120 = scalar_lea.vmem %s0, 80
  %v1121 = vld.sshfl [vmem:[%s1120] sm:$0xff pattern:$0xb3a29180]
  %1122 = vrot.lane.b32.xlu0 %v1121, 16
  %v1123 = vpop.permute.xlu0 %1122
  %vm1124 = vcmask 130048
  %s1125 = scalar_lea.vmem %s1, 647
  %1126 = vst.msk [vmem:[%s1125] ss:$8 sm:$0xf] %vm1124, %v1123
  %s1127 = scalar_lea.vmem %s1, 647
  %1128 = vst.msk [vmem:[%s1127] ss:$8 sm:$0xf0] %vm1124, %v1123
  %s1129 = scalar_lea.vmem %s0, 84
  %v1130 = vld.sshfl [vmem:[%s1129] sm:$0xff pattern:$0xb3a29180]
  %1131 = vrot.lane.b32.xlu0 %v1130, 16
  %v1132 = vpop.permute.xlu0 %1131
  %vm1133 = vcmask 130048
  %s1134 = scalar_lea.vmem %s1, 711
  %1135 = vst.msk [vmem:[%s1134] ss:$8 sm:$0xf] %vm1133, %v1132
  %s1136 = scalar_lea.vmem %s1, 711
  %1137 = vst.msk [vmem:[%s1136] ss:$8 sm:$0xf0] %vm1133, %v1132
  %s1138 = scalar_lea.vmem %s0, 96
  %v1139 = vld.sshfl [vmem:[%s1138] sm:$0xff pattern:$0xb3a29180]
  %1140 = vrot.lane.b32.xlu0 %v1139, 16
  %v1141 = vpop.permute.xlu0 %1140
  %vm1142 = vcmask 130048
  %s1143 = scalar_lea.vmem %s1, 775
  %1144 = vst.msk [vmem:[%s1143] ss:$8 sm:$0xf] %vm1142, %v1141
  %s1145 = scalar_lea.vmem %s1, 775
  %1146 = vst.msk [vmem:[%s1145] ss:$8 sm:$0xf0] %vm1142, %v1141
  %s1147 = scalar_lea.vmem %s0, 100
  %v1148 = vld.sshfl [vmem:[%s1147] sm:$0xff pattern:$0xb3a29180]
  %1149 = vrot.lane.b32.xlu0 %v1148, 16
  %v1150 = vpop.permute.xlu0 %1149
  %vm1151 = vcmask 130048
  %s1152 = scalar_lea.vmem %s1, 839
  %1153 = vst.msk [vmem:[%s1152] ss:$8 sm:$0xf] %vm1151, %v1150
  %s1154 = scalar_lea.vmem %s1, 839
  %1155 = vst.msk [vmem:[%s1154] ss:$8 sm:$0xf0] %vm1151, %v1150
  %s1156 = scalar_lea.vmem %s0, 112
  %v1157 = vld.sshfl [vmem:[%s1156] sm:$0xff pattern:$0xb3a29180]
  %1158 = vrot.lane.b32.xlu0 %v1157, 16
  %v1159 = vpop.permute.xlu0 %1158
  %vm1160 = vcmask 130048
  %s1161 = scalar_lea.vmem %s1, 903
  %1162 = vst.msk [vmem:[%s1161] ss:$8 sm:$0xf] %vm1160, %v1159
  %s1163 = scalar_lea.vmem %s1, 903
  %1164 = vst.msk [vmem:[%s1163] ss:$8 sm:$0xf0] %vm1160, %v1159
  %s1165 = scalar_lea.vmem %s0, 116
  %v1166 = vld.sshfl [vmem:[%s1165] sm:$0xff pattern:$0xb3a29180]
  %1167 = vrot.lane.b32.xlu0 %v1166, 16
  %v1168 = vpop.permute.xlu0 %1167
  %vm1169 = vcmask 130048
  %s1170 = scalar_lea.vmem %s1, 967
  %1171 = vst.msk [vmem:[%s1170] ss:$8 sm:$0xf] %vm1169, %v1168
  %s1172 = scalar_lea.vmem %s1, 967
  %1173 = vst.msk [vmem:[%s1172] ss:$8 sm:$0xf0] %vm1169, %v1168

// kernel: c_vss_block_forward.1
$region0: #{c_vss_block_forward.1}
  #allocation0 [shape = 'u32[]', space=smem, size = 0x4, offset = 0x4, fixed_abs, tag = 'smem constant byte address 0x4 - core index']
  #allocation1 [shape = 'u32[144,128]{1,0:T(1,128)}', space=vmem, size = 0x12000, scoped, tag = 'internal scratch']
  #allocation2 [shape = 'f32[8,128]{1,0:T(8,128)}', space=vmem, size = 0x1000, scoped, tag = 'scratch operand']
  %s0 = inlined_call_operand.vmem [shape: f32[256,256], index: 0, kind: input, shape index: {}]
  %s1 = inlined_call_operand.vmem [shape: f32[256,256], index: 1, kind: input, shape index: {}]
  %s2 = inlined_call_operand.vmem [shape: f32[8,256], index: 2, kind: input, shape index: {}]
  %s3 = inlined_call_operand.vmem [shape: f32[1,256], index: 3, kind: input, shape index: {}]
  %s4 = inlined_call_operand.vmem [shape: f32[256,8,256], index: 4, kind: input, shape index: {}]
  %s5 = inlined_call_operand.vmem [shape: f32[256,8,256], index: 5, kind: input, shape index: {}]
  %s6 = inlined_call_operand.vmem [shape: f32[16,128], index: 6, kind: input, shape index: {}]
  %s7 = inlined_call_operand.vmem [shape: f32[16,128], index: 7, kind: input, shape index: {}]
  %s8 = inlined_call_operand.vmem [shape: f32[16,8,128], index: 8, kind: input, shape index: {}]
  %s9 = inlined_call_operand.vmem [shape: f32[8,128], index: 9, kind: input, shape index: {}]
  %s10 = inlined_call_operand.vmem [shape: f32[8,128], index: 10, kind: input, shape index: {}]
  %s11 = inlined_call_operand.vmem [shape: f32[256,256], index: 11, kind: output, shape index: {}]
  %s12 = sld [smem:[#allocation0]]
  $region274: #{c_vss_block_forward.1} parent=0
    _
  %s14 = ssub.s32 1, %s12
  %s15 = scalar_select 0, %s14, %s12
  $region1: #{c_vss_block_forward.1} parent=0
    #allocation3 [shape = 'u8[65536]{0}', space=vmem, size = 0x10000, scoped, tag = 'input window, operand 0']
    #allocation4 [shape = 'u8[65536]{0}', space=vmem, size = 0x10000, scoped, tag = 'input window, operand 1']
    #allocation5 [shape = 'u8[524288]{0}', space=vmem, size = 0x80000, scoped, tag = 'input window, operand 4']
    #allocation6 [shape = 'u8[524288]{0}', space=vmem, size = 0x80000, scoped, tag = 'input window, operand 5']
    #allocation7 [shape = 'u8[65536]{0}', space=vmem, size = 0x10000, scoped, tag = 'output window, operand 0']
    loop: start=0, step=1, limit=10
    $region2: #{c_vss_block_forward.1} parent=1 // loop_pre_header
      _
    $region3: #{c_vss_block_forward.1} parent=1 // loop_header
      %s17 = sphi 0, %s21
      %p18 = scmp.ge.s32.totalorder %s17, 10
      %s24 = sphi 0, %s36
      %s25 = sphi 0, %s32
      %s26 = sphi 0, %s24
      %s27 = sphi 0, %s25
      %s28 = sphi 0, %s26
      %s29 = sphi 0, %s27
      %s41 = sphi 0, %s43
      %s44 = sphi 0, %s41
      %s45 = sphi 0, %s44
      %s61 = sphi 0, %s45
      %s69 = sphi 0, %s71
      %s72 = sphi 0, %s69
      %s73 = sphi 0, %s72
      %s89 = sphi 0, %s73
      %s95 = sphi 0, %s97
      %s98 = sphi 0, %s95
      %s99 = sphi 0, %s98
      %s115 = sphi 0, %s99
      %s121 = sphi 0, %s123
      %s124 = sphi 0, %s121
      %s125 = sphi 0, %s124
      %s141 = sphi 0, %s125
      %s149 = sphi 0, %s151
      %s152 = sphi 0, %s149
      %s153 = sphi 0, %s152
      %s169 = sphi 0, %s153
      %s177 = sphi 0, %s179
      %s180 = sphi 0, %s177
      %s181 = sphi 0, %s180
      %s197 = sphi 0, %s181
      %s201 = sphi 0, %s201
      %s203 = sphi 0, %s201
      %s204 = sphi 0, %s203
      %s218 = sphi 0, %s204
      %s222 = sphi 0, %s222
      %s224 = sphi 0, %s222
      %s225 = sphi 0, %s224
      %s239 = sphi 0, %s225
      %s243 = sphi 0, %s243
      %s245 = sphi 0, %s243
      %s246 = sphi 0, %s245
      %s260 = sphi 0, %s246
      %s264 = sphi 0, %s264
      %s266 = sphi 0, %s264
      %s267 = sphi 0, %s266
      %s281 = sphi 0, %s267
      %s285 = sphi 0, %s285
      %s287 = sphi 0, %s285
      %s288 = sphi 0, %s287
      %s302 = sphi 0, %s288
      %s310 = sphi 0, %s312
      %s313 = sphi 0, %s310
      %s314 = sphi 0, %s313
      %s330 = sphi 0, %s314
    $region4: #{c_vss_block_forward.1} parent=1 // loop_header_branch
      %20 = sbr.rel (%p18) target = $region8
    $region5: #{c_vss_block_forward.1} parent=1 // loop_body
      %s22 = ssub.s32 %s17, 1
      %s23 = ssub.s32 %s17, 2
      %s30 = sadd.s32 1, %s25
      %p31 = scmp.ge.s32.totalorder %s30, 4
      %s32 = scalar_select %p31, 0, %s30
      %s33 = sadd.s32 1, %s24
      %s34 = scalar_select %p31, %s33, %s24
      %p35 = scmp.ge.s32.totalorder %s34, 2
      %s36 = scalar_select %p35, 0, %s34
      %s37 = ssub.s32 %s25, %s32
      %s38 = ssub.s32 %s24, %s36
      %s39 = sor.u32 %s37, %s38
      %p40 = scmp.eq.s32.totalorder %s39, 0
      %s42 = sadd.s32 %s41, 1
      %s43 = scalar_select %p40, %s41, %s42
      %p46 = pneg %p40
      %p47 = scmp.eq.s32.totalorder %s17, 7
      %p48 = por %p46, %p47
      %p49 = scmp.ne.s32.totalorder %s41, %s44
      %p50 = scmp.eq.s32.totalorder %s17, 0
      %p51 = por %p49, %p50
      %p52 = scmp.ne.s32.totalorder %s41, %s44
      %p53 = scmp.eq.s32.totalorder %s22, 7
      %p54 = por %p52, %p53
      %p55 = scmp.ne.s32.totalorder %s44, %s45
      %p56 = scmp.eq.s32.totalorder %s22, 0
      %p57 = por %p55, %p56
      %p58 = scmp.ne.s32.totalorder %s44, %s45
      %p59 = scmp.eq.s32.totalorder %s23, 7
      %p60 = por %p58, %p59
      %p62 = scmp.ne.s32.totalorder %s45, %s61
      %p63 = scmp.eq.s32.totalorder %s23, 0
      %p64 = por %p62, %p63
      %s65 = ssub.s32 %s25, %s32
      %s66 = ssub.s32 %s24, %s36
      %s67 = sor.u32 %s65, %s66
      %p68 = scmp.eq.s32.totalorder %s67, 0
      %s70 = sadd.s32 %s69, 1
      %s71 = scalar_select %p68, %s69, %s70
      %p74 = pneg %p68
      %p75 = scmp.eq.s32.totalorder %s17, 7
      %p76 = por %p74, %p75
      %p77 = scmp.ne.s32.totalorder %s69, %s72
      %p78 = scmp.eq.s32.totalorder %s17, 0
      %p79 = por %p77, %p78
      %p80 = scmp.ne.s32.totalorder %s69, %s72
      %p81 = scmp.eq.s32.totalorder %s22, 7
      %p82 = por %p80, %p81
      %p83 = scmp.ne.s32.totalorder %s72, %s73
      %p84 = scmp.eq.s32.totalorder %s22, 0
      %p85 = por %p83, %p84
      %p86 = scmp.ne.s32.totalorder %s72, %s73
      %p87 = scmp.eq.s32.totalorder %s23, 7
      %p88 = por %p86, %p87
      %p90 = scmp.ne.s32.totalorder %s73, %s89
      %p91 = scmp.eq.s32.totalorder %s23, 0
      %p92 = por %p90, %p91
      %s93 = ssub.s32 %s24, %s36
      %p94 = scmp.eq.s32.totalorder %s93, 0
      %s96 = sadd.s32 %s95, 1
      %s97 = scalar_select %p94, %s95, %s96
      %p100 = pneg %p94
      %p101 = scmp.eq.s32.totalorder %s17, 7
      %p102 = por %p100, %p101
      %p103 = scmp.ne.s32.totalorder %s95, %s98
      %p104 = scmp.eq.s32.totalorder %s17, 0
      %p105 = por %p103, %p104
      %p106 = scmp.ne.s32.totalorder %s95, %s98
      %p107 = scmp.eq.s32.totalorder %s22, 7
      %p108 = por %p106, %p107
      %p109 = scmp.ne.s32.totalorder %s98, %s99
      %p110 = scmp.eq.s32.totalorder %s22, 0
      %p111 = por %p109, %p110
      %p112 = scmp.ne.s32.totalorder %s98, %s99
      %p113 = scmp.eq.s32.totalorder %s23, 7
      %p114 = por %p112, %p113
      %p116 = scmp.ne.s32.totalorder %s99, %s115
      %p117 = scmp.eq.s32.totalorder %s23, 0
      %p118 = por %p116, %p117
      %s119 = ssub.s32 %s24, %s36
      %p120 = scmp.eq.s32.totalorder %s119, 0
      %s122 = sadd.s32 %s121, 1
      %s123 = scalar_select %p120, %s121, %s122
      %p126 = pneg %p120
      %p127 = scmp.eq.s32.totalorder %s17, 7
      %p128 = por %p126, %p127
      %p129 = scmp.ne.s32.totalorder %s121, %s124
      %p130 = scmp.eq.s32.totalorder %s17, 0
      %p131 = por %p129, %p130
      %p132 = scmp.ne.s32.totalorder %s121, %s124
      %p133 = scmp.eq.s32.totalorder %s22, 7
      %p134 = por %p132, %p133
      %p135 = scmp.ne.s32.totalorder %s124, %s125
      %p136 = scmp.eq.s32.totalorder %s22, 0
      %p137 = por %p135, %p136
      %p138 = scmp.ne.s32.totalorder %s124, %s125
      %p139 = scmp.eq.s32.totalorder %s23, 7
      %p140 = por %p138, %p139
      %p142 = scmp.ne.s32.totalorder %s125, %s141
      %p143 = scmp.eq.s32.totalorder %s23, 0
      %p144 = por %p142, %p143
      %s145 = ssub.s32 %s25, %s32
      %s146 = ssub.s32 %s24, %s36
      %s147 = sor.u32 %s145, %s146
      %p148 = scmp.eq.s32.totalorder %s147, 0
      %s150 = sadd.s32 %s149, 1
      %s151 = scalar_select %p148, %s149, %s150
      %p154 = pneg %p148
      %p155 = scmp.eq.s32.totalorder %s17, 7
      %p156 = por %p154, %p155
      %p157 = scmp.ne.s32.totalorder %s149, %s152
      %p158 = scmp.eq.s32.totalorder %s17, 0
      %p159 = por %p157, %p158
      %p160 = scmp.ne.s32.totalorder %s149, %s152
      %p161 = scmp.eq.s32.totalorder %s22, 7
      %p162 = por %p160, %p161
      %p163 = scmp.ne.s32.totalorder %s152, %s153
      %p164 = scmp.eq.s32.totalorder %s22, 0
      %p165 = por %p163, %p164
      %p166 = scmp.ne.s32.totalorder %s152, %s153
      %p167 = scmp.eq.s32.totalorder %s23, 7
      %p168 = por %p166, %p167
      %p170 = scmp.ne.s32.totalorder %s153, %s169
      %p171 = scmp.eq.s32.totalorder %s23, 0
      %p172 = por %p170, %p171
      %s173 = ssub.s32 %s25, %s32
      %s174 = ssub.s32 %s24, %s36
      %s175 = sor.u32 %s173, %s174
      %p176 = scmp.eq.s32.totalorder %s175, 0
      %s178 = sadd.s32 %s177, 1
      %s179 = scalar_select %p176, %s177, %s178
      %p182 = pneg %p176
      %p183 = scmp.eq.s32.totalorder %s17, 7
      %p184 = por %p182, %p183
      %p185 = scmp.ne.s32.totalorder %s177, %s180
      %p186 = scmp.eq.s32.totalorder %s17, 0
      %p187 = por %p185, %p186
      %p188 = scmp.ne.s32.totalorder %s177, %s180
      %p189 = scmp.eq.s32.totalorder %s22, 7
      %p190 = por %p188, %p189
      %p191 = scmp.ne.s32.totalorder %s180, %s181
      %p192 = scmp.eq.s32.totalorder %s22, 0
      %p193 = por %p191, %p192
      %p194 = scmp.ne.s32.totalorder %s180, %s181
      %p195 = scmp.eq.s32.totalorder %s23, 7
      %p196 = por %p194, %p195
      %p198 = scmp.ne.s32.totalorder %s181, %s197
      %p199 = scmp.eq.s32.totalorder %s23, 0
      %p200 = por %p198, %p199
      %s202 = sadd.s32 %s201, 1
      %p205 = scmp.eq.s32.totalorder %s17, 7
      %p206 = scmp.ne.s32.totalorder %s201, %s203
      %p207 = scmp.eq.s32.totalorder %s17, 0
      %p208 = por %p206, %p207
      %p209 = scmp.ne.s32.totalorder %s201, %s203
      %p210 = scmp.eq.s32.totalorder %s22, 7
      %p211 = por %p209, %p210
      %p212 = scmp.ne.s32.totalorder %s203, %s204
      %p213 = scmp.eq.s32.totalorder %s22, 0
      %p214 = por %p212, %p213
      %p215 = scmp.ne.s32.totalorder %s203, %s204
      %p216 = scmp.eq.s32.totalorder %s23, 7
      %p217 = por %p215, %p216
      %p219 = scmp.ne.s32.totalorder %s204, %s218
      %p220 = scmp.eq.s32.totalorder %s23, 0
      %p221 = por %p219, %p220
      %s223 = sadd.s32 %s222, 1
      %p226 = scmp.eq.s32.totalorder %s17, 7
      %p227 = scmp.ne.s32.totalorder %s222, %s224
      %p228 = scmp.eq.s32.totalorder %s17, 0
      %p229 = por %p227, %p228
      %p230 = scmp.ne.s32.totalorder %s222, %s224
      %p231 = scmp.eq.s32.totalorder %s22, 7
      %p232 = por %p230, %p231
      %p233 = scmp.ne.s32.totalorder %s224, %s225
      %p234 = scmp.eq.s32.totalorder %s22, 0
      %p235 = por %p233, %p234
      %p236 = scmp.ne.s32.totalorder %s224, %s225
      %p237 = scmp.eq.s32.totalorder %s23, 7
      %p238 = por %p236, %p237
      %p240 = scmp.ne.s32.totalorder %s225, %s239
      %p241 = scmp.eq.s32.totalorder %s23, 0
      %p242 = por %p240, %p241
      %s244 = sadd.s32 %s243, 1
      %p247 = scmp.eq.s32.totalorder %s17, 7
      %p248 = scmp.ne.s32.totalorder %s243, %s245
      %p249 = scmp.eq.s32.totalorder %s17, 0
      %p250 = por %p248, %p249
      %p251 = scmp.ne.s32.totalorder %s243, %s245
      %p252 = scmp.eq.s32.totalorder %s22, 7
      %p253 = por %p251, %p252
      %p254 = scmp.ne.s32.totalorder %s245, %s246
      %p255 = scmp.eq.s32.totalorder %s22, 0
      %p256 = por %p254, %p255
      %p257 = scmp.ne.s32.totalorder %s245, %s246
      %p258 = scmp.eq.s32.totalorder %s23, 7
      %p259 = por %p257, %p258
      %p261 = scmp.ne.s32.totalorder %s246, %s260
      %p262 = scmp.eq.s32.totalorder %s23, 0
      %p263 = por %p261, %p262
      %s265 = sadd.s32 %s264, 1
      %p268 = scmp.eq.s32.totalorder %s17, 7
      %p269 = scmp.ne.s32.totalorder %s264, %s266
      %p270 = scmp.eq.s32.totalorder %s17, 0
      %p271 = por %p269, %p270
      %p272 = scmp.ne.s32.totalorder %s264, %s266
      %p273 = scmp.eq.s32.totalorder %s22, 7
      %p274 = por %p272, %p273
      %p275 = scmp.ne.s32.totalorder %s266, %s267
      %p276 = scmp.eq.s32.totalorder %s22, 0
      %p277 = por %p275, %p276
      %p278 = scmp.ne.s32.totalorder %s266, %s267
      %p279 = scmp.eq.s32.totalorder %s23, 7
      %p280 = por %p278, %p279
      %p282 = scmp.ne.s32.totalorder %s267, %s281
      %p283 = scmp.eq.s32.totalorder %s23, 0
      %p284 = por %p282, %p283
      %s286 = sadd.s32 %s285, 1
      %p289 = scmp.eq.s32.totalorder %s17, 7
      %p290 = scmp.ne.s32.totalorder %s285, %s287
      %p291 = scmp.eq.s32.totalorder %s17, 0
      %p292 = por %p290, %p291
      %p293 = scmp.ne.s32.totalorder %s285, %s287
      %p294 = scmp.eq.s32.totalorder %s22, 7
      %p295 = por %p293, %p294
      %p296 = scmp.ne.s32.totalorder %s287, %s288
      %p297 = scmp.eq.s32.totalorder %s22, 0
      %p298 = por %p296, %p297
      %p299 = scmp.ne.s32.totalorder %s287, %s288
      %p300 = scmp.eq.s32.totalorder %s23, 7
      %p301 = por %p299, %p300
      %p303 = scmp.ne.s32.totalorder %s288, %s302
      %p304 = scmp.eq.s32.totalorder %s23, 0
      %p305 = por %p303, %p304
      %s306 = ssub.s32 %s25, %s32
      %s307 = ssub.s32 %s24, %s36
      %s308 = sor.u32 %s306, %s307
      %p309 = scmp.eq.s32.totalorder %s308, 0
      %s311 = sadd.s32 %s310, 1
      %s312 = scalar_select %p309, %s310, %s311
      %p315 = pneg %p309
      %p316 = scmp.eq.s32.totalorder %s17, 7
      %p317 = por %p315, %p316
      %p318 = scmp.ne.s32.totalorder %s310, %s313
      %p319 = scmp.eq.s32.totalorder %s17, 0
      %p320 = por %p318, %p319
      %p321 = scmp.ne.s32.totalorder %s310, %s313
      %p322 = scmp.eq.s32.totalorder %s22, 7
      %p323 = por %p321, %p322
      %p324 = scmp.ne.s32.totalorder %s313, %s314
      %p325 = scmp.eq.s32.totalorder %s22, 0
      %p326 = por %p324, %p325
      %p327 = scmp.ne.s32.totalorder %s313, %s314
      %p328 = scmp.eq.s32.totalorder %s23, 7
      %p329 = por %p327, %p328
      %p331 = scmp.ne.s32.totalorder %s314, %s330
      %p332 = scmp.eq.s32.totalorder %s23, 0
      %p333 = por %p331, %p332
      %p334 = scmp.le.s32.totalorder 1, %s17
      %p335 = scmp.lt.s32.totalorder %s17, 9
      %p336 = pnand %p334, %p335
      %p337 = pneg %p336
      // Predicated region
      $region9: #{c_vss_block_forward.1} parent=5 // pred_check
        _
      $region10: #{c_vss_block_forward.1} parent=5 // pred_check_branch
        %339 = sbr.rel (%p336) target = $region12
      $region11: #{c_vss_block_forward.1} parent=5 // pred_region
        %s340 = ssub.s32 %s17, 1
        // Predicated region
        $region13: #{c_vss_block_forward.1} parent=11 // pred_check
          %p341 = pneg %p214
        $region14: #{c_vss_block_forward.1} parent=11 // pred_check_branch
          %343 = sbr.rel (%p341) target = $region16
        $region15: #{c_vss_block_forward.1} parent=11 // pred_region
          _
        $region16: #{c_vss_block_forward.1} parent=11 // pred_fallthru
          _
        // Predicated region
        $region17: #{c_vss_block_forward.1} parent=11 // pred_check
          %p344 = pneg %p235
        $region18: #{c_vss_block_forward.1} parent=11 // pred_check_branch
          %346 = sbr.rel (%p344) target = $region20
        $region19: #{c_vss_block_forward.1} parent=11 // pred_region
          _
        $region20: #{c_vss_block_forward.1} parent=11 // pred_fallthru
          _
        // Predicated region
        $region21: #{c_vss_block_forward.1} parent=11 // pred_check
          %p347 = pneg %p256
        $region22: #{c_vss_block_forward.1} parent=11 // pred_check_branch
          %349 = sbr.rel (%p347) target = $region24
        $region23: #{c_vss_block_forward.1} parent=11 // pred_region
          _
        $region24: #{c_vss_block_forward.1} parent=11 // pred_fallthru
          _
        // Predicated region
        $region25: #{c_vss_block_forward.1} parent=11 // pred_check
          %p350 = pneg %p277
        $region26: #{c_vss_block_forward.1} parent=11 // pred_check_branch
          %352 = sbr.rel (%p350) target = $region28
        $region27: #{c_vss_block_forward.1} parent=11 // pred_region
          _
        $region28: #{c_vss_block_forward.1} parent=11 // pred_fallthru
          _
        // Predicated region
        $region29: #{c_vss_block_forward.1} parent=11 // pred_check
          %p353 = pneg %p298
        $region30: #{c_vss_block_forward.1} parent=11 // pred_check_branch
          %355 = sbr.rel (%p353) target = $region32
        $region31: #{c_vss_block_forward.1} parent=11 // pred_region
          _
        $region32: #{c_vss_block_forward.1} parent=11 // pred_fallthru
          _
      $region12: #{c_vss_block_forward.1} parent=5 // pred_fallthru
        _
      %p356 = scmp.lt.s32.totalorder %s17, 8
      // Predicated region
      $region33: #{c_vss_block_forward.1} parent=5 // pred_check
        %p357 = pneg %p356
      $region34: #{c_vss_block_forward.1} parent=5 // pred_check_branch
        %359 = sbr.rel (%p357) target = $region36
      $region35: #{c_vss_block_forward.1} parent=5 // pred_region
        // Predicated region
        $region37: #{c_vss_block_forward.1} parent=35 // pred_check
          %p360 = pneg %p51
        $region38: #{c_vss_block_forward.1} parent=35 // pred_check_branch
          %362 = sbr.rel (%p360) target = $region40
        $region39: #{c_vss_block_forward.1} parent=35 // pred_region
          %s363 = sand.u32 %s41, 1
          %s364 = sand.u32 %s41, 1
          %s365 = smul.addr %s364, 64
          %s366 = scalar_lea.vmem [#allocation3], %s365
          %s367 = smul.u32 8, %s25
          %s368 = smul.addr %s367, 2
          %s369 = sadd.s32 %s24, %s368
          %s370 = smul.addr %s369, 8
          %s371 = scalar_lea.vmem %s0, %s370
          // Predicated region
          $region41: #{c_vss_block_forward.1} parent=39 // pred_check
            _
          $region42: #{c_vss_block_forward.1} parent=39 // pred_check_branch
            %373 = sbr.rel (0) target = $region44
          $region43: #{c_vss_block_forward.1} parent=39 // pred_region
            // Predicated region
            $region45: #{c_vss_block_forward.1} parent=43 // pred_check
              _
            $region46: #{c_vss_block_forward.1} parent=43 // pred_check_branch
              %375 = sbr.rel (0) target = $region48
            $region47: #{c_vss_block_forward.1} parent=43 // pred_region
              // Predicated region
              $region60: #{c_vss_block_forward.1} parent=47 // pred_check
                _
              $region61: #{c_vss_block_forward.1} parent=47 // pred_check_branch
                %405 = sbr.rel (0) target = $region63
              $region62: #{c_vss_block_forward.1} parent=47 // pred_region
                loop: start=0, step=1, limit=1
                $region64: #{c_vss_block_forward.1} parent=62 // loop_pre_header
                  _
                $region65: #{c_vss_block_forward.1} parent=62 // loop_header
                  %s407 = sphi 0, %s411
                  %p408 = scmp.ge.s32.totalorder %s407, 1
                  %s412 = sphi %s371, %s371
                  %s413 = sphi %s366, %s366
                $region66: #{c_vss_block_forward.1} parent=62 // loop_header_branch
                  %410 = sbr.rel (%p408) target = $region70
                $region67: #{c_vss_block_forward.1} parent=62 // loop_body
                  %v414 = vld [vmem:[%s412] sm:$0xff]
                  %415 = vst [vmem:[%s413] sm:$0xff] %v414
                  %v416 = vld [vmem:[%s412 + $0x10] sm:$0xff]
                  %417 = vst [vmem:[%s413 + $0x8] sm:$0xff] %v416
                  %v418 = vld [vmem:[%s412 + $0x20] sm:$0xff]
                  %419 = vst [vmem:[%s413 + $0x10] sm:$0xff] %v418
                  %v420 = vld [vmem:[%s412 + $0x30] sm:$0xff]
                  %421 = vst [vmem:[%s413 + $0x18] sm:$0xff] %v420
                  %v422 = vld [vmem:[%s412 + $0x40] sm:$0xff]
                  %423 = vst [vmem:[%s413 + $0x20] sm:$0xff] %v422
                  %v424 = vld [vmem:[%s412 + $0x50] sm:$0xff]
                  %425 = vst [vmem:[%s413 + $0x28] sm:$0xff] %v424
                  %v426 = vld [vmem:[%s412 + $0x60] sm:$0xff]
                  %427 = vst [vmem:[%s413 + $0x30] sm:$0xff] %v426
                  %v428 = vld [vmem:[%s412 + $0x70] sm:$0xff]
                  %429 = vst [vmem:[%s413 + $0x38] sm:$0xff] %v428
                $region68: #{c_vss_block_forward.1} parent=62 // loop_footer
                  %s411 = sadd.s32 1, %s407
                $region69: #{c_vss_block_forward.1} parent=62 // loop_footer_branch
                  %406 = sbr.rel target = $region65
                $region70: #{c_vss_block_forward.1} parent=62 // loop_exit
                  _
              $region63: #{c_vss_block_forward.1} parent=47 // pred_fallthru
                _
              // Predicated region
              $region71: #{c_vss_block_forward.1} parent=47 // pred_check
                _
              $region72: #{c_vss_block_forward.1} parent=47 // pred_check_branch
                %431 = sbr.rel target = $region74
              $region73: #{c_vss_block_forward.1} parent=47 // pred_region
                _
              $region74: #{c_vss_block_forward.1} parent=47 // pred_fallthru
                _
            $region48: #{c_vss_block_forward.1} parent=43 // pred_fallthru
              _
            // Predicated region
            $region49: #{c_vss_block_forward.1} parent=43 // pred_check
              _
            $region50: #{c_vss_block_forward.1} parent=43 // pred_check_branch
              %377 = sbr.rel target = $region52
            $region51: #{c_vss_block_forward.1} parent=43 // pred_region
              %s379 = ssub.s32 256, 1
              loop: start=0, step=1, limit=1
              $region53: #{c_vss_block_forward.1} parent=51 // loop_pre_header
                _
              $region54: #{c_vss_block_forward.1} parent=51 // loop_header
                %s381 = sphi 0, %s385
                %p382 = scmp.ge.s32.totalorder %s381, 1
                %s386 = sphi %s371, %s371
                %s387 = sphi %s366, %s366
              $region55: #{c_vss_block_forward.1} parent=51 // loop_header_branch
                %384 = sbr.rel (%p382) target = $region59
              $region56: #{c_vss_block_forward.1} parent=51 // loop_body
                %v388 = vld [vmem:[%s386] sm:%s379]
                %389 = vst [vmem:[%s387] sm:%s379] %v388
                %v390 = vld [vmem:[%s386 + $0x10] sm:%s379]
                %391 = vst [vmem:[%s387 + $0x8] sm:%s379] %v390
                %v392 = vld [vmem:[%s386 + $0x20] sm:%s379]
                %393 = vst [vmem:[%s387 + $0x10] sm:%s379] %v392
                %v394 = vld [vmem:[%s386 + $0x30] sm:%s379]
                %395 = vst [vmem:[%s387 + $0x18] sm:%s379] %v394
                %v396 = vld [vmem:[%s386 + $0x40] sm:%s379]
                %397 = vst [vmem:[%s387 + $0x20] sm:%s379] %v396
                %v398 = vld [vmem:[%s386 + $0x50] sm:%s379]
                %399 = vst [vmem:[%s387 + $0x28] sm:%s379] %v398
                %v400 = vld [vmem:[%s386 + $0x60] sm:%s379]
                %401 = vst [vmem:[%s387 + $0x30] sm:%s379] %v400
                %v402 = vld [vmem:[%s386 + $0x70] sm:%s379]
                %403 = vst [vmem:[%s387 + $0x38] sm:%s379] %v402
              $region57: #{c_vss_block_forward.1} parent=51 // loop_footer
                %s385 = sadd.s32 1, %s381
              $region58: #{c_vss_block_forward.1} parent=51 // loop_footer_branch
                %380 = sbr.rel target = $region54
              $region59: #{c_vss_block_forward.1} parent=51 // loop_exit
                _
            $region52: #{c_vss_block_forward.1} parent=43 // pred_fallthru
              _
          $region44: #{c_vss_block_forward.1} parent=39 // pred_fallthru
            _
          %432 = vnop
        $region40: #{c_vss_block_forward.1} parent=35 // pred_fallthru
          _
        // Predicated region
        $region75: #{c_vss_block_forward.1} parent=35 // pred_check
          %p433 = pneg %p79
        $region76: #{c_vss_block_forward.1} parent=35 // pred_check_branch
          %435 = sbr.rel (%p433) target = $region78
        $region77: #{c_vss_block_forward.1} parent=35 // pred_region
          %s436 = sand.u32 %s69, 1
          %s437 = sand.u32 %s69, 1
          %s438 = smul.addr %s437, 64
          %s439 = scalar_lea.vmem [#allocation4], %s438
          %s440 = smul.u32 8, %s25
          %s441 = smul.addr %s440, 2
          %s442 = sadd.s32 %s24, %s441
          %s443 = smul.addr %s442, 8
          %s444 = scalar_lea.vmem %s1, %s443
          // Predicated region
          $region79: #{c_vss_block_forward.1} parent=77 // pred_check
            _
          $region80: #{c_vss_block_forward.1} parent=77 // pred_check_branch
            %446 = sbr.rel (0) target = $region82
          $region81: #{c_vss_block_forward.1} parent=77 // pred_region
            // Predicated region
            $region83: #{c_vss_block_forward.1} parent=81 // pred_check
              _
            $region84: #{c_vss_block_forward.1} parent=81 // pred_check_branch
              %448 = sbr.rel (0) target = $region86
            $region85: #{c_vss_block_forward.1} parent=81 // pred_region
              // Predicated region
              $region98: #{c_vss_block_forward.1} parent=85 // pred_check
                _
              $region99: #{c_vss_block_forward.1} parent=85 // pred_check_branch
                %478 = sbr.rel (0) target = $region101
              $region100: #{c_vss_block_forward.1} parent=85 // pred_region
                loop: start=0, step=1, limit=1
                $region102: #{c_vss_block_forward.1} parent=100 // loop_pre_header
                  _
                $region103: #{c_vss_block_forward.1} parent=100 // loop_header
                  %s480 = sphi 0, %s484
                  %p481 = scmp.ge.s32.totalorder %s480, 1
                  %s485 = sphi %s444, %s444
                  %s486 = sphi %s439, %s439
                $region104: #{c_vss_block_forward.1} parent=100 // loop_header_branch
                  %483 = sbr.rel (%p481) target = $region108
                $region105: #{c_vss_block_forward.1} parent=100 // loop_body
                  %v487 = vld [vmem:[%s485] sm:$0xff]
                  %488 = vst [vmem:[%s486] sm:$0xff] %v487
                  %v489 = vld [vmem:[%s485 + $0x10] sm:$0xff]
                  %490 = vst [vmem:[%s486 + $0x8] sm:$0xff] %v489
                  %v491 = vld [vmem:[%s485 + $0x20] sm:$0xff]
                  %492 = vst [vmem:[%s486 + $0x10] sm:$0xff] %v491
                  %v493 = vld [vmem:[%s485 + $0x30] sm:$0xff]
                  %494 = vst [vmem:[%s486 + $0x18] sm:$0xff] %v493
                  %v495 = vld [vmem:[%s485 + $0x40] sm:$0xff]
                  %496 = vst [vmem:[%s486 + $0x20] sm:$0xff] %v495
                  %v497 = vld [vmem:[%s485 + $0x50] sm:$0xff]
                  %498 = vst [vmem:[%s486 + $0x28] sm:$0xff] %v497
                  %v499 = vld [vmem:[%s485 + $0x60] sm:$0xff]
                  %500 = vst [vmem:[%s486 + $0x30] sm:$0xff] %v499
                  %v501 = vld [vmem:[%s485 + $0x70] sm:$0xff]
                  %502 = vst [vmem:[%s486 + $0x38] sm:$0xff] %v501
                $region106: #{c_vss_block_forward.1} parent=100 // loop_footer
                  %s484 = sadd.s32 1, %s480
                $region107: #{c_vss_block_forward.1} parent=100 // loop_footer_branch
                  %479 = sbr.rel target = $region103
                $region108: #{c_vss_block_forward.1} parent=100 // loop_exit
                  _
              $region101: #{c_vss_block_forward.1} parent=85 // pred_fallthru
                _
              // Predicated region
              $region109: #{c_vss_block_forward.1} parent=85 // pred_check
                _
              $region110: #{c_vss_block_forward.1} parent=85 // pred_check_branch
                %504 = sbr.rel target = $region112
              $region111: #{c_vss_block_forward.1} parent=85 // pred_region
                _
              $region112: #{c_vss_block_forward.1} parent=85 // pred_fallthru
                _
            $region86: #{c_vss_block_forward.1} parent=81 // pred_fallthru
              _
            // Predicated region
            $region87: #{c_vss_block_forward.1} parent=81 // pred_check
              _
            $region88: #{c_vss_block_forward.1} parent=81 // pred_check_branch
              %450 = sbr.rel target = $region90
            $region89: #{c_vss_block_forward.1} parent=81 // pred_region
              %s452 = ssub.s32 256, 1
              loop: start=0, step=1, limit=1
              $region91: #{c_vss_block_forward.1} parent=89 // loop_pre_header
                _
              $region92: #{c_vss_block_forward.1} parent=89 // loop_header
                %s454 = sphi 0, %s458
                %p455 = scmp.ge.s32.totalorder %s454, 1
                %s459 = sphi %s444, %s444
                %s460 = sphi %s439, %s439
              $region93: #{c_vss_block_forward.1} parent=89 // loop_header_branch
                %457 = sbr.rel (%p455) target = $region97
              $region94: #{c_vss_block_forward.1} parent=89 // loop_body
                %v461 = vld [vmem:[%s459] sm:%s452]
                %462 = vst [vmem:[%s460] sm:%s452] %v461
                %v463 = vld [vmem:[%s459 + $0x10] sm:%s452]
                %464 = vst [vmem:[%s460 + $0x8] sm:%s452] %v463
                %v465 = vld [vmem:[%s459 + $0x20] sm:%s452]
                %466 = vst [vmem:[%s460 + $0x10] sm:%s452] %v465
                %v467 = vld [vmem:[%s459 + $0x30] sm:%s452]
                %468 = vst [vmem:[%s460 + $0x18] sm:%s452] %v467
                %v469 = vld [vmem:[%s459 + $0x40] sm:%s452]
                %470 = vst [vmem:[%s460 + $0x20] sm:%s452] %v469
                %v471 = vld [vmem:[%s459 + $0x50] sm:%s452]
                %472 = vst [vmem:[%s460 + $0x28] sm:%s452] %v471
                %v473 = vld [vmem:[%s459 + $0x60] sm:%s452]
                %474 = vst [vmem:[%s460 + $0x30] sm:%s452] %v473
                %v475 = vld [vmem:[%s459 + $0x70] sm:%s452]
                %476 = vst [vmem:[%s460 + $0x38] sm:%s452] %v475
              $region95: #{c_vss_block_forward.1} parent=89 // loop_footer
                %s458 = sadd.s32 1, %s454
              $region96: #{c_vss_block_forward.1} parent=89 // loop_footer_branch
                %453 = sbr.rel target = $region92
              $region97: #{c_vss_block_forward.1} parent=89 // loop_exit
                _
            $region90: #{c_vss_block_forward.1} parent=81 // pred_fallthru
              _
          $region82: #{c_vss_block_forward.1} parent=77 // pred_fallthru
            _
          %505 = vnop
        $region78: #{c_vss_block_forward.1} parent=35 // pred_fallthru
          _
        // Predicated region
        $region113: #{c_vss_block_forward.1} parent=35 // pred_check
          %p506 = pneg %p105
        $region114: #{c_vss_block_forward.1} parent=35 // pred_check_branch
          %508 = sbr.rel (%p506) target = $region116
        $region115: #{c_vss_block_forward.1} parent=35 // pred_region
          %p509 = scmp.lt.s32.totalorder %s24, 1
          %s510 = scalar_select %p509, %s24, 1
          %s511 = smul.addr %s510, 8
          %s512 = scalar_lea.vmem %s2, %s511
        $region116: #{c_vss_block_forward.1} parent=35 // pred_fallthru
          _
        // Predicated region
        $region117: #{c_vss_block_forward.1} parent=35 // pred_check
          %p513 = pneg %p131
        $region118: #{c_vss_block_forward.1} parent=35 // pred_check_branch
          %515 = sbr.rel (%p513) target = $region120
        $region119: #{c_vss_block_forward.1} parent=35 // pred_region
          %p516 = scmp.lt.s32.totalorder %s24, 1
          %s517 = scalar_select %p516, %s24, 1
          %s518 = scalar_lea.vmem %s3, %s517
        $region120: #{c_vss_block_forward.1} parent=35 // pred_fallthru
          _
        // Predicated region
        $region121: #{c_vss_block_forward.1} parent=35 // pred_check
          %p519 = pneg %p159
        $region122: #{c_vss_block_forward.1} parent=35 // pred_check_branch
          %521 = sbr.rel (%p519) target = $region124
        $region123: #{c_vss_block_forward.1} parent=35 // pred_region
          %s522 = sand.u32 %s149, 1
          %s523 = sand.u32 %s149, 1
          %s524 = smul.addr %s523, 512
          %s525 = scalar_lea.vmem [#allocation5], %s524
          %s526 = smul.u32 64, %s25
          %s527 = smul.addr %s526, 2
          %s528 = sadd.s32 %s24, %s527
          %s529 = smul.addr %s528, 8
          %s530 = scalar_lea.vmem %s4, %s529
          // Predicated region
          $region125: #{c_vss_block_forward.1} parent=123 // pred_check
            _
          $region126: #{c_vss_block_forward.1} parent=123 // pred_check_branch
            %532 = sbr.rel (0) target = $region128
          $region127: #{c_vss_block_forward.1} parent=123 // pred_region
            // Predicated region
            $region129: #{c_vss_block_forward.1} parent=127 // pred_check
              _
            $region130: #{c_vss_block_forward.1} parent=127 // pred_check_branch
              %534 = sbr.rel (0) target = $region132
            $region131: #{c_vss_block_forward.1} parent=127 // pred_region
              // Predicated region
              $region144: #{c_vss_block_forward.1} parent=131 // pred_check
                _
              $region145: #{c_vss_block_forward.1} parent=131 // pred_check_branch
                %676 = sbr.rel (0) target = $region147
              $region146: #{c_vss_block_forward.1} parent=131 // pred_region
                loop: start=0, step=1, limit=1
                $region148: #{c_vss_block_forward.1} parent=146 // loop_pre_header
                  _
                $region149: #{c_vss_block_forward.1} parent=146 // loop_header
                  %s678 = sphi 0, %s682
                  %p679 = scmp.ge.s32.totalorder %s678, 1
                  %s683 = sphi %s530, %s530
                  %s684 = sphi %s525, %s525
                $region150: #{c_vss_block_forward.1} parent=146 // loop_header_branch
                  %681 = sbr.rel (%p679) target = $region154
                $region151: #{c_vss_block_forward.1} parent=146 // loop_body
                  %v685 = vld [vmem:[%s683] sm:$0xff]
                  %686 = vst [vmem:[%s684] sm:$0xff] %v685
                  %v687 = vld [vmem:[%s683 + $0x10] sm:$0xff]
                  %688 = vst [vmem:[%s684 + $0x8] sm:$0xff] %v687
                  %v689 = vld [vmem:[%s683 + $0x20] sm:$0xff]
                  %690 = vst [vmem:[%s684 + $0x10] sm:$0xff] %v689
                  %v691 = vld [vmem:[%s683 + $0x30] sm:$0xff]
                  %692 = vst [vmem:[%s684 + $0x18] sm:$0xff] %v691
                  %v693 = vld [vmem:[%s683 + $0x40] sm:$0xff]
                  %694 = vst [vmem:[%s684 + $0x20] sm:$0xff] %v693
                  %v695 = vld [vmem:[%s683 + $0x50] sm:$0xff]
                  %696 = vst [vmem:[%s684 + $0x28] sm:$0xff] %v695
                  %v697 = vld [vmem:[%s683 + $0x60] sm:$0xff]
                  %698 = vst [vmem:[%s684 + $0x30] sm:$0xff] %v697
                  %v699 = vld [vmem:[%s683 + $0x70] sm:$0xff]
                  %700 = vst [vmem:[%s684 + $0x38] sm:$0xff] %v699
                  %v701 = vld [vmem:[%s683 + $0x80] sm:$0xff]
                  %702 = vst [vmem:[%s684 + $0x40] sm:$0xff] %v701
                  %v703 = vld [vmem:[%s683 + $0x90] sm:$0xff]
                  %704 = vst [vmem:[%s684 + $0x48] sm:$0xff] %v703
                  %v705 = vld [vmem:[%s683 + $0xa0] sm:$0xff]
                  %706 = vst [vmem:[%s684 + $0x50] sm:$0xff] %v705
                  %v707 = vld [vmem:[%s683 + $0xb0] sm:$0xff]
                  %708 = vst [vmem:[%s684 + $0x58] sm:$0xff] %v707
                  %v709 = vld [vmem:[%s683 + $0xc0] sm:$0xff]
                  %710 = vst [vmem:[%s684 + $0x60] sm:$0xff] %v709
                  %v711 = vld [vmem:[%s683 + $0xd0] sm:$0xff]
                  %712 = vst [vmem:[%s684 + $0x68] sm:$0xff] %v711
                  %v713 = vld [vmem:[%s683 + $0xe0] sm:$0xff]
                  %714 = vst [vmem:[%s684 + $0x70] sm:$0xff] %v713
                  %v715 = vld [vmem:[%s683 + $0xf0] sm:$0xff]
                  %716 = vst [vmem:[%s684 + $0x78] sm:$0xff] %v715
                  %v717 = vld [vmem:[%s683 + $0x100] sm:$0xff]
                  %718 = vst [vmem:[%s684 + $0x80] sm:$0xff] %v717
                  %v719 = vld [vmem:[%s683 + $0x110] sm:$0xff]
                  %720 = vst [vmem:[%s684 + $0x88] sm:$0xff] %v719
                  %v721 = vld [vmem:[%s683 + $0x120] sm:$0xff]
                  %722 = vst [vmem:[%s684 + $0x90] sm:$0xff] %v721
                  %v723 = vld [vmem:[%s683 + $0x130] sm:$0xff]
                  %724 = vst [vmem:[%s684 + $0x98] sm:$0xff] %v723
                  %v725 = vld [vmem:[%s683 + $0x140] sm:$0xff]
                  %726 = vst [vmem:[%s684 + $0xa0] sm:$0xff] %v725
                  %v727 = vld [vmem:[%s683 + $0x150] sm:$0xff]
                  %728 = vst [vmem:[%s684 + $0xa8] sm:$0xff] %v727
                  %v729 = vld [vmem:[%s683 + $0x160] sm:$0xff]
                  %730 = vst [vmem:[%s684 + $0xb0] sm:$0xff] %v729
                  %v731 = vld [vmem:[%s683 + $0x170] sm:$0xff]
                  %732 = vst [vmem:[%s684 + $0xb8] sm:$0xff] %v731
                  %v733 = vld [vmem:[%s683 + $0x180] sm:$0xff]
                  %734 = vst [vmem:[%s684 + $0xc0] sm:$0xff] %v733
                  %v735 = vld [vmem:[%s683 + $0x190] sm:$0xff]
                  %736 = vst [vmem:[%s684 + $0xc8] sm:$0xff] %v735
                  %v737 = vld [vmem:[%s683 + $0x1a0] sm:$0xff]
                  %738 = vst [vmem:[%s684 + $0xd0] sm:$0xff] %v737
                  %v739 = vld [vmem:[%s683 + $0x1b0] sm:$0xff]
                  %740 = vst [vmem:[%s684 + $0xd8] sm:$0xff] %v739
                  %v741 = vld [vmem:[%s683 + $0x1c0] sm:$0xff]
                  %742 = vst [vmem:[%s684 + $0xe0] sm:$0xff] %v741
                  %v743 = vld [vmem:[%s683 + $0x1d0] sm:$0xff]
                  %744 = vst [vmem:[%s684 + $0xe8] sm:$0xff] %v743
                  %v745 = vld [vmem:[%s683 + $0x1e0] sm:$0xff]
                  %746 = vst [vmem:[%s684 + $0xf0] sm:$0xff] %v745
                  %v747 = vld [vmem:[%s683 + $0x1f0] sm:$0xff]
                  %748 = vst [vmem:[%s684 + $0xf8] sm:$0xff] %v747
                  %v749 = vld [vmem:[%s683 + $0x200] sm:$0xff]
                  %750 = vst [vmem:[%s684 + $0x100] sm:$0xff] %v749
                  %v751 = vld [vmem:[%s683 + $0x210] sm:$0xff]
                  %752 = vst [vmem:[%s684 + $0x108] sm:$0xff] %v751
                  %v753 = vld [vmem:[%s683 + $0x220] sm:$0xff]
                  %754 = vst [vmem:[%s684 + $0x110] sm:$0xff] %v753
                  %v755 = vld [vmem:[%s683 + $0x230] sm:$0xff]
                  %756 = vst [vmem:[%s684 + $0x118] sm:$0xff] %v755
                  %v757 = vld [vmem:[%s683 + $0x240] sm:$0xff]
                  %758 = vst [vmem:[%s684 + $0x120] sm:$0xff] %v757
                  %v759 = vld [vmem:[%s683 + $0x250] sm:$0xff]
                  %760 = vst [vmem:[%s684 + $0x128] sm:$0xff] %v759
                  %v761 = vld [vmem:[%s683 + $0x260] sm:$0xff]
                  %762 = vst [vmem:[%s684 + $0x130] sm:$0xff] %v761
                  %v763 = vld [vmem:[%s683 + $0x270] sm:$0xff]
                  %764 = vst [vmem:[%s684 + $0x138] sm:$0xff] %v763
                  %v765 = vld [vmem:[%s683 + $0x280] sm:$0xff]
                  %766 = vst [vmem:[%s684 + $0x140] sm:$0xff] %v765
                  %v767 = vld [vmem:[%s683 + $0x290] sm:$0xff]
                  %768 = vst [vmem:[%s684 + $0x148] sm:$0xff] %v767
                  %v769 = vld [vmem:[%s683 + $0x2a0] sm:$0xff]
                  %770 = vst [vmem:[%s684 + $0x150] sm:$0xff] %v769
                  %v771 = vld [vmem:[%s683 + $0x2b0] sm:$0xff]
                  %772 = vst [vmem:[%s684 + $0x158] sm:$0xff] %v771
                  %v773 = vld [vmem:[%s683 + $0x2c0] sm:$0xff]
                  %774 = vst [vmem:[%s684 + $0x160] sm:$0xff] %v773
                  %v775 = vld [vmem:[%s683 + $0x2d0] sm:$0xff]
                  %776 = vst [vmem:[%s684 + $0x168] sm:$0xff] %v775
                  %v777 = vld [vmem:[%s683 + $0x2e0] sm:$0xff]
                  %778 = vst [vmem:[%s684 + $0x170] sm:$0xff] %v777
                  %v779 = vld [vmem:[%s683 + $0x2f0] sm:$0xff]
                  %780 = vst [vmem:[%s684 + $0x178] sm:$0xff] %v779
                  %v781 = vld [vmem:[%s683 + $0x300] sm:$0xff]
                  %782 = vst [vmem:[%s684 + $0x180] sm:$0xff] %v781
                  %v783 = vld [vmem:[%s683 + $0x310] sm:$0xff]
                  %784 = vst [vmem:[%s684 + $0x188] sm:$0xff] %v783
                  %v785 = vld [vmem:[%s683 + $0x320] sm:$0xff]
                  %786 = vst [vmem:[%s684 + $0x190] sm:$0xff] %v785
                  %v787 = vld [vmem:[%s683 + $0x330] sm:$0xff]
                  %788 = vst [vmem:[%s684 + $0x198] sm:$0xff] %v787
                  %v789 = vld [vmem:[%s683 + $0x340] sm:$0xff]
                  %790 = vst [vmem:[%s684 + $0x1a0] sm:$0xff] %v789
                  %v791 = vld [vmem:[%s683 + $0x350] sm:$0xff]
                  %792 = vst [vmem:[%s684 + $0x1a8] sm:$0xff] %v791
                  %v793 = vld [vmem:[%s683 + $0x360] sm:$0xff]
                  %794 = vst [vmem:[%s684 + $0x1b0] sm:$0xff] %v793
                  %v795 = vld [vmem:[%s683 + $0x370] sm:$0xff]
                  %796 = vst [vmem:[%s684 + $0x1b8] sm:$0xff] %v795
                  %v797 = vld [vmem:[%s683 + $0x380] sm:$0xff]
                  %798 = vst [vmem:[%s684 + $0x1c0] sm:$0xff] %v797
                  %v799 = vld [vmem:[%s683 + $0x390] sm:$0xff]
                  %800 = vst [vmem:[%s684 + $0x1c8] sm:$0xff] %v799
                  %v801 = vld [vmem:[%s683 + $0x3a0] sm:$0xff]
                  %802 = vst [vmem:[%s684 + $0x1d0] sm:$0xff] %v801
                  %v803 = vld [vmem:[%s683 + $0x3b0] sm:$0xff]
                  %804 = vst [vmem:[%s684 + $0x1d8] sm:$0xff] %v803
                  %v805 = vld [vmem:[%s683 + $0x3c0] sm:$0xff]
                  %806 = vst [vmem:[%s684 + $0x1e0] sm:$0xff] %v805
                  %v807 = vld [vmem:[%s683 + $0x3d0] sm:$0xff]
                  %808 = vst [vmem:[%s684 + $0x1e8] sm:$0xff] %v807
                  %v809 = vld [vmem:[%s683 + $0x3e0] sm:$0xff]
                  %810 = vst [vmem:[%s684 + $0x1f0] sm:$0xff] %v809
                  %v811 = vld [vmem:[%s683 + $0x3f0] sm:$0xff]
                  %812 = vst [vmem:[%s684 + $0x1f8] sm:$0xff] %v811
                $region152: #{c_vss_block_forward.1} parent=146 // loop_footer
                  %s682 = sadd.s32 1, %s678
                $region153: #{c_vss_block_forward.1} parent=146 // loop_footer_branch
                  %677 = sbr.rel target = $region149
                $region154: #{c_vss_block_forward.1} parent=146 // loop_exit
                  _
              $region147: #{c_vss_block_forward.1} parent=131 // pred_fallthru
                _
              // Predicated region
              $region155: #{c_vss_block_forward.1} parent=131 // pred_check
                _
              $region156: #{c_vss_block_forward.1} parent=131 // pred_check_branch
                %814 = sbr.rel target = $region158
              $region157: #{c_vss_block_forward.1} parent=131 // pred_region
                _
              $region158: #{c_vss_block_forward.1} parent=131 // pred_fallthru
                _
            $region132: #{c_vss_block_forward.1} parent=127 // pred_fallthru
              _
            // Predicated region
            $region133: #{c_vss_block_forward.1} parent=127 // pred_check
              _
            $region134: #{c_vss_block_forward.1} parent=127 // pred_check_branch
              %536 = sbr.rel target = $region136
            $region135: #{c_vss_block_forward.1} parent=127 // pred_region
              %s538 = ssub.s32 256, 1
              loop: start=0, step=1, limit=1
              $region137: #{c_vss_block_forward.1} parent=135 // loop_pre_header
                _
              $region138: #{c_vss_block_forward.1} parent=135 // loop_header
                %s540 = sphi 0, %s544
                %p541 = scmp.ge.s32.totalorder %s540, 1
                %s545 = sphi %s530, %s530
                %s546 = sphi %s525, %s525
              $region139: #{c_vss_block_forward.1} parent=135 // loop_header_branch
                %543 = sbr.rel (%p541) target = $region143
              $region140: #{c_vss_block_forward.1} parent=135 // loop_body
                %v547 = vld [vmem:[%s545] sm:%s538]
                %548 = vst [vmem:[%s546] sm:%s538] %v547
                %v549 = vld [vmem:[%s545 + $0x10] sm:%s538]
                %550 = vst [vmem:[%s546 + $0x8] sm:%s538] %v549
                %v551 = vld [vmem:[%s545 + $0x20] sm:%s538]
                %552 = vst [vmem:[%s546 + $0x10] sm:%s538] %v551
                %v553 = vld [vmem:[%s545 + $0x30] sm:%s538]
                %554 = vst [vmem:[%s546 + $0x18] sm:%s538] %v553
                %v555 = vld [vmem:[%s545 + $0x40] sm:%s538]
                %556 = vst [vmem:[%s546 + $0x20] sm:%s538] %v555
                %v557 = vld [vmem:[%s545 + $0x50] sm:%s538]
                %558 = vst [vmem:[%s546 + $0x28] sm:%s538] %v557
                %v559 = vld [vmem:[%s545 + $0x60] sm:%s538]
                %560 = vst [vmem:[%s546 + $0x30] sm:%s538] %v559
                %v561 = vld [vmem:[%s545 + $0x70] sm:%s538]
                %562 = vst [vmem:[%s546 + $0x38] sm:%s538] %v561
                %v563 = vld [vmem:[%s545 + $0x80] sm:%s538]
                %564 = vst [vmem:[%s546 + $0x40] sm:%s538] %v563
                %v565 = vld [vmem:[%s545 + $0x90] sm:%s538]
                %566 = vst [vmem:[%s546 + $0x48] sm:%s538] %v565
                %v567 = vld [vmem:[%s545 + $0xa0] sm:%s538]
                %568 = vst [vmem:[%s546 + $0x50] sm:%s538] %v567
                %v569 = vld [vmem:[%s545 + $0xb0] sm:%s538]
                %570 = vst [vmem:[%s546 + $0x58] sm:%s538] %v569
                %v571 = vld [vmem:[%s545 + $0xc0] sm:%s538]
                %572 = vst [vmem:[%s546 + $0x60] sm:%s538] %v571
                %v573 = vld [vmem:[%s545 + $0xd0] sm:%s538]
                %574 = vst [vmem:[%s546 + $0x68] sm:%s538] %v573
                %v575 = vld [vmem:[%s545 + $0xe0] sm:%s538]
                %576 = vst [vmem:[%s546 + $0x70] sm:%s538] %v575
                %v577 = vld [vmem:[%s545 + $0xf0] sm:%s538]
                %578 = vst [vmem:[%s546 + $0x78] sm:%s538] %v577
                %v579 = vld [vmem:[%s545 + $0x100] sm:%s538]
                %580 = vst [vmem:[%s546 + $0x80] sm:%s538] %v579
                %v581 = vld [vmem:[%s545 + $0x110] sm:%s538]
                %582 = vst [vmem:[%s546 + $0x88] sm:%s538] %v581
                %v583 = vld [vmem:[%s545 + $0x120] sm:%s538]
                %584 = vst [vmem:[%s546 + $0x90] sm:%s538] %v583
                %v585 = vld [vmem:[%s545 + $0x130] sm:%s538]
                %586 = vst [vmem:[%s546 + $0x98] sm:%s538] %v585
                %v587 = vld [vmem:[%s545 + $0x140] sm:%s538]
                %588 = vst [vmem:[%s546 + $0xa0] sm:%s538] %v587
                %v589 = vld [vmem:[%s545 + $0x150] sm:%s538]
                %590 = vst [vmem:[%s546 + $0xa8] sm:%s538] %v589
                %v591 = vld [vmem:[%s545 + $0x160] sm:%s538]
                %592 = vst [vmem:[%s546 + $0xb0] sm:%s538] %v591
                %v593 = vld [vmem:[%s545 + $0x170] sm:%s538]
                %594 = vst [vmem:[%s546 + $0xb8] sm:%s538] %v593
                %v595 = vld [vmem:[%s545 + $0x180] sm:%s538]
                %596 = vst [vmem:[%s546 + $0xc0] sm:%s538] %v595
                %v597 = vld [vmem:[%s545 + $0x190] sm:%s538]
                %598 = vst [vmem:[%s546 + $0xc8] sm:%s538] %v597
                %v599 = vld [vmem:[%s545 + $0x1a0] sm:%s538]
                %600 = vst [vmem:[%s546 + $0xd0] sm:%s538] %v599
                %v601 = vld [vmem:[%s545 + $0x1b0] sm:%s538]
                %602 = vst [vmem:[%s546 + $0xd8] sm:%s538] %v601
                %v603 = vld [vmem:[%s545 + $0x1c0] sm:%s538]
                %604 = vst [vmem:[%s546 + $0xe0] sm:%s538] %v603
                %v605 = vld [vmem:[%s545 + $0x1d0] sm:%s538]
                %606 = vst [vmem:[%s546 + $0xe8] sm:%s538] %v605
                %v607 = vld [vmem:[%s545 + $0x1e0] sm:%s538]
                %608 = vst [vmem:[%s546 + $0xf0] sm:%s538] %v607
                %v609 = vld [vmem:[%s545 + $0x1f0] sm:%s538]
                %610 = vst [vmem:[%s546 + $0xf8] sm:%s538] %v609
                %v611 = vld [vmem:[%s545 + $0x200] sm:%s538]
                %612 = vst [vmem:[%s546 + $0x100] sm:%s538] %v611
                %v613 = vld [vmem:[%s545 + $0x210] sm:%s538]
                %614 = vst [vmem:[%s546 + $0x108] sm:%s538] %v613
                %v615 = vld [vmem:[%s545 + $0x220] sm:%s538]
                %616 = vst [vmem:[%s546 + $0x110] sm:%s538] %v615
                %v617 = vld [vmem:[%s545 + $0x230] sm:%s538]
                %618 = vst [vmem:[%s546 + $0x118] sm:%s538] %v617
                %v619 = vld [vmem:[%s545 + $0x240] sm:%s538]
                %620 = vst [vmem:[%s546 + $0x120] sm:%s538] %v619
                %v621 = vld [vmem:[%s545 + $0x250] sm:%s538]
                %622 = vst [vmem:[%s546 + $0x128] sm:%s538] %v621
                %v623 = vld [vmem:[%s545 + $0x260] sm:%s538]
                %624 = vst [vmem:[%s546 + $0x130] sm:%s538] %v623
                %v625 = vld [vmem:[%s545 + $0x270] sm:%s538]
                %626 = vst [vmem:[%s546 + $0x138] sm:%s538] %v625
                %v627 = vld [vmem:[%s545 + $0x280] sm:%s538]
                %628 = vst [vmem:[%s546 + $0x140] sm:%s538] %v627
                %v629 = vld [vmem:[%s545 + $0x290] sm:%s538]
                %630 = vst [vmem:[%s546 + $0x148] sm:%s538] %v629
                %v631 = vld [vmem:[%s545 + $0x2a0] sm:%s538]
                %632 = vst [vmem:[%s546 + $0x150] sm:%s538] %v631
                %v633 = vld [vmem:[%s545 + $0x2b0] sm:%s538]
                %634 = vst [vmem:[%s546 + $0x158] sm:%s538] %v633
                %v635 = vld [vmem:[%s545 + $0x2c0] sm:%s538]
                %636 = vst [vmem:[%s546 + $0x160] sm:%s538] %v635
                %v637 = vld [vmem:[%s545 + $0x2d0] sm:%s538]
                %638 = vst [vmem:[%s546 + $0x168] sm:%s538] %v637
                %v639 = vld [vmem:[%s545 + $0x2e0] sm:%s538]
                %640 = vst [vmem:[%s546 + $0x170] sm:%s538] %v639
                %v641 = vld [vmem:[%s545 + $0x2f0] sm:%s538]
                %642 = vst [vmem:[%s546 + $0x178] sm:%s538] %v641
                %v643 = vld [vmem:[%s545 + $0x300] sm:%s538]
                %644 = vst [vmem:[%s546 + $0x180] sm:%s538] %v643
                %v645 = vld [vmem:[%s545 + $0x310] sm:%s538]
                %646 = vst [vmem:[%s546 + $0x188] sm:%s538] %v645
                %v647 = vld [vmem:[%s545 + $0x320] sm:%s538]
                %648 = vst [vmem:[%s546 + $0x190] sm:%s538] %v647
                %v649 = vld [vmem:[%s545 + $0x330] sm:%s538]
                %650 = vst [vmem:[%s546 + $0x198] sm:%s538] %v649
                %v651 = vld [vmem:[%s545 + $0x340] sm:%s538]
                %652 = vst [vmem:[%s546 + $0x1a0] sm:%s538] %v651
                %v653 = vld [vmem:[%s545 + $0x350] sm:%s538]
                %654 = vst [vmem:[%s546 + $0x1a8] sm:%s538] %v653
                %v655 = vld [vmem:[%s545 + $0x360] sm:%s538]
                %656 = vst [vmem:[%s546 + $0x1b0] sm:%s538] %v655
                %v657 = vld [vmem:[%s545 + $0x370] sm:%s538]
                %658 = vst [vmem:[%s546 + $0x1b8] sm:%s538] %v657
                %v659 = vld [vmem:[%s545 + $0x380] sm:%s538]
                %660 = vst [vmem:[%s546 + $0x1c0] sm:%s538] %v659
                %v661 = vld [vmem:[%s545 + $0x390] sm:%s538]
                %662 = vst [vmem:[%s546 + $0x1c8] sm:%s538] %v661
                %v663 = vld [vmem:[%s545 + $0x3a0] sm:%s538]
                %664 = vst [vmem:[%s546 + $0x1d0] sm:%s538] %v663
                %v665 = vld [vmem:[%s545 + $0x3b0] sm:%s538]
                %666 = vst [vmem:[%s546 + $0x1d8] sm:%s538] %v665
                %v667 = vld [vmem:[%s545 + $0x3c0] sm:%s538]
                %668 = vst [vmem:[%s546 + $0x1e0] sm:%s538] %v667
                %v669 = vld [vmem:[%s545 + $0x3d0] sm:%s538]
                %670 = vst [vmem:[%s546 + $0x1e8] sm:%s538] %v669
                %v671 = vld [vmem:[%s545 + $0x3e0] sm:%s538]
                %672 = vst [vmem:[%s546 + $0x1f0] sm:%s538] %v671
                %v673 = vld [vmem:[%s545 + $0x3f0] sm:%s538]
                %674 = vst [vmem:[%s546 + $0x1f8] sm:%s538] %v673
              $region141: #{c_vss_block_forward.1} parent=135 // loop_footer
                %s544 = sadd.s32 1, %s540
              $region142: #{c_vss_block_forward.1} parent=135 // loop_footer_branch
                %539 = sbr.rel target = $region138
              $region143: #{c_vss_block_forward.1} parent=135 // loop_exit
                _
            $region136: #{c_vss_block_forward.1} parent=127 // pred_fallthru
              _
          $region128: #{c_vss_block_forward.1} parent=123 // pred_fallthru
            _
          %815 = vnop
        $region124: #{c_vss_block_forward.1} parent=35 // pred_fallthru
          _
        // Predicated region
        $region159: #{c_vss_block_forward.1} parent=35 // pred_check
          %p816 = pneg %p187
        $region160: #{c_vss_block_forward.1} parent=35 // pred_check_branch
          %818 = sbr.rel (%p816) target = $region162
        $region161: #{c_vss_block_forward.1} parent=35 // pred_region
          %s819 = sand.u32 %s177, 1
          %s820 = sand.u32 %s177, 1
          %s821 = smul.addr %s820, 512
          %s822 = scalar_lea.vmem [#allocation6], %s821
          %s823 = smul.u32 64, %s25
          %s824 = smul.addr %s823, 2
          %s825 = sadd.s32 %s24, %s824
          %s826 = smul.addr %s825, 8
          %s827 = scalar_lea.vmem %s5, %s826
          // Predicated region
          $region163: #{c_vss_block_forward.1} parent=161 // pred_check
            _
          $region164: #{c_vss_block_forward.1} parent=161 // pred_check_branch
            %829 = sbr.rel (0) target = $region166
          $region165: #{c_vss_block_forward.1} parent=161 // pred_region
            // Predicated region
            $region167: #{c_vss_block_forward.1} parent=165 // pred_check
              _
            $region168: #{c_vss_block_forward.1} parent=165 // pred_check_branch
              %831 = sbr.rel (0) target = $region170
            $region169: #{c_vss_block_forward.1} parent=165 // pred_region
              // Predicated region
              $region182: #{c_vss_block_forward.1} parent=169 // pred_check
                _
              $region183: #{c_vss_block_forward.1} parent=169 // pred_check_branch
                %973 = sbr.rel (0) target = $region185
              $region184: #{c_vss_block_forward.1} parent=169 // pred_region
                loop: start=0, step=1, limit=1
                $region186: #{c_vss_block_forward.1} parent=184 // loop_pre_header
                  _
                $region187: #{c_vss_block_forward.1} parent=184 // loop_header
                  %s975 = sphi 0, %s979
                  %p976 = scmp.ge.s32.totalorder %s975, 1
                  %s980 = sphi %s827, %s827
                  %s981 = sphi %s822, %s822
                $region188: #{c_vss_block_forward.1} parent=184 // loop_header_branch
                  %978 = sbr.rel (%p976) target = $region192
                $region189: #{c_vss_block_forward.1} parent=184 // loop_body
                  %v982 = vld [vmem:[%s980] sm:$0xff]
                  %983 = vst [vmem:[%s981] sm:$0xff] %v982
                  %v984 = vld [vmem:[%s980 + $0x10] sm:$0xff]
                  %985 = vst [vmem:[%s981 + $0x8] sm:$0xff] %v984
                  %v986 = vld [vmem:[%s980 + $0x20] sm:$0xff]
                  %987 = vst [vmem:[%s981 + $0x10] sm:$0xff] %v986
                  %v988 = vld [vmem:[%s980 + $0x30] sm:$0xff]
                  %989 = vst [vmem:[%s981 + $0x18] sm:$0xff] %v988
                  %v990 = vld [vmem:[%s980 + $0x40] sm:$0xff]
                  %991 = vst [vmem:[%s981 + $0x20] sm:$0xff] %v990
                  %v992 = vld [vmem:[%s980 + $0x50] sm:$0xff]
                  %993 = vst [vmem:[%s981 + $0x28] sm:$0xff] %v992
                  %v994 = vld [vmem:[%s980 + $0x60] sm:$0xff]
                  %995 = vst [vmem:[%s981 + $0x30] sm:$0xff] %v994
                  %v996 = vld [vmem:[%s980 + $0x70] sm:$0xff]
                  %997 = vst [vmem:[%s981 + $0x38] sm:$0xff] %v996
                  %v998 = vld [vmem:[%s980 + $0x80] sm:$0xff]
                  %999 = vst [vmem:[%s981 + $0x40] sm:$0xff] %v998
                  %v1000 = vld [vmem:[%s980 + $0x90] sm:$0xff]
                  %1001 = vst [vmem:[%s981 + $0x48] sm:$0xff] %v1000
                  %v1002 = vld [vmem:[%s980 + $0xa0] sm:$0xff]
                  %1003 = vst [vmem:[%s981 + $0x50] sm:$0xff] %v1002
                  %v1004 = vld [vmem:[%s980 + $0xb0] sm:$0xff]
                  %1005 = vst [vmem:[%s981 + $0x58] sm:$0xff] %v1004
                  %v1006 = vld [vmem:[%s980 + $0xc0] sm:$0xff]
                  %1007 = vst [vmem:[%s981 + $0x60] sm:$0xff] %v1006
                  %v1008 = vld [vmem:[%s980 + $0xd0] sm:$0xff]
                  %1009 = vst [vmem:[%s981 + $0x68] sm:$0xff] %v1008
                  %v1010 = vld [vmem:[%s980 + $0xe0] sm:$0xff]
                  %1011 = vst [vmem:[%s981 + $0x70] sm:$0xff] %v1010
                  %v1012 = vld [vmem:[%s980 + $0xf0] sm:$0xff]
                  %1013 = vst [vmem:[%s981 + $0x78] sm:$0xff] %v1012
                  %v1014 = vld [vmem:[%s980 + $0x100] sm:$0xff]
                  %1015 = vst [vmem:[%s981 + $0x80] sm:$0xff] %v1014
                  %v1016 = vld [vmem:[%s980 + $0x110] sm:$0xff]
                  %1017 = vst [vmem:[%s981 + $0x88] sm:$0xff] %v1016
                  %v1018 = vld [vmem:[%s980 + $0x120] sm:$0xff]
                  %1019 = vst [vmem:[%s981 + $0x90] sm:$0xff] %v1018
                  %v1020 = vld [vmem:[%s980 + $0x130] sm:$0xff]
                  %1021 = vst [vmem:[%s981 + $0x98] sm:$0xff] %v1020
                  %v1022 = vld [vmem:[%s980 + $0x140] sm:$0xff]
                  %1023 = vst [vmem:[%s981 + $0xa0] sm:$0xff] %v1022
                  %v1024 = vld [vmem:[%s980 + $0x150] sm:$0xff]
                  %1025 = vst [vmem:[%s981 + $0xa8] sm:$0xff] %v1024
                  %v1026 = vld [vmem:[%s980 + $0x160] sm:$0xff]
                  %1027 = vst [vmem:[%s981 + $0xb0] sm:$0xff] %v1026
                  %v1028 = vld [vmem:[%s980 + $0x170] sm:$0xff]
                  %1029 = vst [vmem:[%s981 + $0xb8] sm:$0xff] %v1028
                  %v1030 = vld [vmem:[%s980 + $0x180] sm:$0xff]
                  %1031 = vst [vmem:[%s981 + $0xc0] sm:$0xff] %v1030
                  %v1032 = vld [vmem:[%s980 + $0x190] sm:$0xff]
                  %1033 = vst [vmem:[%s981 + $0xc8] sm:$0xff] %v1032
                  %v1034 = vld [vmem:[%s980 + $0x1a0] sm:$0xff]
                  %1035 = vst [vmem:[%s981 + $0xd0] sm:$0xff] %v1034
                  %v1036 = vld [vmem:[%s980 + $0x1b0] sm:$0xff]
                  %1037 = vst [vmem:[%s981 + $0xd8] sm:$0xff] %v1036
                  %v1038 = vld [vmem:[%s980 + $0x1c0] sm:$0xff]
                  %1039 = vst [vmem:[%s981 + $0xe0] sm:$0xff] %v1038
                  %v1040 = vld [vmem:[%s980 + $0x1d0] sm:$0xff]
                  %1041 = vst [vmem:[%s981 + $0xe8] sm:$0xff] %v1040
                  %v1042 = vld [vmem:[%s980 + $0x1e0] sm:$0xff]
                  %1043 = vst [vmem:[%s981 + $0xf0] sm:$0xff] %v1042
                  %v1044 = vld [vmem:[%s980 + $0x1f0] sm:$0xff]
                  %1045 = vst [vmem:[%s981 + $0xf8] sm:$0xff] %v1044
                  %v1046 = vld [vmem:[%s980 + $0x200] sm:$0xff]
                  %1047 = vst [vmem:[%s981 + $0x100] sm:$0xff] %v1046
                  %v1048 = vld [vmem:[%s980 + $0x210] sm:$0xff]
                  %1049 = vst [vmem:[%s981 + $0x108] sm:$0xff] %v1048
                  %v1050 = vld [vmem:[%s980 + $0x220] sm:$0xff]
                  %1051 = vst [vmem:[%s981 + $0x110] sm:$0xff] %v1050
                  %v1052 = vld [vmem:[%s980 + $0x230] sm:$0xff]
                  %1053 = vst [vmem:[%s981 + $0x118] sm:$0xff] %v1052
                  %v1054 = vld [vmem:[%s980 + $0x240] sm:$0xff]
                  %1055 = vst [vmem:[%s981 + $0x120] sm:$0xff] %v1054
                  %v1056 = vld [vmem:[%s980 + $0x250] sm:$0xff]
                  %1057 = vst [vmem:[%s981 + $0x128] sm:$0xff] %v1056
                  %v1058 = vld [vmem:[%s980 + $0x260] sm:$0xff]
                  %1059 = vst [vmem:[%s981 + $0x130] sm:$0xff] %v1058
                  %v1060 = vld [vmem:[%s980 + $0x270] sm:$0xff]
                  %1061 = vst [vmem:[%s981 + $0x138] sm:$0xff] %v1060
                  %v1062 = vld [vmem:[%s980 + $0x280] sm:$0xff]
                  %1063 = vst [vmem:[%s981 + $0x140] sm:$0xff] %v1062
                  %v1064 = vld [vmem:[%s980 + $0x290] sm:$0xff]
                  %1065 = vst [vmem:[%s981 + $0x148] sm:$0xff] %v1064
                  %v1066 = vld [vmem:[%s980 + $0x2a0] sm:$0xff]
                  %1067 = vst [vmem:[%s981 + $0x150] sm:$0xff] %v1066
                  %v1068 = vld [vmem:[%s980 + $0x2b0] sm:$0xff]
                  %1069 = vst [vmem:[%s981 + $0x158] sm:$0xff] %v1068
                  %v1070 = vld [vmem:[%s980 + $0x2c0] sm:$0xff]
                  %1071 = vst [vmem:[%s981 + $0x160] sm:$0xff] %v1070
                  %v1072 = vld [vmem:[%s980 + $0x2d0] sm:$0xff]
                  %1073 = vst [vmem:[%s981 + $0x168] sm:$0xff] %v1072
                  %v1074 = vld [vmem:[%s980 + $0x2e0] sm:$0xff]
                  %1075 = vst [vmem:[%s981 + $0x170] sm:$0xff] %v1074
                  %v1076 = vld [vmem:[%s980 + $0x2f0] sm:$0xff]
                  %1077 = vst [vmem:[%s981 + $0x178] sm:$0xff] %v1076
                  %v1078 = vld [vmem:[%s980 + $0x300] sm:$0xff]
                  %1079 = vst [vmem:[%s981 + $0x180] sm:$0xff] %v1078
                  %v1080 = vld [vmem:[%s980 + $0x310] sm:$0xff]
                  %1081 = vst [vmem:[%s981 + $0x188] sm:$0xff] %v1080
                  %v1082 = vld [vmem:[%s980 + $0x320] sm:$0xff]
                  %1083 = vst [vmem:[%s981 + $0x190] sm:$0xff] %v1082
                  %v1084 = vld [vmem:[%s980 + $0x330] sm:$0xff]
                  %1085 = vst [vmem:[%s981 + $0x198] sm:$0xff] %v1084
                  %v1086 = vld [vmem:[%s980 + $0x340] sm:$0xff]
                  %1087 = vst [vmem:[%s981 + $0x1a0] sm:$0xff] %v1086
                  %v1088 = vld [vmem:[%s980 + $0x350] sm:$0xff]
                  %1089 = vst [vmem:[%s981 + $0x1a8] sm:$0xff] %v1088
                  %v1090 = vld [vmem:[%s980 + $0x360] sm:$0xff]
                  %1091 = vst [vmem:[%s981 + $0x1b0] sm:$0xff] %v1090
                  %v1092 = vld [vmem:[%s980 + $0x370] sm:$0xff]
                  %1093 = vst [vmem:[%s981 + $0x1b8] sm:$0xff] %v1092
                  %v1094 = vld [vmem:[%s980 + $0x380] sm:$0xff]
                  %1095 = vst [vmem:[%s981 + $0x1c0] sm:$0xff] %v1094
                  %v1096 = vld [vmem:[%s980 + $0x390] sm:$0xff]
                  %1097 = vst [vmem:[%s981 + $0x1c8] sm:$0xff] %v1096
                  %v1098 = vld [vmem:[%s980 + $0x3a0] sm:$0xff]
                  %1099 = vst [vmem:[%s981 + $0x1d0] sm:$0xff] %v1098
                  %v1100 = vld [vmem:[%s980 + $0x3b0] sm:$0xff]
                  %1101 = vst [vmem:[%s981 + $0x1d8] sm:$0xff] %v1100
                  %v1102 = vld [vmem:[%s980 + $0x3c0] sm:$0xff]
                  %1103 = vst [vmem:[%s981 + $0x1e0] sm:$0xff] %v1102
                  %v1104 = vld [vmem:[%s980 + $0x3d0] sm:$0xff]
                  %1105 = vst [vmem:[%s981 + $0x1e8] sm:$0xff] %v1104
                  %v1106 = vld [vmem:[%s980 + $0x3e0] sm:$0xff]
                  %1107 = vst [vmem:[%s981 + $0x1f0] sm:$0xff] %v1106
                  %v1108 = vld [vmem:[%s980 + $0x3f0] sm:$0xff]
                  %1109 = vst [vmem:[%s981 + $0x1f8] sm:$0xff] %v1108
                $region190: #{c_vss_block_forward.1} parent=184 // loop_footer
                  %s979 = sadd.s32 1, %s975
                $region191: #{c_vss_block_forward.1} parent=184 // loop_footer_branch
                  %974 = sbr.rel target = $region187
                $region192: #{c_vss_block_forward.1} parent=184 // loop_exit
                  _
              $region185: #{c_vss_block_forward.1} parent=169 // pred_fallthru
                _
              // Predicated region
              $region193: #{c_vss_block_forward.1} parent=169 // pred_check
                _
              $region194: #{c_vss_block_forward.1} parent=169 // pred_check_branch
                %1111 = sbr.rel target = $region196
              $region195: #{c_vss_block_forward.1} parent=169 // pred_region
                _
              $region196: #{c_vss_block_forward.1} parent=169 // pred_fallthru
                _
            $region170: #{c_vss_block_forward.1} parent=165 // pred_fallthru
              _
            // Predicated region
            $region171: #{c_vss_block_forward.1} parent=165 // pred_check
              _
            $region172: #{c_vss_block_forward.1} parent=165 // pred_check_branch
              %833 = sbr.rel target = $region174
            $region173: #{c_vss_block_forward.1} parent=165 // pred_region
              %s835 = ssub.s32 256, 1
              loop: start=0, step=1, limit=1
              $region175: #{c_vss_block_forward.1} parent=173 // loop_pre_header
                _
              $region176: #{c_vss_block_forward.1} parent=173 // loop_header
                %s837 = sphi 0, %s841
                %p838 = scmp.ge.s32.totalorder %s837, 1
                %s842 = sphi %s827, %s827
                %s843 = sphi %s822, %s822
              $region177: #{c_vss_block_forward.1} parent=173 // loop_header_branch
                %840 = sbr.rel (%p838) target = $region181
              $region178: #{c_vss_block_forward.1} parent=173 // loop_body
                %v844 = vld [vmem:[%s842] sm:%s835]
                %845 = vst [vmem:[%s843] sm:%s835] %v844
                %v846 = vld [vmem:[%s842 + $0x10] sm:%s835]
                %847 = vst [vmem:[%s843 + $0x8] sm:%s835] %v846
                %v848 = vld [vmem:[%s842 + $0x20] sm:%s835]
                %849 = vst [vmem:[%s843 + $0x10] sm:%s835] %v848
                %v850 = vld [vmem:[%s842 + $0x30] sm:%s835]
                %851 = vst [vmem:[%s843 + $0x18] sm:%s835] %v850
                %v852 = vld [vmem:[%s842 + $0x40] sm:%s835]
                %853 = vst [vmem:[%s843 + $0x20] sm:%s835] %v852
                %v854 = vld [vmem:[%s842 + $0x50] sm:%s835]
                %855 = vst [vmem:[%s843 + $0x28] sm:%s835] %v854
                %v856 = vld [vmem:[%s842 + $0x60] sm:%s835]
                %857 = vst [vmem:[%s843 + $0x30] sm:%s835] %v856
                %v858 = vld [vmem:[%s842 + $0x70] sm:%s835]
                %859 = vst [vmem:[%s843 + $0x38] sm:%s835] %v858
                %v860 = vld [vmem:[%s842 + $0x80] sm:%s835]
                %861 = vst [vmem:[%s843 + $0x40] sm:%s835] %v860
                %v862 = vld [vmem:[%s842 + $0x90] sm:%s835]
                %863 = vst [vmem:[%s843 + $0x48] sm:%s835] %v862
                %v864 = vld [vmem:[%s842 + $0xa0] sm:%s835]
                %865 = vst [vmem:[%s843 + $0x50] sm:%s835] %v864
                %v866 = vld [vmem:[%s842 + $0xb0] sm:%s835]
                %867 = vst [vmem:[%s843 + $0x58] sm:%s835] %v866
                %v868 = vld [vmem:[%s842 + $0xc0] sm:%s835]
                %869 = vst [vmem:[%s843 + $0x60] sm:%s835] %v868
                %v870 = vld [vmem:[%s842 + $0xd0] sm:%s835]
                %871 = vst [vmem:[%s843 + $0x68] sm:%s835] %v870
                %v872 = vld [vmem:[%s842 + $0xe0] sm:%s835]
                %873 = vst [vmem:[%s843 + $0x70] sm:%s835] %v872
                %v874 = vld [vmem:[%s842 + $0xf0] sm:%s835]
                %875 = vst [vmem:[%s843 + $0x78] sm:%s835] %v874
                %v876 = vld [vmem:[%s842 + $0x100] sm:%s835]
                %877 = vst [vmem:[%s843 + $0x80] sm:%s835] %v876
                %v878 = vld [vmem:[%s842 + $0x110] sm:%s835]
                %879 = vst [vmem:[%s843 + $0x88] sm:%s835] %v878
                %v880 = vld [vmem:[%s842 + $0x120] sm:%s835]
                %881 = vst [vmem:[%s843 + $0x90] sm:%s835] %v880
                %v882 = vld [vmem:[%s842 + $0x130] sm:%s835]
                %883 = vst [vmem:[%s843 + $0x98] sm:%s835] %v882
                %v884 = vld [vmem:[%s842 + $0x140] sm:%s835]
                %885 = vst [vmem:[%s843 + $0xa0] sm:%s835] %v884
                %v886 = vld [vmem:[%s842 + $0x150] sm:%s835]
                %887 = vst [vmem:[%s843 + $0xa8] sm:%s835] %v886
                %v888 = vld [vmem:[%s842 + $0x160] sm:%s835]
                %889 = vst [vmem:[%s843 + $0xb0] sm:%s835] %v888
                %v890 = vld [vmem:[%s842 + $0x170] sm:%s835]
                %891 = vst [vmem:[%s843 + $0xb8] sm:%s835] %v890
                %v892 = vld [vmem:[%s842 + $0x180] sm:%s835]
                %893 = vst [vmem:[%s843 + $0xc0] sm:%s835] %v892
                %v894 = vld [vmem:[%s842 + $0x190] sm:%s835]
                %895 = vst [vmem:[%s843 + $0xc8] sm:%s835] %v894
                %v896 = vld [vmem:[%s842 + $0x1a0] sm:%s835]
                %897 = vst [vmem:[%s843 + $0xd0] sm:%s835] %v896
                %v898 = vld [vmem:[%s842 + $0x1b0] sm:%s835]
                %899 = vst [vmem:[%s843 + $0xd8] sm:%s835] %v898
                %v900 = vld [vmem:[%s842 + $0x1c0] sm:%s835]
                %901 = vst [vmem:[%s843 + $0xe0] sm:%s835] %v900
                %v902 = vld [vmem:[%s842 + $0x1d0] sm:%s835]
                %903 = vst [vmem:[%s843 + $0xe8] sm:%s835] %v902
                %v904 = vld [vmem:[%s842 + $0x1e0] sm:%s835]
                %905 = vst [vmem:[%s843 + $0xf0] sm:%s835] %v904
                %v906 = vld [vmem:[%s842 + $0x1f0] sm:%s835]
                %907 = vst [vmem:[%s843 + $0xf8] sm:%s835] %v906
                %v908 = vld [vmem:[%s842 + $0x200] sm:%s835]
                %909 = vst [vmem:[%s843 + $0x100] sm:%s835] %v908
                %v910 = vld [vmem:[%s842 + $0x210] sm:%s835]
                %911 = vst [vmem:[%s843 + $0x108] sm:%s835] %v910
                %v912 = vld [vmem:[%s842 + $0x220] sm:%s835]
                %913 = vst [vmem:[%s843 + $0x110] sm:%s835] %v912
                %v914 = vld [vmem:[%s842 + $0x230] sm:%s835]
                %915 = vst [vmem:[%s843 + $0x118] sm:%s835] %v914
                %v916 = vld [vmem:[%s842 + $0x240] sm:%s835]
                %917 = vst [vmem:[%s843 + $0x120] sm:%s835] %v916
                %v918 = vld [vmem:[%s842 + $0x250] sm:%s835]
                %919 = vst [vmem:[%s843 + $0x128] sm:%s835] %v918
                %v920 = vld [vmem:[%s842 + $0x260] sm:%s835]
                %921 = vst [vmem:[%s843 + $0x130] sm:%s835] %v920
                %v922 = vld [vmem:[%s842 + $0x270] sm:%s835]
                %923 = vst [vmem:[%s843 + $0x138] sm:%s835] %v922
                %v924 = vld [vmem:[%s842 + $0x280] sm:%s835]
                %925 = vst [vmem:[%s843 + $0x140] sm:%s835] %v924
                %v926 = vld [vmem:[%s842 + $0x290] sm:%s835]
                %927 = vst [vmem:[%s843 + $0x148] sm:%s835] %v926
                %v928 = vld [vmem:[%s842 + $0x2a0] sm:%s835]
                %929 = vst [vmem:[%s843 + $0x150] sm:%s835] %v928
                %v930 = vld [vmem:[%s842 + $0x2b0] sm:%s835]
                %931 = vst [vmem:[%s843 + $0x158] sm:%s835] %v930
                %v932 = vld [vmem:[%s842 + $0x2c0] sm:%s835]
                %933 = vst [vmem:[%s843 + $0x160] sm:%s835] %v932
                %v934 = vld [vmem:[%s842 + $0x2d0] sm:%s835]
                %935 = vst [vmem:[%s843 + $0x168] sm:%s835] %v934
                %v936 = vld [vmem:[%s842 + $0x2e0] sm:%s835]
                %937 = vst [vmem:[%s843 + $0x170] sm:%s835] %v936
                %v938 = vld [vmem:[%s842 + $0x2f0] sm:%s835]
                %939 = vst [vmem:[%s843 + $0x178] sm:%s835] %v938
                %v940 = vld [vmem:[%s842 + $0x300] sm:%s835]
                %941 = vst [vmem:[%s843 + $0x180] sm:%s835] %v940
                %v942 = vld [vmem:[%s842 + $0x310] sm:%s835]
                %943 = vst [vmem:[%s843 + $0x188] sm:%s835] %v942
                %v944 = vld [vmem:[%s842 + $0x320] sm:%s835]
                %945 = vst [vmem:[%s843 + $0x190] sm:%s835] %v944
                %v946 = vld [vmem:[%s842 + $0x330] sm:%s835]
                %947 = vst [vmem:[%s843 + $0x198] sm:%s835] %v946
                %v948 = vld [vmem:[%s842 + $0x340] sm:%s835]
                %949 = vst [vmem:[%s843 + $0x1a0] sm:%s835] %v948
                %v950 = vld [vmem:[%s842 + $0x350] sm:%s835]
                %951 = vst [vmem:[%s843 + $0x1a8] sm:%s835] %v950
                %v952 = vld [vmem:[%s842 + $0x360] sm:%s835]
                %953 = vst [vmem:[%s843 + $0x1b0] sm:%s835] %v952
                %v954 = vld [vmem:[%s842 + $0x370] sm:%s835]
                %955 = vst [vmem:[%s843 + $0x1b8] sm:%s835] %v954
                %v956 = vld [vmem:[%s842 + $0x380] sm:%s835]
                %957 = vst [vmem:[%s843 + $0x1c0] sm:%s835] %v956
                %v958 = vld [vmem:[%s842 + $0x390] sm:%s835]
                %959 = vst [vmem:[%s843 + $0x1c8] sm:%s835] %v958
                %v960 = vld [vmem:[%s842 + $0x3a0] sm:%s835]
                %961 = vst [vmem:[%s843 + $0x1d0] sm:%s835] %v960
                %v962 = vld [vmem:[%s842 + $0x3b0] sm:%s835]
                %963 = vst [vmem:[%s843 + $0x1d8] sm:%s835] %v962
                %v964 = vld [vmem:[%s842 + $0x3c0] sm:%s835]
                %965 = vst [vmem:[%s843 + $0x1e0] sm:%s835] %v964
                %v966 = vld [vmem:[%s842 + $0x3d0] sm:%s835]
                %967 = vst [vmem:[%s843 + $0x1e8] sm:%s835] %v966
                %v968 = vld [vmem:[%s842 + $0x3e0] sm:%s835]
                %969 = vst [vmem:[%s843 + $0x1f0] sm:%s835] %v968
                %v970 = vld [vmem:[%s842 + $0x3f0] sm:%s835]
                %971 = vst [vmem:[%s843 + $0x1f8] sm:%s835] %v970
              $region179: #{c_vss_block_forward.1} parent=173 // loop_footer
                %s841 = sadd.s32 1, %s837
              $region180: #{c_vss_block_forward.1} parent=173 // loop_footer_branch
                %836 = sbr.rel target = $region176
              $region181: #{c_vss_block_forward.1} parent=173 // loop_exit
                _
            $region174: #{c_vss_block_forward.1} parent=165 // pred_fallthru
              _
          $region166: #{c_vss_block_forward.1} parent=161 // pred_fallthru
            _
          %1112 = vnop
        $region162: #{c_vss_block_forward.1} parent=35 // pred_fallthru
          _
      $region36: #{c_vss_block_forward.1} parent=5 // pred_fallthru
        _
      %p1113 = scmp.le.s32.totalorder 1, %s17
      %p1114 = scmp.lt.s32.totalorder %s17, 9
      %p1115 = pnand %p1113, %p1114
      %p1116 = pneg %p1115
      // Predicated region
      $region197: #{c_vss_block_forward.1} parent=5 // pred_check
        _
      $region198: #{c_vss_block_forward.1} parent=5 // pred_check_branch
        %1118 = sbr.rel (%p1115) target = $region200
      $region199: #{c_vss_block_forward.1} parent=5 // pred_region
        %s1119 = ssub.s32 %s17, 1
        %s1120 = sand.u32 %s44, 1
        %s1121 = sand.u32 %s44, 1
        %s1122 = smul.addr %s1121, 64
        %s1123 = scalar_lea.vmem [#allocation3], %s1122
        // Predicated region
        $region201: #{c_vss_block_forward.1} parent=199 // pred_check
          %p1124 = pneg %p57
        $region202: #{c_vss_block_forward.1} parent=199 // pred_check_branch
          %1126 = sbr.rel (%p1124) target = $region204
        $region203: #{c_vss_block_forward.1} parent=199 // pred_region
          _
        $region204: #{c_vss_block_forward.1} parent=199 // pred_fallthru
          _
        %s1127 = sand.u32 %s72, 1
        %s1128 = sand.u32 %s72, 1
        %s1129 = smul.addr %s1128, 64
        %s1130 = scalar_lea.vmem [#allocation4], %s1129
        // Predicated region
        $region205: #{c_vss_block_forward.1} parent=199 // pred_check
          %p1131 = pneg %p85
        $region206: #{c_vss_block_forward.1} parent=199 // pred_check_branch
          %1133 = sbr.rel (%p1131) target = $region208
        $region207: #{c_vss_block_forward.1} parent=199 // pred_region
          _
        $region208: #{c_vss_block_forward.1} parent=199 // pred_fallthru
          _
        %s1134 = sand.u32 %s152, 1
        %s1135 = sand.u32 %s152, 1
        %s1136 = smul.addr %s1135, 512
        %s1137 = scalar_lea.vmem [#allocation5], %s1136
        // Predicated region
        $region209: #{c_vss_block_forward.1} parent=199 // pred_check
          %p1138 = pneg %p165
        $region210: #{c_vss_block_forward.1} parent=199 // pred_check_branch
          %1140 = sbr.rel (%p1138) target = $region212
        $region211: #{c_vss_block_forward.1} parent=199 // pred_region
          _
        $region212: #{c_vss_block_forward.1} parent=199 // pred_fallthru
          _
        %s1141 = sand.u32 %s180, 1
        %s1142 = sand.u32 %s180, 1
        %s1143 = smul.addr %s1142, 512
        %s1144 = scalar_lea.vmem [#allocation6], %s1143
        // Predicated region
        $region213: #{c_vss_block_forward.1} parent=199 // pred_check
          %p1145 = pneg %p193
        $region214: #{c_vss_block_forward.1} parent=199 // pred_check_branch
          %1147 = sbr.rel (%p1145) target = $region216
        $region215: #{c_vss_block_forward.1} parent=199 // pred_region
          _
        $region216: #{c_vss_block_forward.1} parent=199 // pred_fallthru
          _
        %s1148 = sand.u32 %s44, 1
        %s1149 = sand.u32 %s44, 1
        %s1150 = smul.addr %s1149, 64
        %s1151 = scalar_lea.vmem [#allocation3], %s1150
        %p1152 = pneg %p57
        %p1153 = pneg %p54
        %s1154 = sand.u32 %s72, 1
        %s1155 = sand.u32 %s72, 1
        %s1156 = smul.addr %s1155, 64
        %s1157 = scalar_lea.vmem [#allocation4], %s1156
        %p1158 = pneg %p85
        %p1159 = pneg %p82
        %p1160 = scmp.lt.s32.totalorder %s26, 1
        %s1161 = scalar_select %p1160, %s26, 1
        %s1162 = smul.addr %s1161, 8
        %s1163 = scalar_lea.vmem %s2, %s1162
        %p1164 = pneg %p111
        %p1165 = pneg %p108
        %p1166 = scmp.lt.s32.totalorder %s26, 1
        %s1167 = scalar_select %p1166, %s26, 1
        %s1168 = scalar_lea.vmem %s3, %s1167
        %p1169 = pneg %p137
        %p1170 = pneg %p134
        %s1171 = sand.u32 %s152, 1
        %s1172 = sand.u32 %s152, 1
        %s1173 = smul.addr %s1172, 512
        %s1174 = scalar_lea.vmem [#allocation5], %s1173
        %p1175 = pneg %p165
        %p1176 = pneg %p162
        %s1177 = sand.u32 %s180, 1
        %s1178 = sand.u32 %s180, 1
        %s1179 = smul.addr %s1178, 512
        %s1180 = scalar_lea.vmem [#allocation6], %s1179
        %p1181 = pneg %p193
        %p1182 = pneg %p190
        %p1183 = pneg %p214
        %p1184 = pneg %p211
        %p1185 = pneg %p235
        %p1186 = pneg %p232
        %p1187 = pneg %p256
        %p1188 = pneg %p253
        %p1189 = pneg %p277
        %p1190 = pneg %p274
        %p1191 = pneg %p298
        %p1192 = pneg %p295
        %p1193 = pneg %p326
        %p1194 = pneg %p323
        %s1195 = sand.u32 %s313, 1
        %s1196 = sand.u32 %s313, 1
        %s1197 = smul.addr %s1196, 64
        %s1198 = scalar_lea.vmem [#allocation7], %s1197
        %s1199 = smul.u32 8, %s27
        %s1200 = smul.u32 8, %s27
        %p1201 = scmp.lt.s32.totalorder %s26, 1
        %s1202 = scalar_select %p1201, %s26, 1
        %s1203 = smul.addr %s1202, 8
        %s1204 = scalar_lea.vmem %s2, %s1203
        %p1205 = scmp.lt.s32.totalorder %s26, 1
        %s1206 = scalar_select %p1205, %s26, 1
        %s1207 = scalar_lea.vmem %s3, %s1206
        %s1208 = smul.u32 64, %s27
        %s1209 = smul.u32 64, %s27
        %s1210 = smul.u32 8, %s27
        %p1211 = scmp.eq.s32.totalorder %s27, 0
        // Predicated region
        $region217: #{c_vss_block_forward.1} parent=199 // pred_check
          %p1212 = pneg %p1211
        $region218: #{c_vss_block_forward.1} parent=199 // pred_check_branch
          %1214 = sbr.rel (%p1212) target = $region220
        $region219: #{c_vss_block_forward.1} parent=199 // pred_region
          %1215 = vst [vmem:[#allocation2] sm:$0xff] 0.0
        $region220: #{c_vss_block_forward.1} parent=199 // pred_fallthru
          _
        %v1216 = vld [vmem:[%s1204] sm:$0xff]
        %v1217 = vld [vmem:[%s1207] sm:$0x1]
        %v1218 = vld [vmem:[%s6] sm:$0xff]
        %v1219 = vld [vmem:[%s6 + $0x8] sm:$0xff]
        %v1220 = vld [vmem:[%s7] sm:$0xff]
        %v1221 = vld [vmem:[%s7 + $0x8] sm:$0xff]
        %v1222 = vld [vmem:[%s9] sm:$0xff]
        %v1223 = vld [vmem:[%s10] sm:$0xff]
        %v1224 = vld [vmem:[#allocation2] sm:$0xff]
        loop: start=0, step=1, limit=16
        $region221: #{c_vss_block_forward.1} parent=199 // loop_pre_header
          _
        $region222: #{c_vss_block_forward.1} parent=199 // loop_header
          %s1226 = sphi 0, %s1230
          %p1227 = scmp.ge.s32.totalorder %s1226, 16
          %v1231 = vphi %v1224, %v2049
        $region223: #{c_vss_block_forward.1} parent=199 // loop_header_branch
          %1229 = sbr.rel (%p1227) target = $region227
        $region224: #{c_vss_block_forward.1} parent=199 // loop_body
          %s1232 = smul.u32 %s1226, 4
          %s1233 = scalar_lea.vmem %s1130, %s1232 [#allocation4]
          %v1234 = vld [vmem:[%s1233] sm:$0x1]
          %s1235 = scalar_lea.vmem %s1123, %s1232 [#allocation3]
          %v1236 = vld [vmem:[%s1235] sm:$0x1]
          %v1237 = vlaneseq
          %v1238 = vshrl.u32 %v1237, 7
          %v1239 = vsub.s32 0, %v1238
          %v1240 = vrot.slane %v1234, %v1239
          %v1241 = vmul.f32 %v1240, %v1216
          %v1242 = vmul.f32 %v1241, 1.442695
          %v1243 = vpow.pop %v1242
          %v1244 = vmul.f32 %v1234, %v1236
          %s1245 = smul.u32 %s1232, 8
          %s1246 = scalar_lea.vmem %s1137, %s1245 [#allocation5]
          %v1247 = vld [vmem:[%s1246] sm:$0xff]
          %v1248 = vlaneseq
          %v1249 = vshrl.u32 %v1248, 7
          %v1250 = vsub.s32 0, %v1249
          %v1251 = vrot.slane %v1244, %v1250
          %v1252 = vmul.f32 %v1251, %v1247
          %v1253 = vmul.f32 %v1252, %v1252
          %v1254 = vrot.slane %v1253, 4
          %v1255 = vadd.f32 %v1253, %v1254
          %v1256 = vrot.slane %v1255, 2
          %v1257 = vadd.f32 %v1255, %v1256
          %v1258 = vrot.slane %v1257, 1
          %v1259 = vadd.f32 %v1257, %v1258
          %v1260 = vrsqrt.pop %v1259
          %v1261 = vmul.f32 %v1259, %v1260
          %vm1262 = vcmp.eq.f32.partialorder %v1259, inf
          %v1263 = vsel %vm1262, %v1259, %v1261
          %vm1264 = vcmp.eq.f32.partialorder %v1259, 0.0
          %v1265 = vand.u32 %v1259, 2147483648
          %v1266 = vsel %vm1264, %v1265, %v1263
          %v1267 = vadd.f32 %v1266, 1e-06
          %v1268 = vrcp.pop %v1267
          %v1269 = vmul.f32 %v1252, %v1231
          %v1270 = vrot.slane %v1269, 4
          %v1271 = vadd.f32 %v1269, %v1270
          %v1272 = vrot.slane %v1271, 2
          %v1273 = vadd.f32 %v1271, %v1272
          %v1274 = vrot.slane %v1273, 1
          %v1275 = vadd.f32 %v1273, %v1274
          %v1276 = vmul.f32 %v1231, %v1231
          %v1277 = vrot.slane %v1276, 4
          %v1278 = vadd.f32 %v1276, %v1277
          %v1279 = vrot.slane %v1278, 2
          %v1280 = vadd.f32 %v1278, %v1279
          %v1281 = vrot.slane %v1280, 1
          %v1282 = vadd.f32 %v1280, %v1281
          %v1283 = vrsqrt.pop %v1282
          %v1284 = vmul.f32 %v1282, %v1283
          %vm1285 = vcmp.eq.f32.partialorder %v1282, inf
          %v1286 = vsel %vm1285, %v1282, %v1284
          %vm1287 = vcmp.eq.f32.partialorder %v1282, 0.0
          %v1288 = vand.u32 %v1282, 2147483648
          %v1289 = vsel %vm1287, %v1288, %v1286
          %v1290 = vadd.f32 %v1289, 1e-06
          %v1291 = vmul.f32 %v1275, %v1268
          %v1292 = vrcp.pop %v1290
          %v1293 = vmul.f32 %v1291, %v1292
          %v1294 = vmul.f32 %v1293, %v1218
          %v1295 = vmul.f32 %v1293, %v1219
          %v1296 = vadd.f32 %v1294, %v1220
          %v1297 = vadd.f32 %v1295, %v1221
          %v1298 = vmax.f32 %v1296, 0.0
          %v1299 = vmax.f32 %v1297, 0.0
          %v1300 = vlaneseq
          %v1301 = vshrl.u32 %v1300, 7
          %v1302 = vsub.s32 0, %v1301
          %v1303 = vrot.slane %v1298, %v1302
          %v1304 = vld [vmem:[%s8] sm:$0xff]
          %v1305 = vmul.f32 %v1303, %v1304
          %v1306 = vadd.f32 %v1222, %v1305
          %v1307 = vlaneseq
          %v1308 = vshrl.u32 %v1307, 7
          %v1309 = vsub.s32 1, %v1308
          %v1310 = vrot.slane %v1298, %v1309
          %s1311 = scalar_lea.vmem %s8, 8
          %v1312 = vld [vmem:[%s1311] sm:$0xff]
          %v1313 = vmul.f32 %v1310, %v1312
          %v1314 = vlaneseq
          %v1315 = vshrl.u32 %v1314, 7
          %v1316 = vsub.s32 2, %v1315
          %v1317 = vrot.slane %v1298, %v1316
          %s1318 = scalar_lea.vmem %s8, 16
          %v1319 = vld [vmem:[%s1318] sm:$0xff]
          %v1320 = vmul.f32 %v1317, %v1319
          %v1321 = vlaneseq
          %v1322 = vshrl.u32 %v1321, 7
          %v1323 = vsub.s32 3, %v1322
          %v1324 = vrot.slane %v1298, %v1323
          %s1325 = scalar_lea.vmem %s8, 24
          %v1326 = vld [vmem:[%s1325] sm:$0xff]
          %v1327 = vmul.f32 %v1324, %v1326
          %v1328 = vlaneseq
          %v1329 = vshrl.u32 %v1328, 7
          %v1330 = vsub.s32 4, %v1329
          %v1331 = vrot.slane %v1298, %v1330
          %s1332 = scalar_lea.vmem %s8, 32
          %v1333 = vld [vmem:[%s1332] sm:$0xff]
          %v1334 = vmul.f32 %v1331, %v1333
          %v1335 = vadd.f32 %v1306, %v1334
          %v1336 = vlaneseq
          %v1337 = vshrl.u32 %v1336, 7
          %v1338 = vsub.s32 5, %v1337
          %v1339 = vrot.slane %v1298, %v1338
          %s1340 = scalar_lea.vmem %s8, 40
          %v1341 = vld [vmem:[%s1340] sm:$0xff]
          %v1342 = vmul.f32 %v1339, %v1341
          %v1343 = vadd.f32 %v1313, %v1342
          %v1344 = vlaneseq
          %v1345 = vshrl.u32 %v1344, 7
          %v1346 = vsub.s32 6, %v1345
          %v1347 = vrot.slane %v1298, %v1346
          %s1348 = scalar_lea.vmem %s8, 48
          %v1349 = vld [vmem:[%s1348] sm:$0xff]
          %v1350 = vmul.f32 %v1347, %v1349
          %v1351 = vadd.f32 %v1320, %v1350
          %v1352 = vlaneseq
          %v1353 = vshrl.u32 %v1352, 7
          %v1354 = vsub.s32 7, %v1353
          %v1355 = vrot.slane %v1298, %v1354
          %s1356 = scalar_lea.vmem %s8, 56
          %v1357 = vld [vmem:[%s1356] sm:$0xff]
          %v1358 = vmul.f32 %v1355, %v1357
          %v1359 = vadd.f32 %v1327, %v1358
          %v1360 = vlaneseq
          %v1361 = vshrl.u32 %v1360, 7
          %v1362 = vsub.s32 0, %v1361
          %v1363 = vrot.slane %v1299, %v1362
          %s1364 = scalar_lea.vmem %s8, 64
          %v1365 = vld [vmem:[%s1364] sm:$0xff]
          %v1366 = vmul.f32 %v1363, %v1365
          %v1367 = vadd.f32 %v1335, %v1366
          %v1368 = vlaneseq
          %v1369 = vshrl.u32 %v1368, 7
          %v1370 = vsub.s32 1, %v1369
          %v1371 = vrot.slane %v1299, %v1370
          %s1372 = scalar_lea.vmem %s8, 72
          %v1373 = vld [vmem:[%s1372] sm:$0xff]
          %v1374 = vmul.f32 %v1371, %v1373
          %v1375 = vadd.f32 %v1343, %v1374
          %v1376 = vlaneseq
          %v1377 = vshrl.u32 %v1376, 7
          %v1378 = vsub.s32 2, %v1377
          %v1379 = vrot.slane %v1299, %v1378
          %s1380 = scalar_lea.vmem %s8, 80
          %v1381 = vld [vmem:[%s1380] sm:$0xff]
          %v1382 = vmul.f32 %v1379, %v1381
          %v1383 = vadd.f32 %v1351, %v1382
          %v1384 = vlaneseq
          %v1385 = vshrl.u32 %v1384, 7
          %v1386 = vsub.s32 3, %v1385
          %v1387 = vrot.slane %v1299, %v1386
          %s1388 = scalar_lea.vmem %s8, 88
          %v1389 = vld [vmem:[%s1388] sm:$0xff]
          %v1390 = vmul.f32 %v1387, %v1389
          %v1391 = vadd.f32 %v1359, %v1390
          %v1392 = vlaneseq
          %v1393 = vshrl.u32 %v1392, 7
          %v1394 = vsub.s32 4, %v1393
          %v1395 = vrot.slane %v1299, %v1394
          %s1396 = scalar_lea.vmem %s8, 96
          %v1397 = vld [vmem:[%s1396] sm:$0xff]
          %v1398 = vmul.f32 %v1395, %v1397
          %v1399 = vadd.f32 %v1367, %v1398
          %v1400 = vlaneseq
          %v1401 = vshrl.u32 %v1400, 7
          %v1402 = vsub.s32 5, %v1401
          %v1403 = vrot.slane %v1299, %v1402
          %s1404 = scalar_lea.vmem %s8, 104
          %v1405 = vld [vmem:[%s1404] sm:$0xff]
          %v1406 = vmul.f32 %v1403, %v1405
          %v1407 = vadd.f32 %v1375, %v1406
          %v1408 = vlaneseq
          %v1409 = vshrl.u32 %v1408, 7
          %v1410 = vsub.s32 6, %v1409
          %v1411 = vrot.slane %v1299, %v1410
          %s1412 = scalar_lea.vmem %s8, 112
          %v1413 = vld [vmem:[%s1412] sm:$0xff]
          %v1414 = vmul.f32 %v1411, %v1413
          %v1415 = vadd.f32 %v1383, %v1414
          %v1416 = vlaneseq
          %v1417 = vshrl.u32 %v1416, 7
          %v1418 = vsub.s32 7, %v1417
          %v1419 = vrot.slane %v1299, %v1418
          %s1420 = scalar_lea.vmem %s8, 120
          %v1421 = vld [vmem:[%s1420] sm:$0xff]
          %v1422 = vmul.f32 %v1419, %v1421
          %v1423 = vadd.f32 %v1391, %v1422
          %v1424 = vadd.f32 %v1399, %v1407
          %v1425 = vadd.f32 %v1415, %v1423
          %v1426 = vadd.f32 %v1424, %v1425
          %v1427 = vxor.u32 %v1426, 2147483648
          %v1428 = vmul.f32 %v1427, 1.442695
          %v1429 = vpow.pop %v1428
          %v1430 = vadd.f32 %v1429, 1.0
          %v1431 = vrcp.pop %v1430
          %v1432 = vmul.f32 1.0, %v1431
          %v1433 = vmul.f32 %v1243, %v1231
          %v1434 = vmul.f32 %v1223, %v1432
          %v1435 = vadd.f32 %v1434, 1.0
          %v1436 = vmul.f32 %v1435, %v1252
          %v1437 = vadd.f32 %v1433, %v1436
          %s1438 = scalar_lea.vmem %s1144, %s1245 [#allocation6]
          %v1439 = vld [vmem:[%s1438] sm:$0xff]
          %v1440 = vmul.f32 %v1437, %v1439
          %v1441 = vrot.slane %v1440, 4
          %v1442 = vadd.f32 %v1440, %v1441
          %v1443 = vrot.slane %v1442, 2
          %v1444 = vadd.f32 %v1442, %v1443
          %v1445 = vrot.slane %v1444, 1
          %v1446 = vadd.f32 %v1444, %v1445
          %v1447 = vmul.f32 %v1236, %v1217
          %v1448 = vadd.f32 %v1446, %v1447
          %s1449 = scalar_lea.vmem %s1198, %s1232 [#allocation7]
          %1450 = vst [vmem:[%s1449] sm:$0x1] %v1448
          %s1451 = sadd.s32 %s1232, 1
          %s1452 = scalar_lea.vmem %s1130, %s1451 [#allocation4]
          %v1453 = vld [vmem:[%s1452] sm:$0x1]
          %s1454 = scalar_lea.vmem %s1123, %s1451 [#allocation3]
          %v1455 = vld [vmem:[%s1454] sm:$0x1]
          %v1456 = vlaneseq
          %v1457 = vshrl.u32 %v1456, 7
          %v1458 = vsub.s32 0, %v1457
          %v1459 = vrot.slane %v1453, %v1458
          %v1460 = vmul.f32 %v1459, %v1216
          %v1461 = vmul.f32 %v1460, 1.442695
          %v1462 = vpow.pop %v1461
          %v1463 = vmul.f32 %v1453, %v1455
          %s1464 = smul.u32 %s1451, 8
          %s1465 = scalar_lea.vmem %s1137, %s1464 [#allocation5]
          %v1466 = vld [vmem:[%s1465] sm:$0xff]
          %v1467 = vlaneseq
          %v1468 = vshrl.u32 %v1467, 7
          %v1469 = vsub.s32 0, %v1468
          %v1470 = vrot.slane %v1463, %v1469
          %v1471 = vmul.f32 %v1470, %v1466
          %v1472 = vmul.f32 %v1471, %v1471
          %v1473 = vrot.slane %v1472, 4
          %v1474 = vadd.f32 %v1472, %v1473
          %v1475 = vrot.slane %v1474, 2
          %v1476 = vadd.f32 %v1474, %v1475
          %v1477 = vrot.slane %v1476, 1
          %v1478 = vadd.f32 %v1476, %v1477
          %v1479 = vrsqrt.pop %v1478
          %v1480 = vmul.f32 %v1478, %v1479
          %vm1481 = vcmp.eq.f32.partialorder %v1478, inf
          %v1482 = vsel %vm1481, %v1478, %v1480
          %vm1483 = vcmp.eq.f32.partialorder %v1478, 0.0
          %v1484 = vand.u32 %v1478, 2147483648
          %v1485 = vsel %vm1483, %v1484, %v1482
          %v1486 = vadd.f32 %v1485, 1e-06
          %v1487 = vrcp.pop %v1486
          %v1488 = vmul.f32 %v1471, %v1437
          %v1489 = vrot.slane %v1488, 4
          %v1490 = vadd.f32 %v1488, %v1489
          %v1491 = vrot.slane %v1490, 2
          %v1492 = vadd.f32 %v1490, %v1491
          %v1493 = vrot.slane %v1492, 1
          %v1494 = vadd.f32 %v1492, %v1493
          %v1495 = vmul.f32 %v1437, %v1437
          %v1496 = vrot.slane %v1495, 4
          %v1497 = vadd.f32 %v1495, %v1496
          %v1498 = vrot.slane %v1497, 2
          %v1499 = vadd.f32 %v1497, %v1498
          %v1500 = vrot.slane %v1499, 1
          %v1501 = vadd.f32 %v1499, %v1500
          %v1502 = vrsqrt.pop %v1501
          %v1503 = vmul.f32 %v1501, %v1502
          %vm1504 = vcmp.eq.f32.partialorder %v1501, inf
          %v1505 = vsel %vm1504, %v1501, %v1503
          %vm1506 = vcmp.eq.f32.partialorder %v1501, 0.0
          %v1507 = vand.u32 %v1501, 2147483648
          %v1508 = vsel %vm1506, %v1507, %v1505
          %v1509 = vadd.f32 %v1508, 1e-06
          %v1510 = vmul.f32 %v1494, %v1487
          %v1511 = vrcp.pop %v1509
          %v1512 = vmul.f32 %v1510, %v1511
          %v1513 = vmul.f32 %v1512, %v1218
          %v1514 = vmul.f32 %v1512, %v1219
          %v1515 = vadd.f32 %v1513, %v1220
          %v1516 = vadd.f32 %v1514, %v1221
          %v1517 = vmax.f32 %v1515, 0.0
          %v1518 = vmax.f32 %v1516, 0.0
          %v1519 = vlaneseq
          %v1520 = vshrl.u32 %v1519, 7
          %v1521 = vsub.s32 0, %v1520
          %v1522 = vrot.slane %v1517, %v1521
          %v1523 = vld [vmem:[%s8] sm:$0xff]
          %v1524 = vmul.f32 %v1522, %v1523
          %v1525 = vadd.f32 %v1222, %v1524
          %v1526 = vlaneseq
          %v1527 = vshrl.u32 %v1526, 7
          %v1528 = vsub.s32 1, %v1527
          %v1529 = vrot.slane %v1517, %v1528
          %v1530 = vld [vmem:[%s1311] sm:$0xff]
          %v1531 = vmul.f32 %v1529, %v1530
          %v1532 = vlaneseq
          %v1533 = vshrl.u32 %v1532, 7
          %v1534 = vsub.s32 2, %v1533
          %v1535 = vrot.slane %v1517, %v1534
          %v1536 = vld [vmem:[%s1318] sm:$0xff]
          %v1537 = vmul.f32 %v1535, %v1536
          %v1538 = vlaneseq
          %v1539 = vshrl.u32 %v1538, 7
          %v1540 = vsub.s32 3, %v1539
          %v1541 = vrot.slane %v1517, %v1540
          %v1542 = vld [vmem:[%s1325] sm:$0xff]
          %v1543 = vmul.f32 %v1541, %v1542
          %v1544 = vlaneseq
          %v1545 = vshrl.u32 %v1544, 7
          %v1546 = vsub.s32 4, %v1545
          %v1547 = vrot.slane %v1517, %v1546
          %v1548 = vld [vmem:[%s1332] sm:$0xff]
          %v1549 = vmul.f32 %v1547, %v1548
          %v1550 = vadd.f32 %v1525, %v1549
          %v1551 = vlaneseq
          %v1552 = vshrl.u32 %v1551, 7
          %v1553 = vsub.s32 5, %v1552
          %v1554 = vrot.slane %v1517, %v1553
          %v1555 = vld [vmem:[%s1340] sm:$0xff]
          %v1556 = vmul.f32 %v1554, %v1555
          %v1557 = vadd.f32 %v1531, %v1556
          %v1558 = vlaneseq
          %v1559 = vshrl.u32 %v1558, 7
          %v1560 = vsub.s32 6, %v1559
          %v1561 = vrot.slane %v1517, %v1560
          %v1562 = vld [vmem:[%s1348] sm:$0xff]
          %v1563 = vmul.f32 %v1561, %v1562
          %v1564 = vadd.f32 %v1537, %v1563
          %v1565 = vlaneseq
          %v1566 = vshrl.u32 %v1565, 7
          %v1567 = vsub.s32 7, %v1566
          %v1568 = vrot.slane %v1517, %v1567
          %v1569 = vld [vmem:[%s1356] sm:$0xff]
          %v1570 = vmul.f32 %v1568, %v1569
          %v1571 = vadd.f32 %v1543, %v1570
          %v1572 = vlaneseq
          %v1573 = vshrl.u32 %v1572, 7
          %v1574 = vsub.s32 0, %v1573
          %v1575 = vrot.slane %v1518, %v1574
          %v1576 = vld [vmem:[%s1364] sm:$0xff]
          %v1577 = vmul.f32 %v1575, %v1576
          %v1578 = vadd.f32 %v1550, %v1577
          %v1579 = vlaneseq
          %v1580 = vshrl.u32 %v1579, 7
          %v1581 = vsub.s32 1, %v1580
          %v1582 = vrot.slane %v1518, %v1581
          %v1583 = vld [vmem:[%s1372] sm:$0xff]
          %v1584 = vmul.f32 %v1582, %v1583
          %v1585 = vadd.f32 %v1557, %v1584
          %v1586 = vlaneseq
          %v1587 = vshrl.u32 %v1586, 7
          %v1588 = vsub.s32 2, %v1587
          %v1589 = vrot.slane %v1518, %v1588
          %v1590 = vld [vmem:[%s1380] sm:$0xff]
          %v1591 = vmul.f32 %v1589, %v1590
          %v1592 = vadd.f32 %v1564, %v1591
          %v1593 = vlaneseq
          %v1594 = vshrl.u32 %v1593, 7
          %v1595 = vsub.s32 3, %v1594
          %v1596 = vrot.slane %v1518, %v1595
          %v1597 = vld [vmem:[%s1388] sm:$0xff]
          %v1598 = vmul.f32 %v1596, %v1597
          %v1599 = vadd.f32 %v1571, %v1598
          %v1600 = vlaneseq
          %v1601 = vshrl.u32 %v1600, 7
          %v1602 = vsub.s32 4, %v1601
          %v1603 = vrot.slane %v1518, %v1602
          %v1604 = vld [vmem:[%s1396] sm:$0xff]
          %v1605 = vmul.f32 %v1603, %v1604
          %v1606 = vadd.f32 %v1578, %v1605
          %v1607 = vlaneseq
          %v1608 = vshrl.u32 %v1607, 7
          %v1609 = vsub.s32 5, %v1608
          %v1610 = vrot.slane %v1518, %v1609
          %v1611 = vld [vmem:[%s1404] sm:$0xff]
          %v1612 = vmul.f32 %v1610, %v1611
          %v1613 = vadd.f32 %v1585, %v1612
          %v1614 = vlaneseq
          %v1615 = vshrl.u32 %v1614, 7
          %v1616 = vsub.s32 6, %v1615
          %v1617 = vrot.slane %v1518, %v1616
          %v1618 = vld [vmem:[%s1412] sm:$0xff]
          %v1619 = vmul.f32 %v1617, %v1618
          %v1620 = vadd.f32 %v1592, %v1619
          %v1621 = vlaneseq
          %v1622 = vshrl.u32 %v1621, 7
          %v1623 = vsub.s32 7, %v1622
          %v1624 = vrot.slane %v1518, %v1623
          %v1625 = vld [vmem:[%s1420] sm:$0xff]
          %v1626 = vmul.f32 %v1624, %v1625
          %v1627 = vadd.f32 %v1599, %v1626
          %v1628 = vadd.f32 %v1606, %v1613
          %v1629 = vadd.f32 %v1620, %v1627
          %v1630 = vadd.f32 %v1628, %v1629
          %v1631 = vxor.u32 %v1630, 2147483648
          %v1632 = vmul.f32 %v1631, 1.442695
          %v1633 = vpow.pop %v1632
          %v1634 = vadd.f32 %v1633, 1.0
          %v1635 = vrcp.pop %v1634
          %v1636 = vmul.f32 1.0, %v1635
          %v1637 = vmul.f32 %v1462, %v1437
          %v1638 = vmul.f32 %v1223, %v1636
          %v1639 = vadd.f32 %v1638, 1.0
          %v1640 = vmul.f32 %v1639, %v1471
          %v1641 = vadd.f32 %v1637, %v1640
          %s1642 = scalar_lea.vmem %s1144, %s1464 [#allocation6]
          %v1643 = vld [vmem:[%s1642] sm:$0xff]
          %v1644 = vmul.f32 %v1641, %v1643
          %v1645 = vrot.slane %v1644, 4
          %v1646 = vadd.f32 %v1644, %v1645
          %v1647 = vrot.slane %v1646, 2
          %v1648 = vadd.f32 %v1646, %v1647
          %v1649 = vrot.slane %v1648, 1
          %v1650 = vadd.f32 %v1648, %v1649
          %v1651 = vmul.f32 %v1455, %v1217
          %v1652 = vadd.f32 %v1650, %v1651
          %s1653 = scalar_lea.vmem %s1198, %s1451 [#allocation7]
          %1654 = vst [vmem:[%s1653] sm:$0x1] %v1652
          %s1655 = sadd.s32 %s1232, 2
          %s1656 = scalar_lea.vmem %s1130, %s1655 [#allocation4]
          %v1657 = vld [vmem:[%s1656] sm:$0x1]
          %s1658 = scalar_lea.vmem %s1123, %s1655 [#allocation3]
          %v1659 = vld [vmem:[%s1658] sm:$0x1]
          %v1660 = vlaneseq
          %v1661 = vshrl.u32 %v1660, 7
          %v1662 = vsub.s32 0, %v1661
          %v1663 = vrot.slane %v1657, %v1662
          %v1664 = vmul.f32 %v1663, %v1216
          %v1665 = vmul.f32 %v1664, 1.442695
          %v1666 = vpow.pop %v1665
          %v1667 = vmul.f32 %v1657, %v1659
          %s1668 = smul.u32 %s1655, 8
          %s1669 = scalar_lea.vmem %s1137, %s1668 [#allocation5]
          %v1670 = vld [vmem:[%s1669] sm:$0xff]
          %v1671 = vlaneseq
          %v1672 = vshrl.u32 %v1671, 7
          %v1673 = vsub.s32 0, %v1672
          %v1674 = vrot.slane %v1667, %v1673
          %v1675 = vmul.f32 %v1674, %v1670
          %v1676 = vmul.f32 %v1675, %v1675
          %v1677 = vrot.slane %v1676, 4
          %v1678 = vadd.f32 %v1676, %v1677
          %v1679 = vrot.slane %v1678, 2
          %v1680 = vadd.f32 %v1678, %v1679
          %v1681 = vrot.slane %v1680, 1
          %v1682 = vadd.f32 %v1680, %v1681
          %v1683 = vrsqrt.pop %v1682
          %v1684 = vmul.f32 %v1682, %v1683
          %vm1685 = vcmp.eq.f32.partialorder %v1682, inf
          %v1686 = vsel %vm1685, %v1682, %v1684
          %vm1687 = vcmp.eq.f32.partialorder %v1682, 0.0
          %v1688 = vand.u32 %v1682, 2147483648
          %v1689 = vsel %vm1687, %v1688, %v1686
          %v1690 = vadd.f32 %v1689, 1e-06
          %v1691 = vrcp.pop %v1690
          %v1692 = vmul.f32 %v1675, %v1641
          %v1693 = vrot.slane %v1692, 4
          %v1694 = vadd.f32 %v1692, %v1693
          %v1695 = vrot.slane %v1694, 2
          %v1696 = vadd.f32 %v1694, %v1695
          %v1697 = vrot.slane %v1696, 1
          %v1698 = vadd.f32 %v1696, %v1697
          %v1699 = vmul.f32 %v1641, %v1641
          %v1700 = vrot.slane %v1699, 4
          %v1701 = vadd.f32 %v1699, %v1700
          %v1702 = vrot.slane %v1701, 2
          %v1703 = vadd.f32 %v1701, %v1702
          %v1704 = vrot.slane %v1703, 1
          %v1705 = vadd.f32 %v1703, %v1704
          %v1706 = vrsqrt.pop %v1705
          %v1707 = vmul.f32 %v1705, %v1706
          %vm1708 = vcmp.eq.f32.partialorder %v1705, inf
          %v1709 = vsel %vm1708, %v1705, %v1707
          %vm1710 = vcmp.eq.f32.partialorder %v1705, 0.0
          %v1711 = vand.u32 %v1705, 2147483648
          %v1712 = vsel %vm1710, %v1711, %v1709
          %v1713 = vadd.f32 %v1712, 1e-06
          %v1714 = vmul.f32 %v1698, %v1691
          %v1715 = vrcp.pop %v1713
          %v1716 = vmul.f32 %v1714, %v1715
          %v1717 = vmul.f32 %v1716, %v1218
          %v1718 = vmul.f32 %v1716, %v1219
          %v1719 = vadd.f32 %v1717, %v1220
          %v1720 = vadd.f32 %v1718, %v1221
          %v1721 = vmax.f32 %v1719, 0.0
          %v1722 = vmax.f32 %v1720, 0.0
          %v1723 = vlaneseq
          %v1724 = vshrl.u32 %v1723, 7
          %v1725 = vsub.s32 0, %v1724
          %v1726 = vrot.slane %v1721, %v1725
          %v1727 = vld [vmem:[%s8] sm:$0xff]
          %v1728 = vmul.f32 %v1726, %v1727
          %v1729 = vadd.f32 %v1222, %v1728
          %v1730 = vlaneseq
          %v1731 = vshrl.u32 %v1730, 7
          %v1732 = vsub.s32 1, %v1731
          %v1733 = vrot.slane %v1721, %v1732
          %v1734 = vld [vmem:[%s1311] sm:$0xff]
          %v1735 = vmul.f32 %v1733, %v1734
          %v1736 = vlaneseq
          %v1737 = vshrl.u32 %v1736, 7
          %v1738 = vsub.s32 2, %v1737
          %v1739 = vrot.slane %v1721, %v1738
          %v1740 = vld [vmem:[%s1318] sm:$0xff]
          %v1741 = vmul.f32 %v1739, %v1740
          %v1742 = vlaneseq
          %v1743 = vshrl.u32 %v1742, 7
          %v1744 = vsub.s32 3, %v1743
          %v1745 = vrot.slane %v1721, %v1744
          %v1746 = vld [vmem:[%s1325] sm:$0xff]
          %v1747 = vmul.f32 %v1745, %v1746
          %v1748 = vlaneseq
          %v1749 = vshrl.u32 %v1748, 7
          %v1750 = vsub.s32 4, %v1749
          %v1751 = vrot.slane %v1721, %v1750
          %v1752 = vld [vmem:[%s1332] sm:$0xff]
          %v1753 = vmul.f32 %v1751, %v1752
          %v1754 = vadd.f32 %v1729, %v1753
          %v1755 = vlaneseq
          %v1756 = vshrl.u32 %v1755, 7
          %v1757 = vsub.s32 5, %v1756
          %v1758 = vrot.slane %v1721, %v1757
          %v1759 = vld [vmem:[%s1340] sm:$0xff]
          %v1760 = vmul.f32 %v1758, %v1759
          %v1761 = vadd.f32 %v1735, %v1760
          %v1762 = vlaneseq
          %v1763 = vshrl.u32 %v1762, 7
          %v1764 = vsub.s32 6, %v1763
          %v1765 = vrot.slane %v1721, %v1764
          %v1766 = vld [vmem:[%s1348] sm:$0xff]
          %v1767 = vmul.f32 %v1765, %v1766
          %v1768 = vadd.f32 %v1741, %v1767
          %v1769 = vlaneseq
          %v1770 = vshrl.u32 %v1769, 7
          %v1771 = vsub.s32 7, %v1770
          %v1772 = vrot.slane %v1721, %v1771
          %v1773 = vld [vmem:[%s1356] sm:$0xff]
          %v1774 = vmul.f32 %v1772, %v1773
          %v1775 = vadd.f32 %v1747, %v1774
          %v1776 = vlaneseq
          %v1777 = vshrl.u32 %v1776, 7
          %v1778 = vsub.s32 0, %v1777
          %v1779 = vrot.slane %v1722, %v1778
          %v1780 = vld [vmem:[%s1364] sm:$0xff]
          %v1781 = vmul.f32 %v1779, %v1780
          %v1782 = vadd.f32 %v1754, %v1781
          %v1783 = vlaneseq
          %v1784 = vshrl.u32 %v1783, 7
          %v1785 = vsub.s32 1, %v1784
          %v1786 = vrot.slane %v1722, %v1785
          %v1787 = vld [vmem:[%s1372] sm:$0xff]
          %v1788 = vmul.f32 %v1786, %v1787
          %v1789 = vadd.f32 %v1761, %v1788
          %v1790 = vlaneseq
          %v1791 = vshrl.u32 %v1790, 7
          %v1792 = vsub.s32 2, %v1791
          %v1793 = vrot.slane %v1722, %v1792
          %v1794 = vld [vmem:[%s1380] sm:$0xff]
          %v1795 = vmul.f32 %v1793, %v1794
          %v1796 = vadd.f32 %v1768, %v1795
          %v1797 = vlaneseq
          %v1798 = vshrl.u32 %v1797, 7
          %v1799 = vsub.s32 3, %v1798
          %v1800 = vrot.slane %v1722, %v1799
          %v1801 = vld [vmem:[%s1388] sm:$0xff]
          %v1802 = vmul.f32 %v1800, %v1801
          %v1803 = vadd.f32 %v1775, %v1802
          %v1804 = vlaneseq
          %v1805 = vshrl.u32 %v1804, 7
          %v1806 = vsub.s32 4, %v1805
          %v1807 = vrot.slane %v1722, %v1806
          %v1808 = vld [vmem:[%s1396] sm:$0xff]
          %v1809 = vmul.f32 %v1807, %v1808
          %v1810 = vadd.f32 %v1782, %v1809
          %v1811 = vlaneseq
          %v1812 = vshrl.u32 %v1811, 7
          %v1813 = vsub.s32 5, %v1812
          %v1814 = vrot.slane %v1722, %v1813
          %v1815 = vld [vmem:[%s1404] sm:$0xff]
          %v1816 = vmul.f32 %v1814, %v1815
          %v1817 = vadd.f32 %v1789, %v1816
          %v1818 = vlaneseq
          %v1819 = vshrl.u32 %v1818, 7
          %v1820 = vsub.s32 6, %v1819
          %v1821 = vrot.slane %v1722, %v1820
          %v1822 = vld [vmem:[%s1412] sm:$0xff]
          %v1823 = vmul.f32 %v1821, %v1822
          %v1824 = vadd.f32 %v1796, %v1823
          %v1825 = vlaneseq
          %v1826 = vshrl.u32 %v1825, 7
          %v1827 = vsub.s32 7, %v1826
          %v1828 = vrot.slane %v1722, %v1827
          %v1829 = vld [vmem:[%s1420] sm:$0xff]
          %v1830 = vmul.f32 %v1828, %v1829
          %v1831 = vadd.f32 %v1803, %v1830
          %v1832 = vadd.f32 %v1810, %v1817
          %v1833 = vadd.f32 %v1824, %v1831
          %v1834 = vadd.f32 %v1832, %v1833
          %v1835 = vxor.u32 %v1834, 2147483648
          %v1836 = vmul.f32 %v1835, 1.442695
          %v1837 = vpow.pop %v1836
          %v1838 = vadd.f32 %v1837, 1.0
          %v1839 = vrcp.pop %v1838
          %v1840 = vmul.f32 1.0, %v1839
          %v1841 = vmul.f32 %v1666, %v1641
          %v1842 = vmul.f32 %v1223, %v1840
          %v1843 = vadd.f32 %v1842, 1.0
          %v1844 = vmul.f32 %v1843, %v1675
          %v1845 = vadd.f32 %v1841, %v1844
          %s1846 = scalar_lea.vmem %s1144, %s1668 [#allocation6]
          %v1847 = vld [vmem:[%s1846] sm:$0xff]
          %v1848 = vmul.f32 %v1845, %v1847
          %v1849 = vrot.slane %v1848, 4
          %v1850 = vadd.f32 %v1848, %v1849
          %v1851 = vrot.slane %v1850, 2
          %v1852 = vadd.f32 %v1850, %v1851
          %v1853 = vrot.slane %v1852, 1
          %v1854 = vadd.f32 %v1852, %v1853
          %v1855 = vmul.f32 %v1659, %v1217
          %v1856 = vadd.f32 %v1854, %v1855
          %s1857 = scalar_lea.vmem %s1198, %s1655 [#allocation7]
          %1858 = vst [vmem:[%s1857] sm:$0x1] %v1856
          %s1859 = sadd.s32 %s1232, 3
          %s1860 = scalar_lea.vmem %s1130, %s1859 [#allocation4]
          %v1861 = vld [vmem:[%s1860] sm:$0x1]
          %s1862 = scalar_lea.vmem %s1123, %s1859 [#allocation3]
          %v1863 = vld [vmem:[%s1862] sm:$0x1]
          %v1864 = vlaneseq
          %v1865 = vshrl.u32 %v1864, 7
          %v1866 = vsub.s32 0, %v1865
          %v1867 = vrot.slane %v1861, %v1866
          %v1868 = vmul.f32 %v1867, %v1216
          %v1869 = vmul.f32 %v1868, 1.442695
          %v1870 = vpow.pop %v1869
          %v1871 = vmul.f32 %v1861, %v1863
          %s1872 = smul.u32 %s1859, 8
          %s1873 = scalar_lea.vmem %s1137, %s1872 [#allocation5]
          %v1874 = vld [vmem:[%s1873] sm:$0xff]
          %v1875 = vlaneseq
          %v1876 = vshrl.u32 %v1875, 7
          %v1877 = vsub.s32 0, %v1876
          %v1878 = vrot.slane %v1871, %v1877
          %v1879 = vmul.f32 %v1878, %v1874
          %v1880 = vmul.f32 %v1879, %v1879
          %v1881 = vrot.slane %v1880, 4
          %v1882 = vadd.f32 %v1880, %v1881
          %v1883 = vrot.slane %v1882, 2
          %v1884 = vadd.f32 %v1882, %v1883
          %v1885 = vrot.slane %v1884, 1
          %v1886 = vadd.f32 %v1884, %v1885
          %v1887 = vrsqrt.pop %v1886
          %v1888 = vmul.f32 %v1886, %v1887
          %vm1889 = vcmp.eq.f32.partialorder %v1886, inf
          %v1890 = vsel %vm1889, %v1886, %v1888
          %vm1891 = vcmp.eq.f32.partialorder %v1886, 0.0
          %v1892 = vand.u32 %v1886, 2147483648
          %v1893 = vsel %vm1891, %v1892, %v1890
          %v1894 = vadd.f32 %v1893, 1e-06
          %v1895 = vrcp.pop %v1894
          %v1896 = vmul.f32 %v1879, %v1845
          %v1897 = vrot.slane %v1896, 4
          %v1898 = vadd.f32 %v1896, %v1897
          %v1899 = vrot.slane %v1898, 2
          %v1900 = vadd.f32 %v1898, %v1899
          %v1901 = vrot.slane %v1900, 1
          %v1902 = vadd.f32 %v1900, %v1901
          %v1903 = vmul.f32 %v1845, %v1845
          %v1904 = vrot.slane %v1903, 4
          %v1905 = vadd.f32 %v1903, %v1904
          %v1906 = vrot.slane %v1905, 2
          %v1907 = vadd.f32 %v1905, %v1906
          %v1908 = vrot.slane %v1907, 1
          %v1909 = vadd.f32 %v1907, %v1908
          %v1910 = vrsqrt.pop %v1909
          %v1911 = vmul.f32 %v1909, %v1910
          %vm1912 = vcmp.eq.f32.partialorder %v1909, inf
          %v1913 = vsel %vm1912, %v1909, %v1911
          %vm1914 = vcmp.eq.f32.partialorder %v1909, 0.0
          %v1915 = vand.u32 %v1909, 2147483648
          %v1916 = vsel %vm1914, %v1915, %v1913
          %v1917 = vadd.f32 %v1916, 1e-06
          %v1918 = vmul.f32 %v1902, %v1895
          %v1919 = vrcp.pop %v1917
          %v1920 = vmul.f32 %v1918, %v1919
          %v1921 = vmul.f32 %v1920, %v1218
          %v1922 = vmul.f32 %v1920, %v1219
          %v1923 = vadd.f32 %v1921, %v1220
          %v1924 = vadd.f32 %v1922, %v1221
          %v1925 = vmax.f32 %v1923, 0.0
          %v1926 = vmax.f32 %v1924, 0.0
          %v1927 = vlaneseq
          %v1928 = vshrl.u32 %v1927, 7
          %v1929 = vsub.s32 0, %v1928
          %v1930 = vrot.slane %v1925, %v1929
          %v1931 = vld [vmem:[%s8] sm:$0xff]
          %v1932 = vmul.f32 %v1930, %v1931
          %v1933 = vadd.f32 %v1222, %v1932
          %v1934 = vlaneseq
          %v1935 = vshrl.u32 %v1934, 7
          %v1936 = vsub.s32 1, %v1935
          %v1937 = vrot.slane %v1925, %v1936
          %v1938 = vld [vmem:[%s1311] sm:$0xff]
          %v1939 = vmul.f32 %v1937, %v1938
          %v1940 = vlaneseq
          %v1941 = vshrl.u32 %v1940, 7
          %v1942 = vsub.s32 2, %v1941
          %v1943 = vrot.slane %v1925, %v1942
          %v1944 = vld [vmem:[%s1318] sm:$0xff]
          %v1945 = vmul.f32 %v1943, %v1944
          %v1946 = vlaneseq
          %v1947 = vshrl.u32 %v1946, 7
          %v1948 = vsub.s32 3, %v1947
          %v1949 = vrot.slane %v1925, %v1948
          %v1950 = vld [vmem:[%s1325] sm:$0xff]
          %v1951 = vmul.f32 %v1949, %v1950
          %v1952 = vlaneseq
          %v1953 = vshrl.u32 %v1952, 7
          %v1954 = vsub.s32 4, %v1953
          %v1955 = vrot.slane %v1925, %v1954
          %v1956 = vld [vmem:[%s1332] sm:$0xff]
          %v1957 = vmul.f32 %v1955, %v1956
          %v1958 = vadd.f32 %v1933, %v1957
          %v1959 = vlaneseq
          %v1960 = vshrl.u32 %v1959, 7
          %v1961 = vsub.s32 5, %v1960
          %v1962 = vrot.slane %v1925, %v1961
          %v1963 = vld [vmem:[%s1340] sm:$0xff]
          %v1964 = vmul.f32 %v1962, %v1963
          %v1965 = vadd.f32 %v1939, %v1964
          %v1966 = vlaneseq
          %v1967 = vshrl.u32 %v1966, 7
          %v1968 = vsub.s32 6, %v1967
          %v1969 = vrot.slane %v1925, %v1968
          %v1970 = vld [vmem:[%s1348] sm:$0xff]
          %v1971 = vmul.f32 %v1969, %v1970
          %v1972 = vadd.f32 %v1945, %v1971
          %v1973 = vlaneseq
          %v1974 = vshrl.u32 %v1973, 7
          %v1975 = vsub.s32 7, %v1974
          %v1976 = vrot.slane %v1925, %v1975
          %v1977 = vld [vmem:[%s1356] sm:$0xff]
          %v1978 = vmul.f32 %v1976, %v1977
          %v1979 = vadd.f32 %v1951, %v1978
          %v1980 = vlaneseq
          %v1981 = vshrl.u32 %v1980, 7
          %v1982 = vsub.s32 0, %v1981
          %v1983 = vrot.slane %v1926, %v1982
          %v1984 = vld [vmem:[%s1364] sm:$0xff]
          %v1985 = vmul.f32 %v1983, %v1984
          %v1986 = vadd.f32 %v1958, %v1985
          %v1987 = vlaneseq
          %v1988 = vshrl.u32 %v1987, 7
          %v1989 = vsub.s32 1, %v1988
          %v1990 = vrot.slane %v1926, %v1989
          %v1991 = vld [vmem:[%s1372] sm:$0xff]
          %v1992 = vmul.f32 %v1990, %v1991
          %v1993 = vadd.f32 %v1965, %v1992
          %v1994 = vlaneseq
          %v1995 = vshrl.u32 %v1994, 7
          %v1996 = vsub.s32 2, %v1995
          %v1997 = vrot.slane %v1926, %v1996
          %v1998 = vld [vmem:[%s1380] sm:$0xff]
          %v1999 = vmul.f32 %v1997, %v1998
          %v2000 = vadd.f32 %v1972, %v1999
          %v2001 = vlaneseq
          %v2002 = vshrl.u32 %v2001, 7
          %v2003 = vsub.s32 3, %v2002
          %v2004 = vrot.slane %v1926, %v2003
          %v2005 = vld [vmem:[%s1388] sm:$0xff]
          %v2006 = vmul.f32 %v2004, %v2005
          %v2007 = vadd.f32 %v1979, %v2006
          %v2008 = vlaneseq
          %v2009 = vshrl.u32 %v2008, 7
          %v2010 = vsub.s32 4, %v2009
          %v2011 = vrot.slane %v1926, %v2010
          %v2012 = vld [vmem:[%s1396] sm:$0xff]
          %v2013 = vmul.f32 %v2011, %v2012
          %v2014 = vadd.f32 %v1986, %v2013
          %v2015 = vlaneseq
          %v2016 = vshrl.u32 %v2015, 7
          %v2017 = vsub.s32 5, %v2016
          %v2018 = vrot.slane %v1926, %v2017
          %v2019 = vld [vmem:[%s1404] sm:$0xff]
          %v2020 = vmul.f32 %v2018, %v2019
          %v2021 = vadd.f32 %v1993, %v2020
          %v2022 = vlaneseq
          %v2023 = vshrl.u32 %v2022, 7
          %v2024 = vsub.s32 6, %v2023
          %v2025 = vrot.slane %v1926, %v2024
          %v2026 = vld [vmem:[%s1412] sm:$0xff]
          %v2027 = vmul.f32 %v2025, %v2026
          %v2028 = vadd.f32 %v2000, %v2027
          %v2029 = vlaneseq
          %v2030 = vshrl.u32 %v2029, 7
          %v2031 = vsub.s32 7, %v2030
          %v2032 = vrot.slane %v1926, %v2031
          %v2033 = vld [vmem:[%s1420] sm:$0xff]
          %v2034 = vmul.f32 %v2032, %v2033
          %v2035 = vadd.f32 %v2007, %v2034
          %v2036 = vadd.f32 %v2014, %v2021
          %v2037 = vadd.f32 %v2028, %v2035
          %v2038 = vadd.f32 %v2036, %v2037
          %v2039 = vxor.u32 %v2038, 2147483648
          %v2040 = vmul.f32 %v2039, 1.442695
          %v2041 = vpow.pop %v2040
          %v2042 = vadd.f32 %v2041, 1.0
          %v2043 = vrcp.pop %v2042
          %v2044 = vmul.f32 1.0, %v2043
          %v2045 = vmul.f32 %v1870, %v1845
          %v2046 = vmul.f32 %v1223, %v2044
          %v2047 = vadd.f32 %v2046, 1.0
          %v2048 = vmul.f32 %v2047, %v1879
          %v2049 = vadd.f32 %v2045, %v2048
          %s2050 = scalar_lea.vmem %s1144, %s1872 [#allocation6]
          %v2051 = vld [vmem:[%s2050] sm:$0xff]
          %v2052 = vmul.f32 %v2049, %v2051
          %v2053 = vrot.slane %v2052, 4
          %v2054 = vadd.f32 %v2052, %v2053
          %v2055 = vrot.slane %v2054, 2
          %v2056 = vadd.f32 %v2054, %v2055
          %v2057 = vrot.slane %v2056, 1
          %v2058 = vadd.f32 %v2056, %v2057
          %v2059 = vmul.f32 %v1863, %v1217
          %v2060 = vadd.f32 %v2058, %v2059
          %s2061 = scalar_lea.vmem %s1198, %s1859 [#allocation7]
          %2062 = vst [vmem:[%s2061] sm:$0x1] %v2060
        $region225: #{c_vss_block_forward.1} parent=199 // loop_footer
          %s1230 = sadd.s32 1, %s1226
        $region226: #{c_vss_block_forward.1} parent=199 // loop_footer_branch
          %1225 = sbr.rel target = $region222
        $region227: #{c_vss_block_forward.1} parent=199 // loop_exit
          _
        %2063 = vst [vmem:[#allocation2] sm:$0xff] %v1231
        %s2064 = sand.u32 %s313, 1
        %s2065 = sand.u32 %s313, 1
        %s2066 = smul.addr %s2065, 64
        %s2067 = scalar_lea.vmem [#allocation7], %s2066
        // Predicated region
        $region228: #{c_vss_block_forward.1} parent=199 // pred_check
          %p2068 = pneg %p323
        $region229: #{c_vss_block_forward.1} parent=199 // pred_check_branch
          %2070 = sbr.rel (%p2068) target = $region231
        $region230: #{c_vss_block_forward.1} parent=199 // pred_region
          %s2071 = smul.u32 8, %s27
          %s2072 = smul.addr %s2071, 2
          %s2073 = sadd.s32 %s26, %s2072
          %s2074 = smul.addr %s2073, 8
          %s2075 = scalar_lea.vmem %s11, %s2074
          // Predicated region
          $region232: #{c_vss_block_forward.1} parent=230 // pred_check
            _
          $region233: #{c_vss_block_forward.1} parent=230 // pred_check_branch
            %2077 = sbr.rel (0) target = $region235
          $region234: #{c_vss_block_forward.1} parent=230 // pred_region
            // Predicated region
            $region236: #{c_vss_block_forward.1} parent=234 // pred_check
              _
            $region237: #{c_vss_block_forward.1} parent=234 // pred_check_branch
              %2079 = sbr.rel (0) target = $region239
            $region238: #{c_vss_block_forward.1} parent=234 // pred_region
              // Predicated region
              $region251: #{c_vss_block_forward.1} parent=238 // pred_check
                _
              $region252: #{c_vss_block_forward.1} parent=238 // pred_check_branch
                %2109 = sbr.rel (0) target = $region254
              $region253: #{c_vss_block_forward.1} parent=238 // pred_region
                loop: start=0, step=1, limit=1
                $region255: #{c_vss_block_forward.1} parent=253 // loop_pre_header
                  _
                $region256: #{c_vss_block_forward.1} parent=253 // loop_header
                  %s2111 = sphi 0, %s2115
                  %p2112 = scmp.ge.s32.totalorder %s2111, 1
                  %s2116 = sphi %s2067, %s2067
                  %s2117 = sphi %s2075, %s2075
                $region257: #{c_vss_block_forward.1} parent=253 // loop_header_branch
                  %2114 = sbr.rel (%p2112) target = $region261
                $region258: #{c_vss_block_forward.1} parent=253 // loop_body
                  %v2118 = vld [vmem:[%s2116] sm:$0xff]
                  %2119 = vst [vmem:[%s2117] sm:$0xff] %v2118
                  %v2120 = vld [vmem:[%s2116 + $0x8] sm:$0xff]
                  %2121 = vst [vmem:[%s2117 + $0x10] sm:$0xff] %v2120
                  %v2122 = vld [vmem:[%s2116 + $0x10] sm:$0xff]
                  %2123 = vst [vmem:[%s2117 + $0x20] sm:$0xff] %v2122
                  %v2124 = vld [vmem:[%s2116 + $0x18] sm:$0xff]
                  %2125 = vst [vmem:[%s2117 + $0x30] sm:$0xff] %v2124
                  %v2126 = vld [vmem:[%s2116 + $0x20] sm:$0xff]
                  %2127 = vst [vmem:[%s2117 + $0x40] sm:$0xff] %v2126
                  %v2128 = vld [vmem:[%s2116 + $0x28] sm:$0xff]
                  %2129 = vst [vmem:[%s2117 + $0x50] sm:$0xff] %v2128
                  %v2130 = vld [vmem:[%s2116 + $0x30] sm:$0xff]
                  %2131 = vst [vmem:[%s2117 + $0x60] sm:$0xff] %v2130
                  %v2132 = vld [vmem:[%s2116 + $0x38] sm:$0xff]
                  %2133 = vst [vmem:[%s2117 + $0x70] sm:$0xff] %v2132
                $region259: #{c_vss_block_forward.1} parent=253 // loop_footer
                  %s2115 = sadd.s32 1, %s2111
                $region260: #{c_vss_block_forward.1} parent=253 // loop_footer_branch
                  %2110 = sbr.rel target = $region256
                $region261: #{c_vss_block_forward.1} parent=253 // loop_exit
                  _
              $region254: #{c_vss_block_forward.1} parent=238 // pred_fallthru
                _
              // Predicated region
              $region262: #{c_vss_block_forward.1} parent=238 // pred_check
                _
              $region263: #{c_vss_block_forward.1} parent=238 // pred_check_branch
                %2135 = sbr.rel target = $region265
              $region264: #{c_vss_block_forward.1} parent=238 // pred_region
                _
              $region265: #{c_vss_block_forward.1} parent=238 // pred_fallthru
                _
            $region239: #{c_vss_block_forward.1} parent=234 // pred_fallthru
              _
            // Predicated region
            $region240: #{c_vss_block_forward.1} parent=234 // pred_check
              _
            $region241: #{c_vss_block_forward.1} parent=234 // pred_check_branch
              %2081 = sbr.rel target = $region243
            $region242: #{c_vss_block_forward.1} parent=234 // pred_region
              %s2083 = ssub.s32 256, 1
              loop: start=0, step=1, limit=1
              $region244: #{c_vss_block_forward.1} parent=242 // loop_pre_header
                _
              $region245: #{c_vss_block_forward.1} parent=242 // loop_header
                %s2085 = sphi 0, %s2089
                %p2086 = scmp.ge.s32.totalorder %s2085, 1
                %s2090 = sphi %s2067, %s2067
                %s2091 = sphi %s2075, %s2075
              $region246: #{c_vss_block_forward.1} parent=242 // loop_header_branch
                %2088 = sbr.rel (%p2086) target = $region250
              $region247: #{c_vss_block_forward.1} parent=242 // loop_body
                %v2092 = vld [vmem:[%s2090] sm:%s2083]
                %2093 = vst [vmem:[%s2091] sm:%s2083] %v2092
                %v2094 = vld [vmem:[%s2090 + $0x8] sm:%s2083]
                %2095 = vst [vmem:[%s2091 + $0x10] sm:%s2083] %v2094
                %v2096 = vld [vmem:[%s2090 + $0x10] sm:%s2083]
                %2097 = vst [vmem:[%s2091 + $0x20] sm:%s2083] %v2096
                %v2098 = vld [vmem:[%s2090 + $0x18] sm:%s2083]
                %2099 = vst [vmem:[%s2091 + $0x30] sm:%s2083] %v2098
                %v2100 = vld [vmem:[%s2090 + $0x20] sm:%s2083]
                %2101 = vst [vmem:[%s2091 + $0x40] sm:%s2083] %v2100
                %v2102 = vld [vmem:[%s2090 + $0x28] sm:%s2083]
                %2103 = vst [vmem:[%s2091 + $0x50] sm:%s2083] %v2102
                %v2104 = vld [vmem:[%s2090 + $0x30] sm:%s2083]
                %2105 = vst [vmem:[%s2091 + $0x60] sm:%s2083] %v2104
                %v2106 = vld [vmem:[%s2090 + $0x38] sm:%s2083]
                %2107 = vst [vmem:[%s2091 + $0x70] sm:%s2083] %v2106
              $region248: #{c_vss_block_forward.1} parent=242 // loop_footer
                %s2089 = sadd.s32 1, %s2085
              $region249: #{c_vss_block_forward.1} parent=242 // loop_footer_branch
                %2084 = sbr.rel target = $region245
              $region250: #{c_vss_block_forward.1} parent=242 // loop_exit
                _
            $region243: #{c_vss_block_forward.1} parent=234 // pred_fallthru
              _
          $region235: #{c_vss_block_forward.1} parent=230 // pred_fallthru
            _
          %2136 = vnop
        $region231: #{c_vss_block_forward.1} parent=199 // pred_fallthru
          _
      $region200: #{c_vss_block_forward.1} parent=5 // pred_fallthru
        _
      %p2137 = scmp.le.s32.totalorder 2, %s17
      // Predicated region
      $region266: #{c_vss_block_forward.1} parent=5 // pred_check
        %p2138 = pneg %p2137
      $region267: #{c_vss_block_forward.1} parent=5 // pred_check_branch
        %2140 = sbr.rel (%p2138) target = $region269
      $region268: #{c_vss_block_forward.1} parent=5 // pred_region
        %s2141 = ssub.s32 %s17, 2
        // Predicated region
        $region270: #{c_vss_block_forward.1} parent=268 // pred_check
          %p2142 = pneg %p329
        $region271: #{c_vss_block_forward.1} parent=268 // pred_check_branch
          %2144 = sbr.rel (%p2142) target = $region273
        $region272: #{c_vss_block_forward.1} parent=268 // pred_region
          %s2145 = sand.u32 %s314, 1
          %s2146 = sand.u32 %s314, 1
          %s2147 = smul.addr %s2146, 64
          %s2148 = scalar_lea.vmem [#allocation7], %s2147
        $region273: #{c_vss_block_forward.1} parent=268 // pred_fallthru
          _
      $region269: #{c_vss_block_forward.1} parent=5 // pred_fallthru
        _
    $region6: #{c_vss_block_forward.1} parent=1 // loop_footer
      %s21 = sadd.s32 1, %s17
    $region7: #{c_vss_block_forward.1} parent=1 // loop_footer_branch
      %16 = sbr.rel target = $region3
    $region8: #{c_vss_block_forward.1} parent=1 // loop_exit
      _

</llo_original>
